<compile_context>
chip_gen: v5e
topology: v5e:2x2
jax: 0.10.0
libtpu: 0.0.40
codegen_flags: <defaults>
</compile_context>

<pallas_src>
import functools
import math

import jax
import jax.numpy as jnp
from jax.experimental import pallas as pl
from jax.experimental.pallas import tpu as pltpu


# ----------------------------------------------------------------------------
# Kernel 1: QKV proj -> multi-head attention -> out_proj -> add -> LayerNorm1
#   x_ref : (B*S, E)  batch-major rows (row = b*S + s)
# ----------------------------------------------------------------------------
def _attn_ln1_kernel(x_ref, wqkv_ref, bqkv_ref, wout_ref, bout_ref,
                     g1_ref, b1_ref, o_ref, *, seq, batch, nhead, dh, eps):
    E = nhead * dh
    x = x_ref[...]                                                  # (B*S, E)

    # fused QKV projection (scale for q already folded into the weights)
    qkv = jnp.dot(x, wqkv_ref[...], preferred_element_type=jnp.float32) + bqkv_ref[...]

    # per-(batch, head) attention; loops are static (unrolled at trace time),
    # so there is zero launch / grid-step overhead and all slices are static.
    ctx_rows = []
    for b in range(batch):
        r0 = b * seq
        qkv_b = qkv[r0:r0 + seq, :]                                 # (S, 3E)
        heads = []
        for h in range(nhead):
            c0 = h * dh
            q = qkv_b[:, c0:c0 + dh]                                # (S, Dh)
            k = qkv_b[:, E + c0:E + c0 + dh]                        # (S, Dh)
            v = qkv_b[:, 2 * E + c0:2 * E + c0 + dh]                # (S, Dh)
            s = jax.lax.dot_general(q, k, (((1,), (1,)), ((), ())),
                                    preferred_element_type=jnp.float32)   # (S, S)
            s = s - jnp.max(s, axis=-1, keepdims=True)
            e = jnp.exp(s)
            p = e / jnp.sum(e, axis=-1, keepdims=True)
            heads.append(jnp.dot(p, v, preferred_element_type=jnp.float32))
        ctx_rows.append(jnp.concatenate(heads, axis=-1))            # (S, E)
    ctx = jnp.concatenate(ctx_rows, axis=0)                         # (B*S, E)

    attn = jnp.dot(ctx, wout_ref[...], preferred_element_type=jnp.float32) + bout_ref[...]

    # residual + LayerNorm1 (dropout1 is identity, p=0)
    y = x + attn
    mean = jnp.mean(y, axis=-1, keepdims=True)
    c = y - mean
    var = jnp.mean(c * c, axis=-1, keepdims=True)
    inv = jax.lax.rsqrt(var + eps)
    o_ref[...] = (c * inv * g1_ref[...] + b1_ref[...]).astype(o_ref.dtype)


# ----------------------------------------------------------------------------
# Kernel 2: BiGRU (input proj + fwd/bwd recurrence) -> ReLU+linear2 -> add -> LN2
#   x_ref : (S*B, E)  time-major rows (row = s*B + b); also the LN2 residual.
#   wih_ref: (E, 6H) packed [r_f z_f n_f | r_b z_b n_b] columns.
# ----------------------------------------------------------------------------
def _gru_ffn_ln2_kernel(x_ref, wih_ref, bih_ref, whhf_ref, bhhf_ref,
                        whhb_ref, bhhb_ref, w2_ref, b2_ref, g2_ref, b2n_ref,
                        o_ref, *, seq, batch, hidden, eps):
    H = hidden
    x = x_ref[...]                                                  # (S*B, E)

    # Both directions' input projections + b_ih in ONE MXU matmul.
    gi = jnp.dot(x, wih_ref[...], preferred_element_type=jnp.float32) + bih_ref[...]
    gi_parts = [gi[:, j * H:(j + 1) * H] for j in range(6)]         # r_f z_f n_f r_b z_b n_b

    whh_f = whhf_ref[...]                                           # (H, 3H)
    whh_b = whhb_ref[...]
    bhh_f = bhhf_ref[...]                                           # (1, 3H)
    bhh_b = bhhb_ref[...]

    def gru_step(h_prev, gi_r, gi_z, gi_n, whh, bhh):
        gh = jnp.dot(h_prev, whh, preferred_element_type=jnp.float32) + bhh   # (B, 3H)
        r = jax.nn.sigmoid(gi_r + gh[:, :H])
        z = jax.nn.sigmoid(gi_z + gh[:, H:2 * H])
        n = jnp.tanh(gi_n + r * gh[:, 2 * H:3 * H])                 # b_hn inside r* term
        return (1.0 - z) * n + z * h_prev

    h_f = jnp.zeros((batch, H), jnp.float32)
    h_b = jnp.zeros((batch, H), jnp.float32)
    outs_f = [None] * seq
    outs_b = [None] * seq

    # Statically unrolled time loop (the recurrence is the only serial part);
    # both directions advance together: fwd reads time t, bwd reads time S-1-t.
    for t in range(seq):
        rf, rl = t * batch, (t + 1) * batch
        tb = seq - 1 - t
        bf, bl = tb * batch, (tb + 1) * batch
        h_f = gru_step(h_f, gi_parts[0][rf:rl], gi_parts[1][rf:rl],
                       gi_parts[2][rf:rl], whh_f, bhh_f)
        h_b = gru_step(h_b, gi_parts[3][bf:bl], gi_parts[4][bf:bl],
                       gi_parts[5][bf:bl], whh_b, bhh_b)
        outs_f[t] = h_f
        outs_b[tb] = h_b

    # (S*B, 2H) time-major; fwd|bwd concatenated -> 2H = 128 lanes (lane-dense).
    gru_out = jnp.concatenate(
        [jnp.concatenate([outs_f[t], outs_b[t]], axis=-1) for t in range(seq)],
        axis=0)

    # feed-forward (ReLU fused) + residual + LayerNorm2 (dropouts are identity)
    ff = jnp.dot(jnp.maximum(gru_out, 0.0), w2_ref[...],
                 preferred_element_type=jnp.float32) + b2_ref[...]
    y = x + ff
    mean = jnp.mean(y, axis=-1, keepdims=True)
    c = y - mean
    var = jnp.mean(c * c, axis=-1, keepdims=True)
    inv = jax.lax.rsqrt(var + eps)
    o_ref[...] = (c * inv * g2_ref[...] + b2n_ref[...]).astype(o_ref.dtype)


# ----------------------------------------------------------------------------
# One-time parameter prep: pre-transpose weights, fold the attention scale into
# the q projection, pack both GRU directions' input projections.
# ----------------------------------------------------------------------------
def prepare_params(p):
    E = p["in_proj_weight"].shape[1]
    nhead = p["nhead"]
    dh = E // nhead
    scale = 1.0 / math.sqrt(dh)
    H = p["gru_hidden"]

    wqkv_t = jnp.transpose(p["in_proj_weight"]).astype(jnp.float32)      # (E, 3E)
    wqkv_t = wqkv_t.at[:, :E].multiply(scale)                            # fold 1/sqrt(Dh) into q
    bqkv = p["in_proj_bias"].astype(jnp.float32)
    bqkv = bqkv.at[:E].multiply(scale)

    return {
        "wqkv_t": wqkv_t,
        "bqkv": bqkv.reshape(1, 3 * E),
        "wout_t": jnp.transpose(p["out_proj_weight"]),                   # (E, E)
        "bout": p["out_proj_bias"].reshape(1, E),
        "ln1_g": p["norm1_weight"].reshape(1, E),
        "ln1_b": p["norm1_bias"].reshape(1, E),
        "w_ih_t": jnp.concatenate(
            [jnp.transpose(p["w_ih_l0"]), jnp.transpose(p["w_ih_l0_rev"])], axis=1),  # (E, 6H)
        "b_ih": jnp.concatenate([p["b_ih_l0"], p["b_ih_l0_rev"]]).reshape(1, 6 * H),
        "w_hh_f_t": jnp.transpose(p["w_hh_l0"]),                         # (H, 3H)
        "b_hh_f": p["b_hh_l0"].reshape(1, 3 * H),
        "w_hh_b_t": jnp.transpose(p["w_hh_l0_rev"]),                     # (H, 3H)
        "b_hh_b": p["b_hh_l0_rev"].reshape(1, 3 * H),
        "w2_t": jnp.transpose(p["linear2_weight"]),                      # (2H, E)
        "b2": p["linear2_bias"].reshape(1, E),
        "ln2_g": p["norm2_weight"].reshape(1, E),
        "ln2_b": p["norm2_bias"].reshape(1, E),
    }


# ----------------------------------------------------------------------------
# full forward pass (2 pallas_calls)
# ----------------------------------------------------------------------------
@functools.partial(jax.jit, static_argnames=("nhead",))
def transformer_encoder_layer_forward(src, prep, *, nhead):
    """src: (S, B, d_model) float32 -> (S, B, d_model)."""
    S, B, E = src.shape
    dh = E // nhead
    H = prep["w_hh_f_t"].shape[0]

    def vmem_specs(n):
        return [pl.BlockSpec(memory_space=pltpu.MemorySpace.VMEM) for _ in range(n)]

    # ---- fused attention block ------------------------------------------------
    x_bm = jnp.transpose(src, (1, 0, 2)).reshape(B * S, E)         # batch-major rows
    src1_bm = pl.pallas_call(
        functools.partial(_attn_ln1_kernel, seq=S, batch=B, nhead=nhead, dh=dh,
                          eps=1e-5),
        out_shape=jax.ShapeDtypeStruct((B * S, E), jnp.float32),
        in_specs=vmem_specs(7),
        out_specs=pl.BlockSpec(memory_space=pltpu.MemorySpace.VMEM),
    )(x_bm, prep["wqkv_t"], prep["bqkv"], prep["wout_t"], prep["bout"],
      prep["ln1_g"], prep["ln1_b"])

    # ---- fused BiGRU + feed-forward block --------------------------------------
    src1_tm = jnp.transpose(src1_bm.reshape(B, S, E), (1, 0, 2)).reshape(S * B, E)
    out_tm = pl.pallas_call(
        functools.partial(_gru_ffn_ln2_kernel, seq=S, batch=B, hidden=H, eps=1e-5),
        out_shape=jax.ShapeDtypeStruct((S * B, E), jnp.float32),
        in_specs=vmem_specs(11),
        out_specs=pl.BlockSpec(memory_space=pltpu.MemorySpace.VMEM),
    )(src1_tm, prep["w_ih_t"], prep["b_ih"], prep["w_hh_f_t"], prep["b_hh_f"],
      prep["w_hh_b_t"], prep["b_hh_b"], prep["w2_t"], prep["b2"],
      prep["ln2_g"], prep["ln2_b"])

    return out_tm.reshape(S, B, E)


# ----------------------------------------------------------------------------
# plain-JAX reference (full f32 precision) for correctness checking
# ----------------------------------------------------------------------------
def _mm(a, b):
    return jax.lax.dot_general(a, b, (((a.ndim - 1,), (0,)), ((), ())),
                               precision=jax.lax.Precision.HIGHEST)


def _reference_forward(src, p):
    S, B, E = src.shape
    h = p["nhead"]
    Dh = E // h
    H = p["gru_hidden"]
    hi = jax.lax.Precision.HIGHEST

    x = src.reshape(S * B, E)
    qkv = _mm(x, p["in_proj_weight"].T) + p["in_proj_bias"]
    q, k, v = qkv[:, :E], qkv[:, E:2 * E], qkv[:, 2 * E:]

    def to_heads(t):
        return t.reshape(S, B, h, Dh).transpose(1, 2, 0, 3).reshape(B * h, S, Dh)

    q = to_heads(q) * (1.0 / math.sqrt(Dh))
    k, v = to_heads(k), to_heads(v)
    s = jnp.einsum("bqd,bkd->bqk", q, k, precision=hi)
    pa = jax.nn.softmax(s, axis=-1)
    ctx = jnp.einsum("bqk,bkd->bqd", pa, v, precision=hi)
    ctx = ctx.reshape(B, h, S, Dh).transpose(2, 0, 1, 3).reshape(S * B, E)
    attn_out = _mm(ctx, p["out_proj_weight"].T) + p["out_proj_bias"]

    def layernorm(y, g, b):
        m = y.mean(-1, keepdims=True)
        var = ((y - m) ** 2).mean(-1, keepdims=True)
        return (y - m) / jnp.sqrt(var + 1e-5) * g + b

    src1 = layernorm(x + attn_out, p["norm1_weight"], p["norm1_bias"])
    x3 = src1.reshape(S, B, E)

    def gru_dir(xseq, w_ih, w_hh, b_ih, b_hh, reverse):
        if reverse:
            xseq = xseq[::-1]

        def step(hprev, x_t):
            gi = _mm(x_t, w_ih.T) + b_ih
            gh = _mm(hprev, w_hh.T) + b_hh
            i_r, i_z, i_n = jnp.split(gi, 3, axis=-1)
            h_r, h_z, h_n = jnp.split(gh, 3, axis=-1)
            r = jax.nn.sigmoid(i_r + h_r)
            z = jax.nn.sigmoid(i_z + h_z)
            n = jnp.tanh(i_n + r * h_n)
            hn = (1.0 - z) * n + z * hprev
            return hn, hn

        h0 = jnp.zeros((B, H), jnp.float32)
        _, ys = jax.lax.scan(step, h0, xseq)
        if reverse:
            ys = ys[::-1]
        return ys

    of = gru_dir(x3, p["w_ih_l0"], p["w_hh_l0"], p["b_ih_l0"], p["b_hh_l0"], False)
    ob = gru_dir(x3, p["w_ih_l0_rev"], p["w_hh_l0_rev"], p["b_ih_l0_rev"], p["b_hh_l0_rev"], True)
    gru_out = jnp.concatenate([of, ob], axis=-1).reshape(S * B, 2 * H)
    ff = _mm(jnp.maximum(gru_out, 0.0), p["linear2_weight"].T) + p["linear2_bias"]
    out = layernorm(src1 + ff, p["norm2_weight"], p["norm2_bias"])
    return out.reshape(S, B, E)


# ----------------------------------------------------------------------------
if __name__ == "__main__":
    S, B, E, nhead = 8, 2, 32, 4            # seq=8, batch=2, d_model=32, 4 heads
    H = 2 * E                                # GRU hidden (bidirectional -> 4*E wide output)

    key = jax.random.PRNGKey(0)
    ks = jax.random.split(key, 20)

    def rnd(k, shape, scale=0.1):
        return (scale * jax.random.normal(k, shape)).astype(jnp.float32)

    params = {
        "nhead": nhead,
        "gru_hidden": H,
        "in_proj_weight": rnd(ks[0], (3 * E, E)),
        "in_proj_bias": rnd(ks[1], (3 * E,)),
        "out_proj_weight": rnd(ks[2], (E, E)),
        "out_proj_bias": rnd(ks[3], (E,)),
        "norm1_weight": 1.0 + rnd(ks[4], (E,)),
        "norm1_bias": rnd(ks[5], (E,)),
        "w_ih_l0": rnd(ks[6], (3 * H, E)),
        "w_hh_l0": rnd(ks[7], (3 * H, H)),
        "b_ih_l0": rnd(ks[8], (3 * H,)),
        "b_hh_l0": rnd(ks[9], (3 * H,)),
        "w_ih_l0_rev": rnd(ks[10], (3 * H, E)),
        "w_hh_l0_rev": rnd(ks[11], (3 * H, H)),
        "b_ih_l0_rev": rnd(ks[12], (3 * H,)),
        "b_hh_l0_rev": rnd(ks[13], (3 * H,)),
        "linear2_weight": rnd(ks[14], (E, 2 * H)),
        "linear2_bias": rnd(ks[15], (E,)),
        "norm2_weight": 1.0 + rnd(ks[16], (E,)),
        "norm2_bias": rnd(ks[17], (E,)),
    }
    src = rnd(ks[18], (S, B, E), scale=1.0)

    prep = prepare_params(params)                      # one-time weight packing
    out = transformer_encoder_layer_forward(src, prep, nhead=nhead)
    out = jax.block_until_ready(out)

    ref = _reference_forward(src, params)
    assert out.shape == (S, B, E)
    max_err = float(jnp.max(jnp.abs(out - ref)))
    assert jnp.allclose(out, ref, atol=2e-3, rtol=2e-3), f"mismatch vs reference, max abs err {max_err}"

    print("KERNEL_OK")
</pallas_src>

<mosaic_0001>
module attributes {stable_mosaic.version = 11 : i64} {
  func.func @_attn_ln1_kernel(%arg0: memref<16x32xf32, #tpu.memory_space<vmem>>, %arg1: memref<32x96xf32, #tpu.memory_space<vmem>>, %arg2: memref<1x96xf32, #tpu.memory_space<vmem>>, %arg3: memref<32x32xf32, #tpu.memory_space<vmem>>, %arg4: memref<1x32xf32, #tpu.memory_space<vmem>>, %arg5: memref<1x32xf32, #tpu.memory_space<vmem>>, %arg6: memref<1x32xf32, #tpu.memory_space<vmem>>, %arg7: memref<16x32xf32, #tpu.memory_space<vmem>>) attributes {dimension_semantics = [], scalar_prefetch = 0 : i64, scratch_operands = 0 : i64, tpu.core_type = #tpu.core_type<tc>} {
    %c0 = arith.constant 0 : index
    %c0_0 = arith.constant 0 : index
    %0 = vector.load %arg0[%c0, %c0_0] : memref<16x32xf32, #tpu.memory_space<vmem>>, vector<16x32xf32>
    %c0_1 = arith.constant 0 : index
    %c0_2 = arith.constant 0 : index
    %1 = vector.load %arg1[%c0_1, %c0_2] : memref<32x96xf32, #tpu.memory_space<vmem>>, vector<32x96xf32>
    %cst = arith.constant dense<0.000000e+00> : vector<16x96xf32>
    %2 = tpu.matmul %0, %1, %cst {dimension_numbers = #tpu.dot_dimension_numbers<[1], [0], [0], [1], [0, 0, 1, 1], [], []>} : vector<16x32xf32>, vector<32x96xf32>, vector<16x96xf32> -> vector<16x96xf32>
    %c0_3 = arith.constant 0 : index
    %c0_4 = arith.constant 0 : index
    %3 = vector.load %arg2[%c0_3, %c0_4] : memref<1x96xf32, #tpu.memory_space<vmem>>, vector<1x96xf32>
    %4 = vector.broadcast %3 : vector<1x96xf32> to vector<16x96xf32>
    %5 = arith.addf %2, %4 : vector<16x96xf32>
    %6 = vector.extract_strided_slice %5 {offsets = [0, 0], sizes = [8, 96], strides = [1, 1]} : vector<16x96xf32> to vector<8x96xf32>
    %7 = vector.extract_strided_slice %6 {offsets = [0, 0], sizes = [8, 8], strides = [1, 1]} : vector<8x96xf32> to vector<8x8xf32>
    %8 = vector.extract_strided_slice %6 {offsets = [0, 32], sizes = [8, 8], strides = [1, 1]} : vector<8x96xf32> to vector<8x8xf32>
    %9 = vector.extract_strided_slice %6 {offsets = [0, 64], sizes = [8, 8], strides = [1, 1]} : vector<8x96xf32> to vector<8x8xf32>
    %cst_5 = arith.constant dense<0.000000e+00> : vector<8x8xf32>
    %10 = tpu.matmul %7, %8, %cst_5 {dimension_numbers = #tpu.dot_dimension_numbers<[1], [1], [0], [0], [0, 0, 1, 0], [], []>} : vector<8x8xf32>, vector<8x8xf32>, vector<8x8xf32> -> vector<8x8xf32>
    %cst_6 = arith.constant dense<0xFF800000> : vector<8xf32>
    %11 = vector.multi_reduction <maximumf>, %10, %cst_6 [1] : vector<8x8xf32> to vector<8xf32>
    %12 = vector.shape_cast %11 : vector<8xf32> to vector<8x1xf32>
    %13 = vector.broadcast %12 : vector<8x1xf32> to vector<8x8xf32>
    %14 = arith.subf %10, %13 : vector<8x8xf32>
    %15 = math.exp %14 : vector<8x8xf32>
    %cst_7 = arith.constant dense<0.000000e+00> : vector<8xf32>
    %16 = vector.multi_reduction <add>, %15, %cst_7 [1] : vector<8x8xf32> to vector<8xf32>
    %17 = vector.shape_cast %16 : vector<8xf32> to vector<8x1xf32>
    %18 = vector.broadcast %17 : vector<8x1xf32> to vector<8x8xf32>
    %19 = arith.divf %15, %18 : vector<8x8xf32>
    %cst_8 = arith.constant dense<0.000000e+00> : vector<8x8xf32>
    %20 = tpu.matmul %19, %9, %cst_8 {dimension_numbers = #tpu.dot_dimension_numbers<[1], [0], [0], [1], [0, 0, 1, 1], [], []>} : vector<8x8xf32>, vector<8x8xf32>, vector<8x8xf32> -> vector<8x8xf32>
    %21 = vector.extract_strided_slice %6 {offsets = [0, 8], sizes = [8, 8], strides = [1, 1]} : vector<8x96xf32> to vector<8x8xf32>
    %22 = vector.extract_strided_slice %6 {offsets = [0, 40], sizes = [8, 8], strides = [1, 1]} : vector<8x96xf32> to vector<8x8xf32>
    %23 = vector.extract_strided_slice %6 {offsets = [0, 72], sizes = [8, 8], strides = [1, 1]} : vector<8x96xf32> to vector<8x8xf32>
    %cst_9 = arith.constant dense<0.000000e+00> : vector<8x8xf32>
    %24 = tpu.matmul %21, %22, %cst_9 {dimension_numbers = #tpu.dot_dimension_numbers<[1], [1], [0], [0], [0, 0, 1, 0], [], []>} : vector<8x8xf32>, vector<8x8xf32>, vector<8x8xf32> -> vector<8x8xf32>
    %cst_10 = arith.constant dense<0xFF800000> : vector<8xf32>
    %25 = vector.multi_reduction <maximumf>, %24, %cst_10 [1] : vector<8x8xf32> to vector<8xf32>
    %26 = vector.shape_cast %25 : vector<8xf32> to vector<8x1xf32>
    %27 = vector.broadcast %26 : vector<8x1xf32> to vector<8x8xf32>
    %28 = arith.subf %24, %27 : vector<8x8xf32>
    %29 = math.exp %28 : vector<8x8xf32>
    %cst_11 = arith.constant dense<0.000000e+00> : vector<8xf32>
    %30 = vector.multi_reduction <add>, %29, %cst_11 [1] : vector<8x8xf32> to vector<8xf32>
    %31 = vector.shape_cast %30 : vector<8xf32> to vector<8x1xf32>
    %32 = vector.broadcast %31 : vector<8x1xf32> to vector<8x8xf32>
    %33 = arith.divf %29, %32 : vector<8x8xf32>
    %cst_12 = arith.constant dense<0.000000e+00> : vector<8x8xf32>
    %34 = tpu.matmul %33, %23, %cst_12 {dimension_numbers = #tpu.dot_dimension_numbers<[1], [0], [0], [1], [0, 0, 1, 1], [], []>} : vector<8x8xf32>, vector<8x8xf32>, vector<8x8xf32> -> vector<8x8xf32>
    %35 = vector.extract_strided_slice %6 {offsets = [0, 16], sizes = [8, 8], strides = [1, 1]} : vector<8x96xf32> to vector<8x8xf32>
    %36 = vector.extract_strided_slice %6 {offsets = [0, 48], sizes = [8, 8], strides = [1, 1]} : vector<8x96xf32> to vector<8x8xf32>
    %37 = vector.extract_strided_slice %6 {offsets = [0, 80], sizes = [8, 8], strides = [1, 1]} : vector<8x96xf32> to vector<8x8xf32>
    %cst_13 = arith.constant dense<0.000000e+00> : vector<8x8xf32>
    %38 = tpu.matmul %35, %36, %cst_13 {dimension_numbers = #tpu.dot_dimension_numbers<[1], [1], [0], [0], [0, 0, 1, 0], [], []>} : vector<8x8xf32>, vector<8x8xf32>, vector<8x8xf32> -> vector<8x8xf32>
    %cst_14 = arith.constant dense<0xFF800000> : vector<8xf32>
    %39 = vector.multi_reduction <maximumf>, %38, %cst_14 [1] : vector<8x8xf32> to vector<8xf32>
    %40 = vector.shape_cast %39 : vector<8xf32> to vector<8x1xf32>
    %41 = vector.broadcast %40 : vector<8x1xf32> to vector<8x8xf32>
    %42 = arith.subf %38, %41 : vector<8x8xf32>
    %43 = math.exp %42 : vector<8x8xf32>
    %cst_15 = arith.constant dense<0.000000e+00> : vector<8xf32>
    %44 = vector.multi_reduction <add>, %43, %cst_15 [1] : vector<8x8xf32> to vector<8xf32>
    %45 = vector.shape_cast %44 : vector<8xf32> to vector<8x1xf32>
    %46 = vector.broadcast %45 : vector<8x1xf32> to vector<8x8xf32>
    %47 = arith.divf %43, %46 : vector<8x8xf32>
    %cst_16 = arith.constant dense<0.000000e+00> : vector<8x8xf32>
    %48 = tpu.matmul %47, %37, %cst_16 {dimension_numbers = #tpu.dot_dimension_numbers<[1], [0], [0], [1], [0, 0, 1, 1], [], []>} : vector<8x8xf32>, vector<8x8xf32>, vector<8x8xf32> -> vector<8x8xf32>
    %49 = vector.extract_strided_slice %6 {offsets = [0, 24], sizes = [8, 8], strides = [1, 1]} : vector<8x96xf32> to vector<8x8xf32>
    %50 = vector.extract_strided_slice %6 {offsets = [0, 56], sizes = [8, 8], strides = [1, 1]} : vector<8x96xf32> to vector<8x8xf32>
    %51 = vector.extract_strided_slice %6 {offsets = [0, 88], sizes = [8, 8], strides = [1, 1]} : vector<8x96xf32> to vector<8x8xf32>
    %cst_17 = arith.constant dense<0.000000e+00> : vector<8x8xf32>
    %52 = tpu.matmul %49, %50, %cst_17 {dimension_numbers = #tpu.dot_dimension_numbers<[1], [1], [0], [0], [0, 0, 1, 0], [], []>} : vector<8x8xf32>, vector<8x8xf32>, vector<8x8xf32> -> vector<8x8xf32>
    %cst_18 = arith.constant dense<0xFF800000> : vector<8xf32>
    %53 = vector.multi_reduction <maximumf>, %52, %cst_18 [1] : vector<8x8xf32> to vector<8xf32>
    %54 = vector.shape_cast %53 : vector<8xf32> to vector<8x1xf32>
    %55 = vector.broadcast %54 : vector<8x1xf32> to vector<8x8xf32>
    %56 = arith.subf %52, %55 : vector<8x8xf32>
    %57 = math.exp %56 : vector<8x8xf32>
    %cst_19 = arith.constant dense<0.000000e+00> : vector<8xf32>
    %58 = vector.multi_reduction <add>, %57, %cst_19 [1] : vector<8x8xf32> to vector<8xf32>
    %59 = vector.shape_cast %58 : vector<8xf32> to vector<8x1xf32>
    %60 = vector.broadcast %59 : vector<8x1xf32> to vector<8x8xf32>
    %61 = arith.divf %57, %60 : vector<8x8xf32>
    %cst_20 = arith.constant dense<0.000000e+00> : vector<8x8xf32>
    %62 = tpu.matmul %61, %51, %cst_20 {dimension_numbers = #tpu.dot_dimension_numbers<[1], [0], [0], [1], [0, 0, 1, 1], [], []>} : vector<8x8xf32>, vector<8x8xf32>, vector<8x8xf32> -> vector<8x8xf32>
    %63 = tpu.concatenate %20, %34, %48, %62 in 1 : vector<8x8xf32>, vector<8x8xf32>, vector<8x8xf32>, vector<8x8xf32> -> vector<8x32xf32>
    %64 = vector.extract_strided_slice %5 {offsets = [8, 0], sizes = [8, 96], strides = [1, 1]} : vector<16x96xf32> to vector<8x96xf32>
    %65 = vector.extract_strided_slice %64 {offsets = [0, 0], sizes = [8, 8], strides = [1, 1]} : vector<8x96xf32> to vector<8x8xf32>
    %66 = vector.extract_strided_slice %64 {offsets = [0, 32], sizes = [8, 8], strides = [1, 1]} : vector<8x96xf32> to vector<8x8xf32>
    %67 = vector.extract_strided_slice %64 {offsets = [0, 64], sizes = [8, 8], strides = [1, 1]} : vector<8x96xf32> to vector<8x8xf32>
    %cst_21 = arith.constant dense<0.000000e+00> : vector<8x8xf32>
    %68 = tpu.matmul %65, %66, %cst_21 {dimension_numbers = #tpu.dot_dimension_numbers<[1], [1], [0], [0], [0, 0, 1, 0], [], []>} : vector<8x8xf32>, vector<8x8xf32>, vector<8x8xf32> -> vector<8x8xf32>
    %cst_22 = arith.constant dense<0xFF800000> : vector<8xf32>
    %69 = vector.multi_reduction <maximumf>, %68, %cst_22 [1] : vector<8x8xf32> to vector<8xf32>
    %70 = vector.shape_cast %69 : vector<8xf32> to vector<8x1xf32>
    %71 = vector.broadcast %70 : vector<8x1xf32> to vector<8x8xf32>
    %72 = arith.subf %68, %71 : vector<8x8xf32>
    %73 = math.exp %72 : vector<8x8xf32>
    %cst_23 = arith.constant dense<0.000000e+00> : vector<8xf32>
    %74 = vector.multi_reduction <add>, %73, %cst_23 [1] : vector<8x8xf32> to vector<8xf32>
    %75 = vector.shape_cast %74 : vector<8xf32> to vector<8x1xf32>
    %76 = vector.broadcast %75 : vector<8x1xf32> to vector<8x8xf32>
    %77 = arith.divf %73, %76 : vector<8x8xf32>
    %cst_24 = arith.constant dense<0.000000e+00> : vector<8x8xf32>
    %78 = tpu.matmul %77, %67, %cst_24 {dimension_numbers = #tpu.dot_dimension_numbers<[1], [0], [0], [1], [0, 0, 1, 1], [], []>} : vector<8x8xf32>, vector<8x8xf32>, vector<8x8xf32> -> vector<8x8xf32>
    %79 = vector.extract_strided_slice %64 {offsets = [0, 8], sizes = [8, 8], strides = [1, 1]} : vector<8x96xf32> to vector<8x8xf32>
    %80 = vector.extract_strided_slice %64 {offsets = [0, 40], sizes = [8, 8], strides = [1, 1]} : vector<8x96xf32> to vector<8x8xf32>
    %81 = vector.extract_strided_slice %64 {offsets = [0, 72], sizes = [8, 8], strides = [1, 1]} : vector<8x96xf32> to vector<8x8xf32>
    %cst_25 = arith.constant dense<0.000000e+00> : vector<8x8xf32>
    %82 = tpu.matmul %79, %80, %cst_25 {dimension_numbers = #tpu.dot_dimension_numbers<[1], [1], [0], [0], [0, 0, 1, 0], [], []>} : vector<8x8xf32>, vector<8x8xf32>, vector<8x8xf32> -> vector<8x8xf32>
    %cst_26 = arith.constant dense<0xFF800000> : vector<8xf32>
    %83 = vector.multi_reduction <maximumf>, %82, %cst_26 [1] : vector<8x8xf32> to vector<8xf32>
    %84 = vector.shape_cast %83 : vector<8xf32> to vector<8x1xf32>
    %85 = vector.broadcast %84 : vector<8x1xf32> to vector<8x8xf32>
    %86 = arith.subf %82, %85 : vector<8x8xf32>
    %87 = math.exp %86 : vector<8x8xf32>
    %cst_27 = arith.constant dense<0.000000e+00> : vector<8xf32>
    %88 = vector.multi_reduction <add>, %87, %cst_27 [1] : vector<8x8xf32> to vector<8xf32>
    %89 = vector.shape_cast %88 : vector<8xf32> to vector<8x1xf32>
    %90 = vector.broadcast %89 : vector<8x1xf32> to vector<8x8xf32>
    %91 = arith.divf %87, %90 : vector<8x8xf32>
    %cst_28 = arith.constant dense<0.000000e+00> : vector<8x8xf32>
    %92 = tpu.matmul %91, %81, %cst_28 {dimension_numbers = #tpu.dot_dimension_numbers<[1], [0], [0], [1], [0, 0, 1, 1], [], []>} : vector<8x8xf32>, vector<8x8xf32>, vector<8x8xf32> -> vector<8x8xf32>
    %93 = vector.extract_strided_slice %64 {offsets = [0, 16], sizes = [8, 8], strides = [1, 1]} : vector<8x96xf32> to vector<8x8xf32>
    %94 = vector.extract_strided_slice %64 {offsets = [0, 48], sizes = [8, 8], strides = [1, 1]} : vector<8x96xf32> to vector<8x8xf32>
    %95 = vector.extract_strided_slice %64 {offsets = [0, 80], sizes = [8, 8], strides = [1, 1]} : vector<8x96xf32> to vector<8x8xf32>
    %cst_29 = arith.constant dense<0.000000e+00> : vector<8x8xf32>
    %96 = tpu.matmul %93, %94, %cst_29 {dimension_numbers = #tpu.dot_dimension_numbers<[1], [1], [0], [0], [0, 0, 1, 0], [], []>} : vector<8x8xf32>, vector<8x8xf32>, vector<8x8xf32> -> vector<8x8xf32>
    %cst_30 = arith.constant dense<0xFF800000> : vector<8xf32>
    %97 = vector.multi_reduction <maximumf>, %96, %cst_30 [1] : vector<8x8xf32> to vector<8xf32>
    %98 = vector.shape_cast %97 : vector<8xf32> to vector<8x1xf32>
    %99 = vector.broadcast %98 : vector<8x1xf32> to vector<8x8xf32>
    %100 = arith.subf %96, %99 : vector<8x8xf32>
    %101 = math.exp %100 : vector<8x8xf32>
    %cst_31 = arith.constant dense<0.000000e+00> : vector<8xf32>
    %102 = vector.multi_reduction <add>, %101, %cst_31 [1] : vector<8x8xf32> to vector<8xf32>
    %103 = vector.shape_cast %102 : vector<8xf32> to vector<8x1xf32>
    %104 = vector.broadcast %103 : vector<8x1xf32> to vector<8x8xf32>
    %105 = arith.divf %101, %104 : vector<8x8xf32>
    %cst_32 = arith.constant dense<0.000000e+00> : vector<8x8xf32>
    %106 = tpu.matmul %105, %95, %cst_32 {dimension_numbers = #tpu.dot_dimension_numbers<[1], [0], [0], [1], [0, 0, 1, 1], [], []>} : vector<8x8xf32>, vector<8x8xf32>, vector<8x8xf32> -> vector<8x8xf32>
    %107 = vector.extract_strided_slice %64 {offsets = [0, 24], sizes = [8, 8], strides = [1, 1]} : vector<8x96xf32> to vector<8x8xf32>
    %108 = vector.extract_strided_slice %64 {offsets = [0, 56], sizes = [8, 8], strides = [1, 1]} : vector<8x96xf32> to vector<8x8xf32>
    %109 = vector.extract_strided_slice %64 {offsets = [0, 88], sizes = [8, 8], strides = [1, 1]} : vector<8x96xf32> to vector<8x8xf32>
    %cst_33 = arith.constant dense<0.000000e+00> : vector<8x8xf32>
    %110 = tpu.matmul %107, %108, %cst_33 {dimension_numbers = #tpu.dot_dimension_numbers<[1], [1], [0], [0], [0, 0, 1, 0], [], []>} : vector<8x8xf32>, vector<8x8xf32>, vector<8x8xf32> -> vector<8x8xf32>
    %cst_34 = arith.constant dense<0xFF800000> : vector<8xf32>
    %111 = vector.multi_reduction <maximumf>, %110, %cst_34 [1] : vector<8x8xf32> to vector<8xf32>
    %112 = vector.shape_cast %111 : vector<8xf32> to vector<8x1xf32>
    %113 = vector.broadcast %112 : vector<8x1xf32> to vector<8x8xf32>
    %114 = arith.subf %110, %113 : vector<8x8xf32>
    %115 = math.exp %114 : vector<8x8xf32>
    %cst_35 = arith.constant dense<0.000000e+00> : vector<8xf32>
    %116 = vector.multi_reduction <add>, %115, %cst_35 [1] : vector<8x8xf32> to vector<8xf32>
    %117 = vector.shape_cast %116 : vector<8xf32> to vector<8x1xf32>
    %118 = vector.broadcast %117 : vector<8x1xf32> to vector<8x8xf32>
    %119 = arith.divf %115, %118 : vector<8x8xf32>
    %cst_36 = arith.constant dense<0.000000e+00> : vector<8x8xf32>
    %120 = tpu.matmul %119, %109, %cst_36 {dimension_numbers = #tpu.dot_dimension_numbers<[1], [0], [0], [1], [0, 0, 1, 1], [], []>} : vector<8x8xf32>, vector<8x8xf32>, vector<8x8xf32> -> vector<8x8xf32>
    %121 = tpu.concatenate %78, %92, %106, %120 in 1 : vector<8x8xf32>, vector<8x8xf32>, vector<8x8xf32>, vector<8x8xf32> -> vector<8x32xf32>
    %122 = tpu.concatenate %63, %121 in 0 : vector<8x32xf32>, vector<8x32xf32> -> vector<16x32xf32>
    %c0_37 = arith.constant 0 : index
    %c0_38 = arith.constant 0 : index
    %123 = vector.load %arg3[%c0_37, %c0_38] : memref<32x32xf32, #tpu.memory_space<vmem>>, vector<32x32xf32>
    %cst_39 = arith.constant dense<0.000000e+00> : vector<16x32xf32>
    %124 = tpu.matmul %122, %123, %cst_39 {dimension_numbers = #tpu.dot_dimension_numbers<[1], [0], [0], [1], [0, 0, 1, 1], [], []>} : vector<16x32xf32>, vector<32x32xf32>, vector<16x32xf32> -> vector<16x32xf32>
    %c0_40 = arith.constant 0 : index
    %c0_41 = arith.constant 0 : index
    %125 = vector.load %arg4[%c0_40, %c0_41] : memref<1x32xf32, #tpu.memory_space<vmem>>, vector<1x32xf32>
    %126 = vector.broadcast %125 : vector<1x32xf32> to vector<16x32xf32>
    %127 = arith.addf %124, %126 : vector<16x32xf32>
    %128 = arith.addf %0, %127 : vector<16x32xf32>
    %cst_42 = arith.constant dense<0.000000e+00> : vector<16xf32>
    %129 = vector.multi_reduction <add>, %128, %cst_42 [1] : vector<16x32xf32> to vector<16xf32>
    %130 = vector.shape_cast %129 : vector<16xf32> to vector<16x1xf32>
    %cst_43 = arith.constant 3.200000e+01 : f32
    %131 = vector.broadcast %cst_43 : f32 to vector<16x1xf32>
    %132 = arith.divf %130, %131 : vector<16x1xf32>
    %133 = vector.broadcast %132 : vector<16x1xf32> to vector<16x32xf32>
    %134 = arith.subf %128, %133 : vector<16x32xf32>
    %135 = arith.mulf %134, %134 : vector<16x32xf32>
    %cst_44 = arith.constant dense<0.000000e+00> : vector<16xf32>
    %136 = vector.multi_reduction <add>, %135, %cst_44 [1] : vector<16x32xf32> to vector<16xf32>
    %137 = vector.shape_cast %136 : vector<16xf32> to vector<16x1xf32>
    %cst_45 = arith.constant 3.200000e+01 : f32
    %138 = vector.broadcast %cst_45 : f32 to vector<16x1xf32>
    %139 = arith.divf %137, %138 : vector<16x1xf32>
    %cst_46 = arith.constant 9.99999974E-6 : f32
    %140 = vector.broadcast %cst_46 : f32 to vector<16x1xf32>
    %141 = arith.addf %139, %140 : vector<16x1xf32>
    %142 = math.rsqrt %141 : vector<16x1xf32>
    %143 = vector.broadcast %142 : vector<16x1xf32> to vector<16x32xf32>
    %144 = arith.mulf %134, %143 : vector<16x32xf32>
    %c0_47 = arith.constant 0 : index
    %c0_48 = arith.constant 0 : index
    %145 = vector.load %arg5[%c0_47, %c0_48] : memref<1x32xf32, #tpu.memory_space<vmem>>, vector<1x32xf32>
    %146 = vector.broadcast %145 : vector<1x32xf32> to vector<16x32xf32>
    %147 = arith.mulf %144, %146 : vector<16x32xf32>
    %c0_49 = arith.constant 0 : index
    %c0_50 = arith.constant 0 : index
    %148 = vector.load %arg6[%c0_49, %c0_50] : memref<1x32xf32, #tpu.memory_space<vmem>>, vector<1x32xf32>
    %149 = vector.broadcast %148 : vector<1x32xf32> to vector<16x32xf32>
    %150 = arith.addf %147, %149 : vector<16x32xf32>
    %c0_51 = arith.constant 0 : index
    %c0_52 = arith.constant 0 : index
    %151 = vector.load %arg7[%c0_51, %c0_52] : memref<16x32xf32, #tpu.memory_space<vmem>>, vector<16x32xf32>
    tpu.vector_store %arg7[%c0_51, %c0_52], %150 {strides = array<i32>} : memref<16x32xf32, #tpu.memory_space<vmem>>, vector<16x32xf32>,
    return
  }
}

module attributes {stable_mosaic.version = 11 : i64} {
  func.func @_gru_ffn_ln2_kernel(%arg0: memref<16x32xf32, #tpu.memory_space<vmem>>, %arg1: memref<32x384xf32, #tpu.memory_space<vmem>>, %arg2: memref<1x384xf32, #tpu.memory_space<vmem>>, %arg3: memref<64x192xf32, #tpu.memory_space<vmem>>, %arg4: memref<1x192xf32, #tpu.memory_space<vmem>>, %arg5: memref<64x192xf32, #tpu.memory_space<vmem>>, %arg6: memref<1x192xf32, #tpu.memory_space<vmem>>, %arg7: memref<128x32xf32, #tpu.memory_space<vmem>>, %arg8: memref<1x32xf32, #tpu.memory_space<vmem>>, %arg9: memref<1x32xf32, #tpu.memory_space<vmem>>, %arg10: memref<1x32xf32, #tpu.memory_space<vmem>>, %arg11: memref<16x32xf32, #tpu.memory_space<vmem>>) attributes {dimension_semantics = [], scalar_prefetch = 0 : i64, scratch_operands = 0 : i64, tpu.core_type = #tpu.core_type<tc>} {
    %c0 = arith.constant 0 : index
    %c0_0 = arith.constant 0 : index
    %0 = vector.load %arg0[%c0, %c0_0] : memref<16x32xf32, #tpu.memory_space<vmem>>, vector<16x32xf32>
    %c0_1 = arith.constant 0 : index
    %c0_2 = arith.constant 0 : index
    %1 = vector.load %arg1[%c0_1, %c0_2] : memref<32x384xf32, #tpu.memory_space<vmem>>, vector<32x384xf32>
    %cst = arith.constant dense<0.000000e+00> : vector<16x384xf32>
    %2 = tpu.matmul %0, %1, %cst {dimension_numbers = #tpu.dot_dimension_numbers<[1], [0], [0], [1], [0, 0, 1, 1], [], []>} : vector<16x32xf32>, vector<32x384xf32>, vector<16x384xf32> -> vector<16x384xf32>
    %c0_3 = arith.constant 0 : index
    %c0_4 = arith.constant 0 : index
    %3 = vector.load %arg2[%c0_3, %c0_4] : memref<1x384xf32, #tpu.memory_space<vmem>>, vector<1x384xf32>
    %4 = vector.broadcast %3 : vector<1x384xf32> to vector<16x384xf32>
    %5 = arith.addf %2, %4 : vector<16x384xf32>
    %6 = vector.extract_strided_slice %5 {offsets = [0, 0], sizes = [16, 64], strides = [1, 1]} : vector<16x384xf32> to vector<16x64xf32>
    %7 = vector.extract_strided_slice %5 {offsets = [0, 64], sizes = [16, 64], strides = [1, 1]} : vector<16x384xf32> to vector<16x64xf32>
    %8 = vector.extract_strided_slice %5 {offsets = [0, 128], sizes = [16, 64], strides = [1, 1]} : vector<16x384xf32> to vector<16x64xf32>
    %9 = vector.extract_strided_slice %5 {offsets = [0, 192], sizes = [16, 64], strides = [1, 1]} : vector<16x384xf32> to vector<16x64xf32>
    %10 = vector.extract_strided_slice %5 {offsets = [0, 256], sizes = [16, 64], strides = [1, 1]} : vector<16x384xf32> to vector<16x64xf32>
    %11 = vector.extract_strided_slice %5 {offsets = [0, 320], sizes = [16, 64], strides = [1, 1]} : vector<16x384xf32> to vector<16x64xf32>
    %c0_5 = arith.constant 0 : index
    %c0_6 = arith.constant 0 : index
    %12 = vector.load %arg3[%c0_5, %c0_6] : memref<64x192xf32, #tpu.memory_space<vmem>>, vector<64x192xf32>
    %c0_7 = arith.constant 0 : index
    %c0_8 = arith.constant 0 : index
    %13 = vector.load %arg5[%c0_7, %c0_8] : memref<64x192xf32, #tpu.memory_space<vmem>>, vector<64x192xf32>
    %c0_9 = arith.constant 0 : index
    %c0_10 = arith.constant 0 : index
    %14 = vector.load %arg4[%c0_9, %c0_10] : memref<1x192xf32, #tpu.memory_space<vmem>>, vector<1x192xf32>
    %c0_11 = arith.constant 0 : index
    %c0_12 = arith.constant 0 : index
    %15 = vector.load %arg6[%c0_11, %c0_12] : memref<1x192xf32, #tpu.memory_space<vmem>>, vector<1x192xf32>
    %cst_13 = arith.constant 0.000000e+00 : f32
    %16 = vector.broadcast %cst_13 : f32 to vector<2x64xf32>
    %cst_14 = arith.constant 0.000000e+00 : f32
    %17 = vector.broadcast %cst_14 : f32 to vector<2x64xf32>
    %18 = vector.extract_strided_slice %6 {offsets = [0, 0], sizes = [2, 64], strides = [1, 1]} : vector<16x64xf32> to vector<2x64xf32>
    %19 = vector.extract_strided_slice %7 {offsets = [0, 0], sizes = [2, 64], strides = [1, 1]} : vector<16x64xf32> to vector<2x64xf32>
    %20 = vector.extract_strided_slice %8 {offsets = [0, 0], sizes = [2, 64], strides = [1, 1]} : vector<16x64xf32> to vector<2x64xf32>
    %cst_15 = arith.constant dense<0.000000e+00> : vector<2x192xf32>
    %21 = tpu.matmul %16, %12, %cst_15 {dimension_numbers = #tpu.dot_dimension_numbers<[1], [0], [0], [1], [0, 0, 1, 1], [], []>} : vector<2x64xf32>, vector<64x192xf32>, vector<2x192xf32> -> vector<2x192xf32>
    %22 = vector.broadcast %14 : vector<1x192xf32> to vector<2x192xf32>
    %23 = arith.addf %21, %22 : vector<2x192xf32>
    %24 = vector.extract_strided_slice %23 {offsets = [0, 0], sizes = [2, 64], strides = [1, 1]} : vector<2x192xf32> to vector<2x64xf32>
    %25 = arith.addf %18, %24 : vector<2x64xf32>
    %26 = arith.negf %25 : vector<2x64xf32>
    %27 = math.exp %26 : vector<2x64xf32>
    %cst_16 = arith.constant 1.000000e+00 : f32
    %28 = vector.broadcast %cst_16 : f32 to vector<2x64xf32>
    %29 = arith.addf %28, %27 : vector<2x64xf32>
    %30 = arith.divf %28, %29 : vector<2x64xf32>
    %31 = vector.extract_strided_slice %23 {offsets = [0, 64], sizes = [2, 64], strides = [1, 1]} : vector<2x192xf32> to vector<2x64xf32>
    %32 = arith.addf %19, %31 : vector<2x64xf32>
    %33 = arith.negf %32 : vector<2x64xf32>
    %34 = math.exp %33 : vector<2x64xf32>
    %cst_17 = arith.constant 1.000000e+00 : f32
    %35 = vector.broadcast %cst_17 : f32 to vector<2x64xf32>
    %36 = arith.addf %35, %34 : vector<2x64xf32>
    %37 = arith.divf %35, %36 : vector<2x64xf32>
    %38 = vector.extract_strided_slice %23 {offsets = [0, 128], sizes = [2, 64], strides = [1, 1]} : vector<2x192xf32> to vector<2x64xf32>
    %39 = arith.mulf %30, %38 : vector<2x64xf32>
    %40 = arith.addf %20, %39 : vector<2x64xf32>
    %41 = math.tanh %40 : vector<2x64xf32>
    %cst_18 = arith.constant 1.000000e+00 : f32
    %42 = vector.broadcast %cst_18 : f32 to vector<2x64xf32>
    %43 = arith.subf %42, %37 : vector<2x64xf32>
    %44 = arith.mulf %43, %41 : vector<2x64xf32>
    %45 = arith.mulf %37, %16 : vector<2x64xf32>
    %46 = arith.addf %44, %45 : vector<2x64xf32>
    %47 = vector.extract_strided_slice %9 {offsets = [14, 0], sizes = [2, 64], strides = [1, 1]} : vector<16x64xf32> to vector<2x64xf32>
    %48 = vector.extract_strided_slice %10 {offsets = [14, 0], sizes = [2, 64], strides = [1, 1]} : vector<16x64xf32> to vector<2x64xf32>
    %49 = vector.extract_strided_slice %11 {offsets = [14, 0], sizes = [2, 64], strides = [1, 1]} : vector<16x64xf32> to vector<2x64xf32>
    %cst_19 = arith.constant dense<0.000000e+00> : vector<2x192xf32>
    %50 = tpu.matmul %17, %13, %cst_19 {dimension_numbers = #tpu.dot_dimension_numbers<[1], [0], [0], [1], [0, 0, 1, 1], [], []>} : vector<2x64xf32>, vector<64x192xf32>, vector<2x192xf32> -> vector<2x192xf32>
    %51 = vector.broadcast %15 : vector<1x192xf32> to vector<2x192xf32>
    %52 = arith.addf %50, %51 : vector<2x192xf32>
    %53 = vector.extract_strided_slice %52 {offsets = [0, 0], sizes = [2, 64], strides = [1, 1]} : vector<2x192xf32> to vector<2x64xf32>
    %54 = arith.addf %47, %53 : vector<2x64xf32>
    %55 = arith.negf %54 : vector<2x64xf32>
    %56 = math.exp %55 : vector<2x64xf32>
    %cst_20 = arith.constant 1.000000e+00 : f32
    %57 = vector.broadcast %cst_20 : f32 to vector<2x64xf32>
    %58 = arith.addf %57, %56 : vector<2x64xf32>
    %59 = arith.divf %57, %58 : vector<2x64xf32>
    %60 = vector.extract_strided_slice %52 {offsets = [0, 64], sizes = [2, 64], strides = [1, 1]} : vector<2x192xf32> to vector<2x64xf32>
    %61 = arith.addf %48, %60 : vector<2x64xf32>
    %62 = arith.negf %61 : vector<2x64xf32>
    %63 = math.exp %62 : vector<2x64xf32>
    %cst_21 = arith.constant 1.000000e+00 : f32
    %64 = vector.broadcast %cst_21 : f32 to vector<2x64xf32>
    %65 = arith.addf %64, %63 : vector<2x64xf32>
    %66 = arith.divf %64, %65 : vector<2x64xf32>
    %67 = vector.extract_strided_slice %52 {offsets = [0, 128], sizes = [2, 64], strides = [1, 1]} : vector<2x192xf32> to vector<2x64xf32>
    %68 = arith.mulf %59, %67 : vector<2x64xf32>
    %69 = arith.addf %49, %68 : vector<2x64xf32>
    %70 = math.tanh %69 : vector<2x64xf32>
    %cst_22 = arith.constant 1.000000e+00 : f32
    %71 = vector.broadcast %cst_22 : f32 to vector<2x64xf32>
    %72 = arith.subf %71, %66 : vector<2x64xf32>
    %73 = arith.mulf %72, %70 : vector<2x64xf32>
    %74 = arith.mulf %66, %17 : vector<2x64xf32>
    %75 = arith.addf %73, %74 : vector<2x64xf32>
    %76 = vector.extract_strided_slice %6 {offsets = [2, 0], sizes = [2, 64], strides = [1, 1]} : vector<16x64xf32> to vector<2x64xf32>
    %77 = vector.extract_strided_slice %7 {offsets = [2, 0], sizes = [2, 64], strides = [1, 1]} : vector<16x64xf32> to vector<2x64xf32>
    %78 = vector.extract_strided_slice %8 {offsets = [2, 0], sizes = [2, 64], strides = [1, 1]} : vector<16x64xf32> to vector<2x64xf32>
    %cst_23 = arith.constant dense<0.000000e+00> : vector<2x192xf32>
    %79 = tpu.matmul %46, %12, %cst_23 {dimension_numbers = #tpu.dot_dimension_numbers<[1], [0], [0], [1], [0, 0, 1, 1], [], []>} : vector<2x64xf32>, vector<64x192xf32>, vector<2x192xf32> -> vector<2x192xf32>
    %80 = vector.broadcast %14 : vector<1x192xf32> to vector<2x192xf32>
    %81 = arith.addf %79, %80 : vector<2x192xf32>
    %82 = vector.extract_strided_slice %81 {offsets = [0, 0], sizes = [2, 64], strides = [1, 1]} : vector<2x192xf32> to vector<2x64xf32>
    %83 = arith.addf %76, %82 : vector<2x64xf32>
    %84 = arith.negf %83 : vector<2x64xf32>
    %85 = math.exp %84 : vector<2x64xf32>
    %cst_24 = arith.constant 1.000000e+00 : f32
    %86 = vector.broadcast %cst_24 : f32 to vector<2x64xf32>
    %87 = arith.addf %86, %85 : vector<2x64xf32>
    %88 = arith.divf %86, %87 : vector<2x64xf32>
    %89 = vector.extract_strided_slice %81 {offsets = [0, 64], sizes = [2, 64], strides = [1, 1]} : vector<2x192xf32> to vector<2x64xf32>
    %90 = arith.addf %77, %89 : vector<2x64xf32>
    %91 = arith.negf %90 : vector<2x64xf32>
    %92 = math.exp %91 : vector<2x64xf32>
    %cst_25 = arith.constant 1.000000e+00 : f32
    %93 = vector.broadcast %cst_25 : f32 to vector<2x64xf32>
    %94 = arith.addf %93, %92 : vector<2x64xf32>
    %95 = arith.divf %93, %94 : vector<2x64xf32>
    %96 = vector.extract_strided_slice %81 {offsets = [0, 128], sizes = [2, 64], strides = [1, 1]} : vector<2x192xf32> to vector<2x64xf32>
    %97 = arith.mulf %88, %96 : vector<2x64xf32>
    %98 = arith.addf %78, %97 : vector<2x64xf32>
    %99 = math.tanh %98 : vector<2x64xf32>
    %cst_26 = arith.constant 1.000000e+00 : f32
    %100 = vector.broadcast %cst_26 : f32 to vector<2x64xf32>
    %101 = arith.subf %100, %95 : vector<2x64xf32>
    %102 = arith.mulf %101, %99 : vector<2x64xf32>
    %103 = arith.mulf %95, %46 : vector<2x64xf32>
    %104 = arith.addf %102, %103 : vector<2x64xf32>
    %105 = vector.extract_strided_slice %9 {offsets = [12, 0], sizes = [2, 64], strides = [1, 1]} : vector<16x64xf32> to vector<2x64xf32>
    %106 = vector.extract_strided_slice %10 {offsets = [12, 0], sizes = [2, 64], strides = [1, 1]} : vector<16x64xf32> to vector<2x64xf32>
    %107 = vector.extract_strided_slice %11 {offsets = [12, 0], sizes = [2, 64], strides = [1, 1]} : vector<16x64xf32> to vector<2x64xf32>
    %cst_27 = arith.constant dense<0.000000e+00> : vector<2x192xf32>
    %108 = tpu.matmul %75, %13, %cst_27 {dimension_numbers = #tpu.dot_dimension_numbers<[1], [0], [0], [1], [0, 0, 1, 1], [], []>} : vector<2x64xf32>, vector<64x192xf32>, vector<2x192xf32> -> vector<2x192xf32>
    %109 = vector.broadcast %15 : vector<1x192xf32> to vector<2x192xf32>
    %110 = arith.addf %108, %109 : vector<2x192xf32>
    %111 = vector.extract_strided_slice %110 {offsets = [0, 0], sizes = [2, 64], strides = [1, 1]} : vector<2x192xf32> to vector<2x64xf32>
    %112 = arith.addf %105, %111 : vector<2x64xf32>
    %113 = arith.negf %112 : vector<2x64xf32>
    %114 = math.exp %113 : vector<2x64xf32>
    %cst_28 = arith.constant 1.000000e+00 : f32
    %115 = vector.broadcast %cst_28 : f32 to vector<2x64xf32>
    %116 = arith.addf %115, %114 : vector<2x64xf32>
    %117 = arith.divf %115, %116 : vector<2x64xf32>
    %118 = vector.extract_strided_slice %110 {offsets = [0, 64], sizes = [2, 64], strides = [1, 1]} : vector<2x192xf32> to vector<2x64xf32>
    %119 = arith.addf %106, %118 : vector<2x64xf32>
    %120 = arith.negf %119 : vector<2x64xf32>
    %121 = math.exp %120 : vector<2x64xf32>
    %cst_29 = arith.constant 1.000000e+00 : f32
    %122 = vector.broadcast %cst_29 : f32 to vector<2x64xf32>
    %123 = arith.addf %122, %121 : vector<2x64xf32>
    %124 = arith.divf %122, %123 : vector<2x64xf32>
    %125 = vector.extract_strided_slice %110 {offsets = [0, 128], sizes = [2, 64], strides = [1, 1]} : vector<2x192xf32> to vector<2x64xf32>
    %126 = arith.mulf %117, %125 : vector<2x64xf32>
    %127 = arith.addf %107, %126 : vector<2x64xf32>
    %128 = math.tanh %127 : vector<2x64xf32>
    %cst_30 = arith.constant 1.000000e+00 : f32
    %129 = vector.broadcast %cst_30 : f32 to vector<2x64xf32>
    %130 = arith.subf %129, %124 : vector<2x64xf32>
    %131 = arith.mulf %130, %128 : vector<2x64xf32>
    %132 = arith.mulf %124, %75 : vector<2x64xf32>
    %133 = arith.addf %131, %132 : vector<2x64xf32>
    %134 = vector.extract_strided_slice %6 {offsets = [4, 0], sizes = [2, 64], strides = [1, 1]} : vector<16x64xf32> to vector<2x64xf32>
    %135 = vector.extract_strided_slice %7 {offsets = [4, 0], sizes = [2, 64], strides = [1, 1]} : vector<16x64xf32> to vector<2x64xf32>
    %136 = vector.extract_strided_slice %8 {offsets = [4, 0], sizes = [2, 64], strides = [1, 1]} : vector<16x64xf32> to vector<2x64xf32>
    %cst_31 = arith.constant dense<0.000000e+00> : vector<2x192xf32>
    %137 = tpu.matmul %104, %12, %cst_31 {dimension_numbers = #tpu.dot_dimension_numbers<[1], [0], [0], [1], [0, 0, 1, 1], [], []>} : vector<2x64xf32>, vector<64x192xf32>, vector<2x192xf32> -> vector<2x192xf32>
    %138 = vector.broadcast %14 : vector<1x192xf32> to vector<2x192xf32>
    %139 = arith.addf %137, %138 : vector<2x192xf32>
    %140 = vector.extract_strided_slice %139 {offsets = [0, 0], sizes = [2, 64], strides = [1, 1]} : vector<2x192xf32> to vector<2x64xf32>
    %141 = arith.addf %134, %140 : vector<2x64xf32>
    %142 = arith.negf %141 : vector<2x64xf32>
    %143 = math.exp %142 : vector<2x64xf32>
    %cst_32 = arith.constant 1.000000e+00 : f32
    %144 = vector.broadcast %cst_32 : f32 to vector<2x64xf32>
    %145 = arith.addf %144, %143 : vector<2x64xf32>
    %146 = arith.divf %144, %145 : vector<2x64xf32>
    %147 = vector.extract_strided_slice %139 {offsets = [0, 64], sizes = [2, 64], strides = [1, 1]} : vector<2x192xf32> to vector<2x64xf32>
    %148 = arith.addf %135, %147 : vector<2x64xf32>
    %149 = arith.negf %148 : vector<2x64xf32>
    %150 = math.exp %149 : vector<2x64xf32>
    %cst_33 = arith.constant 1.000000e+00 : f32
    %151 = vector.broadcast %cst_33 : f32 to vector<2x64xf32>
    %152 = arith.addf %151, %150 : vector<2x64xf32>
    %153 = arith.divf %151, %152 : vector<2x64xf32>
    %154 = vector.extract_strided_slice %139 {offsets = [0, 128], sizes = [2, 64], strides = [1, 1]} : vector<2x192xf32> to vector<2x64xf32>
    %155 = arith.mulf %146, %154 : vector<2x64xf32>
    %156 = arith.addf %136, %155 : vector<2x64xf32>
    %157 = math.tanh %156 : vector<2x64xf32>
    %cst_34 = arith.constant 1.000000e+00 : f32
    %158 = vector.broadcast %cst_34 : f32 to vector<2x64xf32>
    %159 = arith.subf %158, %153 : vector<2x64xf32>
    %160 = arith.mulf %159, %157 : vector<2x64xf32>
    %161 = arith.mulf %153, %104 : vector<2x64xf32>
    %162 = arith.addf %160, %161 : vector<2x64xf32>
    %163 = vector.extract_strided_slice %9 {offsets = [10, 0], sizes = [2, 64], strides = [1, 1]} : vector<16x64xf32> to vector<2x64xf32>
    %164 = vector.extract_strided_slice %10 {offsets = [10, 0], sizes = [2, 64], strides = [1, 1]} : vector<16x64xf32> to vector<2x64xf32>
    %165 = vector.extract_strided_slice %11 {offsets = [10, 0], sizes = [2, 64], strides = [1, 1]} : vector<16x64xf32> to vector<2x64xf32>
    %cst_35 = arith.constant dense<0.000000e+00> : vector<2x192xf32>
    %166 = tpu.matmul %133, %13, %cst_35 {dimension_numbers = #tpu.dot_dimension_numbers<[1], [0], [0], [1], [0, 0, 1, 1], [], []>} : vector<2x64xf32>, vector<64x192xf32>, vector<2x192xf32> -> vector<2x192xf32>
    %167 = vector.broadcast %15 : vector<1x192xf32> to vector<2x192xf32>
    %168 = arith.addf %166, %167 : vector<2x192xf32>
    %169 = vector.extract_strided_slice %168 {offsets = [0, 0], sizes = [2, 64], strides = [1, 1]} : vector<2x192xf32> to vector<2x64xf32>
    %170 = arith.addf %163, %169 : vector<2x64xf32>
    %171 = arith.negf %170 : vector<2x64xf32>
    %172 = math.exp %171 : vector<2x64xf32>
    %cst_36 = arith.constant 1.000000e+00 : f32
    %173 = vector.broadcast %cst_36 : f32 to vector<2x64xf32>
    %174 = arith.addf %173, %172 : vector<2x64xf32>
    %175 = arith.divf %173, %174 : vector<2x64xf32>
    %176 = vector.extract_strided_slice %168 {offsets = [0, 64], sizes = [2, 64], strides = [1, 1]} : vector<2x192xf32> to vector<2x64xf32>
    %177 = arith.addf %164, %176 : vector<2x64xf32>
    %178 = arith.negf %177 : vector<2x64xf32>
    %179 = math.exp %178 : vector<2x64xf32>
    %cst_37 = arith.constant 1.000000e+00 : f32
    %180 = vector.broadcast %cst_37 : f32 to vector<2x64xf32>
    %181 = arith.addf %180, %179 : vector<2x64xf32>
    %182 = arith.divf %180, %181 : vector<2x64xf32>
    %183 = vector.extract_strided_slice %168 {offsets = [0, 128], sizes = [2, 64], strides = [1, 1]} : vector<2x192xf32> to vector<2x64xf32>
    %184 = arith.mulf %175, %183 : vector<2x64xf32>
    %185 = arith.addf %165, %184 : vector<2x64xf32>
    %186 = math.tanh %185 : vector<2x64xf32>
    %cst_38 = arith.constant 1.000000e+00 : f32
    %187 = vector.broadcast %cst_38 : f32 to vector<2x64xf32>
    %188 = arith.subf %187, %182 : vector<2x64xf32>
    %189 = arith.mulf %188, %186 : vector<2x64xf32>
    %190 = arith.mulf %182, %133 : vector<2x64xf32>
    %191 = arith.addf %189, %190 : vector<2x64xf32>
    %192 = vector.extract_strided_slice %6 {offsets = [6, 0], sizes = [2, 64], strides = [1, 1]} : vector<16x64xf32> to vector<2x64xf32>
    %193 = vector.extract_strided_slice %7 {offsets = [6, 0], sizes = [2, 64], strides = [1, 1]} : vector<16x64xf32> to vector<2x64xf32>
    %194 = vector.extract_strided_slice %8 {offsets = [6, 0], sizes = [2, 64], strides = [1, 1]} : vector<16x64xf32> to vector<2x64xf32>
    %cst_39 = arith.constant dense<0.000000e+00> : vector<2x192xf32>
    %195 = tpu.matmul %162, %12, %cst_39 {dimension_numbers = #tpu.dot_dimension_numbers<[1], [0], [0], [1], [0, 0, 1, 1], [], []>} : vector<2x64xf32>, vector<64x192xf32>, vector<2x192xf32> -> vector<2x192xf32>
    %196 = vector.broadcast %14 : vector<1x192xf32> to vector<2x192xf32>
    %197 = arith.addf %195, %196 : vector<2x192xf32>
    %198 = vector.extract_strided_slice %197 {offsets = [0, 0], sizes = [2, 64], strides = [1, 1]} : vector<2x192xf32> to vector<2x64xf32>
    %199 = arith.addf %192, %198 : vector<2x64xf32>
    %200 = arith.negf %199 : vector<2x64xf32>
    %201 = math.exp %200 : vector<2x64xf32>
    %cst_40 = arith.constant 1.000000e+00 : f32
    %202 = vector.broadcast %cst_40 : f32 to vector<2x64xf32>
    %203 = arith.addf %202, %201 : vector<2x64xf32>
    %204 = arith.divf %202, %203 : vector<2x64xf32>
    %205 = vector.extract_strided_slice %197 {offsets = [0, 64], sizes = [2, 64], strides = [1, 1]} : vector<2x192xf32> to vector<2x64xf32>
    %206 = arith.addf %193, %205 : vector<2x64xf32>
    %207 = arith.negf %206 : vector<2x64xf32>
    %208 = math.exp %207 : vector<2x64xf32>
    %cst_41 = arith.constant 1.000000e+00 : f32
    %209 = vector.broadcast %cst_41 : f32 to vector<2x64xf32>
    %210 = arith.addf %209, %208 : vector<2x64xf32>
    %211 = arith.divf %209, %210 : vector<2x64xf32>
    %212 = vector.extract_strided_slice %197 {offsets = [0, 128], sizes = [2, 64], strides = [1, 1]} : vector<2x192xf32> to vector<2x64xf32>
    %213 = arith.mulf %204, %212 : vector<2x64xf32>
    %214 = arith.addf %194, %213 : vector<2x64xf32>
    %215 = math.tanh %214 : vector<2x64xf32>
    %cst_42 = arith.constant 1.000000e+00 : f32
    %216 = vector.broadcast %cst_42 : f32 to vector<2x64xf32>
    %217 = arith.subf %216, %211 : vector<2x64xf32>
    %218 = arith.mulf %217, %215 : vector<2x64xf32>
    %219 = arith.mulf %211, %162 : vector<2x64xf32>
    %220 = arith.addf %218, %219 : vector<2x64xf32>
    %221 = vector.extract_strided_slice %9 {offsets = [8, 0], sizes = [2, 64], strides = [1, 1]} : vector<16x64xf32> to vector<2x64xf32>
    %222 = vector.extract_strided_slice %10 {offsets = [8, 0], sizes = [2, 64], strides = [1, 1]} : vector<16x64xf32> to vector<2x64xf32>
    %223 = vector.extract_strided_slice %11 {offsets = [8, 0], sizes = [2, 64], strides = [1, 1]} : vector<16x64xf32> to vector<2x64xf32>
    %cst_43 = arith.constant dense<0.000000e+00> : vector<2x192xf32>
    %224 = tpu.matmul %191, %13, %cst_43 {dimension_numbers = #tpu.dot_dimension_numbers<[1], [0], [0], [1], [0, 0, 1, 1], [], []>} : vector<2x64xf32>, vector<64x192xf32>, vector<2x192xf32> -> vector<2x192xf32>
    %225 = vector.broadcast %15 : vector<1x192xf32> to vector<2x192xf32>
    %226 = arith.addf %224, %225 : vector<2x192xf32>
    %227 = vector.extract_strided_slice %226 {offsets = [0, 0], sizes = [2, 64], strides = [1, 1]} : vector<2x192xf32> to vector<2x64xf32>
    %228 = arith.addf %221, %227 : vector<2x64xf32>
    %229 = arith.negf %228 : vector<2x64xf32>
    %230 = math.exp %229 : vector<2x64xf32>
    %cst_44 = arith.constant 1.000000e+00 : f32
    %231 = vector.broadcast %cst_44 : f32 to vector<2x64xf32>
    %232 = arith.addf %231, %230 : vector<2x64xf32>
    %233 = arith.divf %231, %232 : vector<2x64xf32>
    %234 = vector.extract_strided_slice %226 {offsets = [0, 64], sizes = [2, 64], strides = [1, 1]} : vector<2x192xf32> to vector<2x64xf32>
    %235 = arith.addf %222, %234 : vector<2x64xf32>
    %236 = arith.negf %235 : vector<2x64xf32>
    %237 = math.exp %236 : vector<2x64xf32>
    %cst_45 = arith.constant 1.000000e+00 : f32
    %238 = vector.broadcast %cst_45 : f32 to vector<2x64xf32>
    %239 = arith.addf %238, %237 : vector<2x64xf32>
    %240 = arith.divf %238, %239 : vector<2x64xf32>
    %241 = vector.extract_strided_slice %226 {offsets = [0, 128], sizes = [2, 64], strides = [1, 1]} : vector<2x192xf32> to vector<2x64xf32>
    %242 = arith.mulf %233, %241 : vector<2x64xf32>
    %243 = arith.addf %223, %242 : vector<2x64xf32>
    %244 = math.tanh %243 : vector<2x64xf32>
    %cst_46 = arith.constant 1.000000e+00 : f32
    %245 = vector.broadcast %cst_46 : f32 to vector<2x64xf32>
    %246 = arith.subf %245, %240 : vector<2x64xf32>
    %247 = arith.mulf %246, %244 : vector<2x64xf32>
    %248 = arith.mulf %240, %191 : vector<2x64xf32>
    %249 = arith.addf %247, %248 : vector<2x64xf32>
    %250 = vector.extract_strided_slice %6 {offsets = [8, 0], sizes = [2, 64], strides = [1, 1]} : vector<16x64xf32> to vector<2x64xf32>
    %251 = vector.extract_strided_slice %7 {offsets = [8, 0], sizes = [2, 64], strides = [1, 1]} : vector<16x64xf32> to vector<2x64xf32>
    %252 = vector.extract_strided_slice %8 {offsets = [8, 0], sizes = [2, 64], strides = [1, 1]} : vector<16x64xf32> to vector<2x64xf32>
    %cst_47 = arith.constant dense<0.000000e+00> : vector<2x192xf32>
    %253 = tpu.matmul %220, %12, %cst_47 {dimension_numbers = #tpu.dot_dimension_numbers<[1], [0], [0], [1], [0, 0, 1, 1], [], []>} : vector<2x64xf32>, vector<64x192xf32>, vector<2x192xf32> -> vector<2x192xf32>
    %254 = vector.broadcast %14 : vector<1x192xf32> to vector<2x192xf32>
    %255 = arith.addf %253, %254 : vector<2x192xf32>
    %256 = vector.extract_strided_slice %255 {offsets = [0, 0], sizes = [2, 64], strides = [1, 1]} : vector<2x192xf32> to vector<2x64xf32>
    %257 = arith.addf %250, %256 : vector<2x64xf32>
    %258 = arith.negf %257 : vector<2x64xf32>
    %259 = math.exp %258 : vector<2x64xf32>
    %cst_48 = arith.constant 1.000000e+00 : f32
    %260 = vector.broadcast %cst_48 : f32 to vector<2x64xf32>
    %261 = arith.addf %260, %259 : vector<2x64xf32>
    %262 = arith.divf %260, %261 : vector<2x64xf32>
    %263 = vector.extract_strided_slice %255 {offsets = [0, 64], sizes = [2, 64], strides = [1, 1]} : vector<2x192xf32> to vector<2x64xf32>
    %264 = arith.addf %251, %263 : vector<2x64xf32>
    %265 = arith.negf %264 : vector<2x64xf32>
    %266 = math.exp %265 : vector<2x64xf32>
    %cst_49 = arith.constant 1.000000e+00 : f32
    %267 = vector.broadcast %cst_49 : f32 to vector<2x64xf32>
    %268 = arith.addf %267, %266 : vector<2x64xf32>
    %269 = arith.divf %267, %268 : vector<2x64xf32>
    %270 = vector.extract_strided_slice %255 {offsets = [0, 128], sizes = [2, 64], strides = [1, 1]} : vector<2x192xf32> to vector<2x64xf32>
    %271 = arith.mulf %262, %270 : vector<2x64xf32>
    %272 = arith.addf %252, %271 : vector<2x64xf32>
    %273 = math.tanh %272 : vector<2x64xf32>
    %cst_50 = arith.constant 1.000000e+00 : f32
    %274 = vector.broadcast %cst_50 : f32 to vector<2x64xf32>
    %275 = arith.subf %274, %269 : vector<2x64xf32>
    %276 = arith.mulf %275, %273 : vector<2x64xf32>
    %277 = arith.mulf %269, %220 : vector<2x64xf32>
    %278 = arith.addf %276, %277 : vector<2x64xf32>
    %279 = vector.extract_strided_slice %9 {offsets = [6, 0], sizes = [2, 64], strides = [1, 1]} : vector<16x64xf32> to vector<2x64xf32>
    %280 = vector.extract_strided_slice %10 {offsets = [6, 0], sizes = [2, 64], strides = [1, 1]} : vector<16x64xf32> to vector<2x64xf32>
    %281 = vector.extract_strided_slice %11 {offsets = [6, 0], sizes = [2, 64], strides = [1, 1]} : vector<16x64xf32> to vector<2x64xf32>
    %cst_51 = arith.constant dense<0.000000e+00> : vector<2x192xf32>
    %282 = tpu.matmul %249, %13, %cst_51 {dimension_numbers = #tpu.dot_dimension_numbers<[1], [0], [0], [1], [0, 0, 1, 1], [], []>} : vector<2x64xf32>, vector<64x192xf32>, vector<2x192xf32> -> vector<2x192xf32>
    %283 = vector.broadcast %15 : vector<1x192xf32> to vector<2x192xf32>
    %284 = arith.addf %282, %283 : vector<2x192xf32>
    %285 = vector.extract_strided_slice %284 {offsets = [0, 0], sizes = [2, 64], strides = [1, 1]} : vector<2x192xf32> to vector<2x64xf32>
    %286 = arith.addf %279, %285 : vector<2x64xf32>
    %287 = arith.negf %286 : vector<2x64xf32>
    %288 = math.exp %287 : vector<2x64xf32>
    %cst_52 = arith.constant 1.000000e+00 : f32
    %289 = vector.broadcast %cst_52 : f32 to vector<2x64xf32>
    %290 = arith.addf %289, %288 : vector<2x64xf32>
    %291 = arith.divf %289, %290 : vector<2x64xf32>
    %292 = vector.extract_strided_slice %284 {offsets = [0, 64], sizes = [2, 64], strides = [1, 1]} : vector<2x192xf32> to vector<2x64xf32>
    %293 = arith.addf %280, %292 : vector<2x64xf32>
    %294 = arith.negf %293 : vector<2x64xf32>
    %295 = math.exp %294 : vector<2x64xf32>
    %cst_53 = arith.constant 1.000000e+00 : f32
    %296 = vector.broadcast %cst_53 : f32 to vector<2x64xf32>
    %297 = arith.addf %296, %295 : vector<2x64xf32>
    %298 = arith.divf %296, %297 : vector<2x64xf32>
    %299 = vector.extract_strided_slice %284 {offsets = [0, 128], sizes = [2, 64], strides = [1, 1]} : vector<2x192xf32> to vector<2x64xf32>
    %300 = arith.mulf %291, %299 : vector<2x64xf32>
    %301 = arith.addf %281, %300 : vector<2x64xf32>
    %302 = math.tanh %301 : vector<2x64xf32>
    %cst_54 = arith.constant 1.000000e+00 : f32
    %303 = vector.broadcast %cst_54 : f32 to vector<2x64xf32>
    %304 = arith.subf %303, %298 : vector<2x64xf32>
    %305 = arith.mulf %304, %302 : vector<2x64xf32>
    %306 = arith.mulf %298, %249 : vector<2x64xf32>
    %307 = arith.addf %305, %306 : vector<2x64xf32>
    %308 = vector.extract_strided_slice %6 {offsets = [10, 0], sizes = [2, 64], strides = [1, 1]} : vector<16x64xf32> to vector<2x64xf32>
    %309 = vector.extract_strided_slice %7 {offsets = [10, 0], sizes = [2, 64], strides = [1, 1]} : vector<16x64xf32> to vector<2x64xf32>
    %310 = vector.extract_strided_slice %8 {offsets = [10, 0], sizes = [2, 64], strides = [1, 1]} : vector<16x64xf32> to vector<2x64xf32>
    %cst_55 = arith.constant dense<0.000000e+00> : vector<2x192xf32>
    %311 = tpu.matmul %278, %12, %cst_55 {dimension_numbers = #tpu.dot_dimension_numbers<[1], [0], [0], [1], [0, 0, 1, 1], [], []>} : vector<2x64xf32>, vector<64x192xf32>, vector<2x192xf32> -> vector<2x192xf32>
    %312 = vector.broadcast %14 : vector<1x192xf32> to vector<2x192xf32>
    %313 = arith.addf %311, %312 : vector<2x192xf32>
    %314 = vector.extract_strided_slice %313 {offsets = [0, 0], sizes = [2, 64], strides = [1, 1]} : vector<2x192xf32> to vector<2x64xf32>
    %315 = arith.addf %308, %314 : vector<2x64xf32>
    %316 = arith.negf %315 : vector<2x64xf32>
    %317 = math.exp %316 : vector<2x64xf32>
    %cst_56 = arith.constant 1.000000e+00 : f32
    %318 = vector.broadcast %cst_56 : f32 to vector<2x64xf32>
    %319 = arith.addf %318, %317 : vector<2x64xf32>
    %320 = arith.divf %318, %319 : vector<2x64xf32>
    %321 = vector.extract_strided_slice %313 {offsets = [0, 64], sizes = [2, 64], strides = [1, 1]} : vector<2x192xf32> to vector<2x64xf32>
    %322 = arith.addf %309, %321 : vector<2x64xf32>
    %323 = arith.negf %322 : vector<2x64xf32>
    %324 = math.exp %323 : vector<2x64xf32>
    %cst_57 = arith.constant 1.000000e+00 : f32
    %325 = vector.broadcast %cst_57 : f32 to vector<2x64xf32>
    %326 = arith.addf %325, %324 : vector<2x64xf32>
    %327 = arith.divf %325, %326 : vector<2x64xf32>
    %328 = vector.extract_strided_slice %313 {offsets = [0, 128], sizes = [2, 64], strides = [1, 1]} : vector<2x192xf32> to vector<2x64xf32>
    %329 = arith.mulf %320, %328 : vector<2x64xf32>
    %330 = arith.addf %310, %329 : vector<2x64xf32>
    %331 = math.tanh %330 : vector<2x64xf32>
    %cst_58 = arith.constant 1.000000e+00 : f32
    %332 = vector.broadcast %cst_58 : f32 to vector<2x64xf32>
    %333 = arith.subf %332, %327 : vector<2x64xf32>
    %334 = arith.mulf %333, %331 : vector<2x64xf32>
    %335 = arith.mulf %327, %278 : vector<2x64xf32>
    %336 = arith.addf %334, %335 : vector<2x64xf32>
    %337 = vector.extract_strided_slice %9 {offsets = [4, 0], sizes = [2, 64], strides = [1, 1]} : vector<16x64xf32> to vector<2x64xf32>
    %338 = vector.extract_strided_slice %10 {offsets = [4, 0], sizes = [2, 64], strides = [1, 1]} : vector<16x64xf32> to vector<2x64xf32>
    %339 = vector.extract_strided_slice %11 {offsets = [4, 0], sizes = [2, 64], strides = [1, 1]} : vector<16x64xf32> to vector<2x64xf32>
    %cst_59 = arith.constant dense<0.000000e+00> : vector<2x192xf32>
    %340 = tpu.matmul %307, %13, %cst_59 {dimension_numbers = #tpu.dot_dimension_numbers<[1], [0], [0], [1], [0, 0, 1, 1], [], []>} : vector<2x64xf32>, vector<64x192xf32>, vector<2x192xf32> -> vector<2x192xf32>
    %341 = vector.broadcast %15 : vector<1x192xf32> to vector<2x192xf32>
    %342 = arith.addf %340, %341 : vector<2x192xf32>
    %343 = vector.extract_strided_slice %342 {offsets = [0, 0], sizes = [2, 64], strides = [1, 1]} : vector<2x192xf32> to vector<2x64xf32>
    %344 = arith.addf %337, %343 : vector<2x64xf32>
    %345 = arith.negf %344 : vector<2x64xf32>
    %346 = math.exp %345 : vector<2x64xf32>
    %cst_60 = arith.constant 1.000000e+00 : f32
    %347 = vector.broadcast %cst_60 : f32 to vector<2x64xf32>
    %348 = arith.addf %347, %346 : vector<2x64xf32>
    %349 = arith.divf %347, %348 : vector<2x64xf32>
    %350 = vector.extract_strided_slice %342 {offsets = [0, 64], sizes = [2, 64], strides = [1, 1]} : vector<2x192xf32> to vector<2x64xf32>
    %351 = arith.addf %338, %350 : vector<2x64xf32>
    %352 = arith.negf %351 : vector<2x64xf32>
    %353 = math.exp %352 : vector<2x64xf32>
    %cst_61 = arith.constant 1.000000e+00 : f32
    %354 = vector.broadcast %cst_61 : f32 to vector<2x64xf32>
    %355 = arith.addf %354, %353 : vector<2x64xf32>
    %356 = arith.divf %354, %355 : vector<2x64xf32>
    %357 = vector.extract_strided_slice %342 {offsets = [0, 128], sizes = [2, 64], strides = [1, 1]} : vector<2x192xf32> to vector<2x64xf32>
    %358 = arith.mulf %349, %357 : vector<2x64xf32>
    %359 = arith.addf %339, %358 : vector<2x64xf32>
    %360 = math.tanh %359 : vector<2x64xf32>
    %cst_62 = arith.constant 1.000000e+00 : f32
    %361 = vector.broadcast %cst_62 : f32 to vector<2x64xf32>
    %362 = arith.subf %361, %356 : vector<2x64xf32>
    %363 = arith.mulf %362, %360 : vector<2x64xf32>
    %364 = arith.mulf %356, %307 : vector<2x64xf32>
    %365 = arith.addf %363, %364 : vector<2x64xf32>
    %366 = vector.extract_strided_slice %6 {offsets = [12, 0], sizes = [2, 64], strides = [1, 1]} : vector<16x64xf32> to vector<2x64xf32>
    %367 = vector.extract_strided_slice %7 {offsets = [12, 0], sizes = [2, 64], strides = [1, 1]} : vector<16x64xf32> to vector<2x64xf32>
    %368 = vector.extract_strided_slice %8 {offsets = [12, 0], sizes = [2, 64], strides = [1, 1]} : vector<16x64xf32> to vector<2x64xf32>
    %cst_63 = arith.constant dense<0.000000e+00> : vector<2x192xf32>
    %369 = tpu.matmul %336, %12, %cst_63 {dimension_numbers = #tpu.dot_dimension_numbers<[1], [0], [0], [1], [0, 0, 1, 1], [], []>} : vector<2x64xf32>, vector<64x192xf32>, vector<2x192xf32> -> vector<2x192xf32>
    %370 = vector.broadcast %14 : vector<1x192xf32> to vector<2x192xf32>
    %371 = arith.addf %369, %370 : vector<2x192xf32>
    %372 = vector.extract_strided_slice %371 {offsets = [0, 0], sizes = [2, 64], strides = [1, 1]} : vector<2x192xf32> to vector<2x64xf32>
    %373 = arith.addf %366, %372 : vector<2x64xf32>
    %374 = arith.negf %373 : vector<2x64xf32>
    %375 = math.exp %374 : vector<2x64xf32>
    %cst_64 = arith.constant 1.000000e+00 : f32
    %376 = vector.broadcast %cst_64 : f32 to vector<2x64xf32>
    %377 = arith.addf %376, %375 : vector<2x64xf32>
    %378 = arith.divf %376, %377 : vector<2x64xf32>
    %379 = vector.extract_strided_slice %371 {offsets = [0, 64], sizes = [2, 64], strides = [1, 1]} : vector<2x192xf32> to vector<2x64xf32>
    %380 = arith.addf %367, %379 : vector<2x64xf32>
    %381 = arith.negf %380 : vector<2x64xf32>
    %382 = math.exp %381 : vector<2x64xf32>
    %cst_65 = arith.constant 1.000000e+00 : f32
    %383 = vector.broadcast %cst_65 : f32 to vector<2x64xf32>
    %384 = arith.addf %383, %382 : vector<2x64xf32>
    %385 = arith.divf %383, %384 : vector<2x64xf32>
    %386 = vector.extract_strided_slice %371 {offsets = [0, 128], sizes = [2, 64], strides = [1, 1]} : vector<2x192xf32> to vector<2x64xf32>
    %387 = arith.mulf %378, %386 : vector<2x64xf32>
    %388 = arith.addf %368, %387 : vector<2x64xf32>
    %389 = math.tanh %388 : vector<2x64xf32>
    %cst_66 = arith.constant 1.000000e+00 : f32
    %390 = vector.broadcast %cst_66 : f32 to vector<2x64xf32>
    %391 = arith.subf %390, %385 : vector<2x64xf32>
    %392 = arith.mulf %391, %389 : vector<2x64xf32>
    %393 = arith.mulf %385, %336 : vector<2x64xf32>
    %394 = arith.addf %392, %393 : vector<2x64xf32>
    %395 = vector.extract_strided_slice %9 {offsets = [2, 0], sizes = [2, 64], strides = [1, 1]} : vector<16x64xf32> to vector<2x64xf32>
    %396 = vector.extract_strided_slice %10 {offsets = [2, 0], sizes = [2, 64], strides = [1, 1]} : vector<16x64xf32> to vector<2x64xf32>
    %397 = vector.extract_strided_slice %11 {offsets = [2, 0], sizes = [2, 64], strides = [1, 1]} : vector<16x64xf32> to vector<2x64xf32>
    %cst_67 = arith.constant dense<0.000000e+00> : vector<2x192xf32>
    %398 = tpu.matmul %365, %13, %cst_67 {dimension_numbers = #tpu.dot_dimension_numbers<[1], [0], [0], [1], [0, 0, 1, 1], [], []>} : vector<2x64xf32>, vector<64x192xf32>, vector<2x192xf32> -> vector<2x192xf32>
    %399 = vector.broadcast %15 : vector<1x192xf32> to vector<2x192xf32>
    %400 = arith.addf %398, %399 : vector<2x192xf32>
    %401 = vector.extract_strided_slice %400 {offsets = [0, 0], sizes = [2, 64], strides = [1, 1]} : vector<2x192xf32> to vector<2x64xf32>
    %402 = arith.addf %395, %401 : vector<2x64xf32>
    %403 = arith.negf %402 : vector<2x64xf32>
    %404 = math.exp %403 : vector<2x64xf32>
    %cst_68 = arith.constant 1.000000e+00 : f32
    %405 = vector.broadcast %cst_68 : f32 to vector<2x64xf32>
    %406 = arith.addf %405, %404 : vector<2x64xf32>
    %407 = arith.divf %405, %406 : vector<2x64xf32>
    %408 = vector.extract_strided_slice %400 {offsets = [0, 64], sizes = [2, 64], strides = [1, 1]} : vector<2x192xf32> to vector<2x64xf32>
    %409 = arith.addf %396, %408 : vector<2x64xf32>
    %410 = arith.negf %409 : vector<2x64xf32>
    %411 = math.exp %410 : vector<2x64xf32>
    %cst_69 = arith.constant 1.000000e+00 : f32
    %412 = vector.broadcast %cst_69 : f32 to vector<2x64xf32>
    %413 = arith.addf %412, %411 : vector<2x64xf32>
    %414 = arith.divf %412, %413 : vector<2x64xf32>
    %415 = vector.extract_strided_slice %400 {offsets = [0, 128], sizes = [2, 64], strides = [1, 1]} : vector<2x192xf32> to vector<2x64xf32>
    %416 = arith.mulf %407, %415 : vector<2x64xf32>
    %417 = arith.addf %397, %416 : vector<2x64xf32>
    %418 = math.tanh %417 : vector<2x64xf32>
    %cst_70 = arith.constant 1.000000e+00 : f32
    %419 = vector.broadcast %cst_70 : f32 to vector<2x64xf32>
    %420 = arith.subf %419, %414 : vector<2x64xf32>
    %421 = arith.mulf %420, %418 : vector<2x64xf32>
    %422 = arith.mulf %414, %365 : vector<2x64xf32>
    %423 = arith.addf %421, %422 : vector<2x64xf32>
    %424 = vector.extract_strided_slice %6 {offsets = [14, 0], sizes = [2, 64], strides = [1, 1]} : vector<16x64xf32> to vector<2x64xf32>
    %425 = vector.extract_strided_slice %7 {offsets = [14, 0], sizes = [2, 64], strides = [1, 1]} : vector<16x64xf32> to vector<2x64xf32>
    %426 = vector.extract_strided_slice %8 {offsets = [14, 0], sizes = [2, 64], strides = [1, 1]} : vector<16x64xf32> to vector<2x64xf32>
    %cst_71 = arith.constant dense<0.000000e+00> : vector<2x192xf32>
    %427 = tpu.matmul %394, %12, %cst_71 {dimension_numbers = #tpu.dot_dimension_numbers<[1], [0], [0], [1], [0, 0, 1, 1], [], []>} : vector<2x64xf32>, vector<64x192xf32>, vector<2x192xf32> -> vector<2x192xf32>
    %428 = vector.broadcast %14 : vector<1x192xf32> to vector<2x192xf32>
    %429 = arith.addf %427, %428 : vector<2x192xf32>
    %430 = vector.extract_strided_slice %429 {offsets = [0, 0], sizes = [2, 64], strides = [1, 1]} : vector<2x192xf32> to vector<2x64xf32>
    %431 = arith.addf %424, %430 : vector<2x64xf32>
    %432 = arith.negf %431 : vector<2x64xf32>
    %433 = math.exp %432 : vector<2x64xf32>
    %cst_72 = arith.constant 1.000000e+00 : f32
    %434 = vector.broadcast %cst_72 : f32 to vector<2x64xf32>
    %435 = arith.addf %434, %433 : vector<2x64xf32>
    %436 = arith.divf %434, %435 : vector<2x64xf32>
    %437 = vector.extract_strided_slice %429 {offsets = [0, 64], sizes = [2, 64], strides = [1, 1]} : vector<2x192xf32> to vector<2x64xf32>
    %438 = arith.addf %425, %437 : vector<2x64xf32>
    %439 = arith.negf %438 : vector<2x64xf32>
    %440 = math.exp %439 : vector<2x64xf32>
    %cst_73 = arith.constant 1.000000e+00 : f32
    %441 = vector.broadcast %cst_73 : f32 to vector<2x64xf32>
    %442 = arith.addf %441, %440 : vector<2x64xf32>
    %443 = arith.divf %441, %442 : vector<2x64xf32>
    %444 = vector.extract_strided_slice %429 {offsets = [0, 128], sizes = [2, 64], strides = [1, 1]} : vector<2x192xf32> to vector<2x64xf32>
    %445 = arith.mulf %436, %444 : vector<2x64xf32>
    %446 = arith.addf %426, %445 : vector<2x64xf32>
    %447 = math.tanh %446 : vector<2x64xf32>
    %cst_74 = arith.constant 1.000000e+00 : f32
    %448 = vector.broadcast %cst_74 : f32 to vector<2x64xf32>
    %449 = arith.subf %448, %443 : vector<2x64xf32>
    %450 = arith.mulf %449, %447 : vector<2x64xf32>
    %451 = arith.mulf %443, %394 : vector<2x64xf32>
    %452 = arith.addf %450, %451 : vector<2x64xf32>
    %453 = vector.extract_strided_slice %9 {offsets = [0, 0], sizes = [2, 64], strides = [1, 1]} : vector<16x64xf32> to vector<2x64xf32>
    %454 = vector.extract_strided_slice %10 {offsets = [0, 0], sizes = [2, 64], strides = [1, 1]} : vector<16x64xf32> to vector<2x64xf32>
    %455 = vector.extract_strided_slice %11 {offsets = [0, 0], sizes = [2, 64], strides = [1, 1]} : vector<16x64xf32> to vector<2x64xf32>
    %cst_75 = arith.constant dense<0.000000e+00> : vector<2x192xf32>
    %456 = tpu.matmul %423, %13, %cst_75 {dimension_numbers = #tpu.dot_dimension_numbers<[1], [0], [0], [1], [0, 0, 1, 1], [], []>} : vector<2x64xf32>, vector<64x192xf32>, vector<2x192xf32> -> vector<2x192xf32>
    %457 = vector.broadcast %15 : vector<1x192xf32> to vector<2x192xf32>
    %458 = arith.addf %456, %457 : vector<2x192xf32>
    %459 = vector.extract_strided_slice %458 {offsets = [0, 0], sizes = [2, 64], strides = [1, 1]} : vector<2x192xf32> to vector<2x64xf32>
    %460 = arith.addf %453, %459 : vector<2x64xf32>
    %461 = arith.negf %460 : vector<2x64xf32>
    %462 = math.exp %461 : vector<2x64xf32>
    %cst_76 = arith.constant 1.000000e+00 : f32
    %463 = vector.broadcast %cst_76 : f32 to vector<2x64xf32>
    %464 = arith.addf %463, %462 : vector<2x64xf32>
    %465 = arith.divf %463, %464 : vector<2x64xf32>
    %466 = vector.extract_strided_slice %458 {offsets = [0, 64], sizes = [2, 64], strides = [1, 1]} : vector<2x192xf32> to vector<2x64xf32>
    %467 = arith.addf %454, %466 : vector<2x64xf32>
    %468 = arith.negf %467 : vector<2x64xf32>
    %469 = math.exp %468 : vector<2x64xf32>
    %cst_77 = arith.constant 1.000000e+00 : f32
    %470 = vector.broadcast %cst_77 : f32 to vector<2x64xf32>
    %471 = arith.addf %470, %469 : vector<2x64xf32>
    %472 = arith.divf %470, %471 : vector<2x64xf32>
    %473 = vector.extract_strided_slice %458 {offsets = [0, 128], sizes = [2, 64], strides = [1, 1]} : vector<2x192xf32> to vector<2x64xf32>
    %474 = arith.mulf %465, %473 : vector<2x64xf32>
    %475 = arith.addf %455, %474 : vector<2x64xf32>
    %476 = math.tanh %475 : vector<2x64xf32>
    %cst_78 = arith.constant 1.000000e+00 : f32
    %477 = vector.broadcast %cst_78 : f32 to vector<2x64xf32>
    %478 = arith.subf %477, %472 : vector<2x64xf32>
    %479 = arith.mulf %478, %476 : vector<2x64xf32>
    %480 = arith.mulf %472, %423 : vector<2x64xf32>
    %481 = arith.addf %479, %480 : vector<2x64xf32>
    %482 = tpu.concatenate %46, %481 in 1 : vector<2x64xf32>, vector<2x64xf32> -> vector<2x128xf32>
    %483 = tpu.concatenate %104, %423 in 1 : vector<2x64xf32>, vector<2x64xf32> -> vector<2x128xf32>
    %484 = tpu.concatenate %162, %365 in 1 : vector<2x64xf32>, vector<2x64xf32> -> vector<2x128xf32>
    %485 = tpu.concatenate %220, %307 in 1 : vector<2x64xf32>, vector<2x64xf32> -> vector<2x128xf32>
    %486 = tpu.concatenate %278, %249 in 1 : vector<2x64xf32>, vector<2x64xf32> -> vector<2x128xf32>
    %487 = tpu.concatenate %336, %191 in 1 : vector<2x64xf32>, vector<2x64xf32> -> vector<2x128xf32>
    %488 = tpu.concatenate %394, %133 in 1 : vector<2x64xf32>, vector<2x64xf32> -> vector<2x128xf32>
    %489 = tpu.concatenate %452, %75 in 1 : vector<2x64xf32>, vector<2x64xf32> -> vector<2x128xf32>
    %490 = tpu.concatenate %482, %483, %484, %485, %486, %487, %488, %489 in 0 : vector<2x128xf32>, vector<2x128xf32>, vector<2x128xf32>, vector<2x128xf32>, vector<2x128xf32>, vector<2x128xf32>, vector<2x128xf32>, vector<2x128xf32> -> vector<16x128xf32>
    %cst_79 = arith.constant 0.000000e+00 : f32
    %491 = vector.broadcast %cst_79 : f32 to vector<16x128xf32>
    %492 = arith.maximumf %490, %491 : vector<16x128xf32>
    %c0_80 = arith.constant 0 : index
    %c0_81 = arith.constant 0 : index
    %493 = vector.load %arg7[%c0_80, %c0_81] : memref<128x32xf32, #tpu.memory_space<vmem>>, vector<128x32xf32>
    %cst_82 = arith.constant dense<0.000000e+00> : vector<16x32xf32>
    %494 = tpu.matmul %492, %493, %cst_82 {dimension_numbers = #tpu.dot_dimension_numbers<[1], [0], [0], [1], [0, 0, 1, 1], [], []>} : vector<16x128xf32>, vector<128x32xf32>, vector<16x32xf32> -> vector<16x32xf32>
    %c0_83 = arith.constant 0 : index
    %c0_84 = arith.constant 0 : index
    %495 = vector.load %arg8[%c0_83, %c0_84] : memref<1x32xf32, #tpu.memory_space<vmem>>, vector<1x32xf32>
    %496 = vector.broadcast %495 : vector<1x32xf32> to vector<16x32xf32>
    %497 = arith.addf %494, %496 : vector<16x32xf32>
    %498 = arith.addf %0, %497 : vector<16x32xf32>
    %cst_85 = arith.constant dense<0.000000e+00> : vector<16xf32>
    %499 = vector.multi_reduction <add>, %498, %cst_85 [1] : vector<16x32xf32> to vector<16xf32>
    %500 = vector.shape_cast %499 : vector<16xf32> to vector<16x1xf32>
    %cst_86 = arith.constant 3.200000e+01 : f32
    %501 = vector.broadcast %cst_86 : f32 to vector<16x1xf32>
    %502 = arith.divf %500, %501 : vector<16x1xf32>
    %503 = vector.broadcast %502 : vector<16x1xf32> to vector<16x32xf32>
    %504 = arith.subf %498, %503 : vector<16x32xf32>
    %505 = arith.mulf %504, %504 : vector<16x32xf32>
    %cst_87 = arith.constant dense<0.000000e+00> : vector<16xf32>
    %506 = vector.multi_reduction <add>, %505, %cst_87 [1] : vector<16x32xf32> to vector<16xf32>
    %507 = vector.shape_cast %506 : vector<16xf32> to vector<16x1xf32>
    %cst_88 = arith.constant 3.200000e+01 : f32
    %508 = vector.broadcast %cst_88 : f32 to vector<16x1xf32>
    %509 = arith.divf %507, %508 : vector<16x1xf32>
    %cst_89 = arith.constant 9.99999974E-6 : f32
    %510 = vector.broadcast %cst_89 : f32 to vector<16x1xf32>
    %511 = arith.addf %509, %510 : vector<16x1xf32>
    %512 = math.rsqrt %511 : vector<16x1xf32>
    %513 = vector.broadcast %512 : vector<16x1xf32> to vector<16x32xf32>
    %514 = arith.mulf %504, %513 : vector<16x32xf32>
    %c0_90 = arith.constant 0 : index
    %c0_91 = arith.constant 0 : index
    %515 = vector.load %arg9[%c0_90, %c0_91] : memref<1x32xf32, #tpu.memory_space<vmem>>, vector<1x32xf32>
    %516 = vector.broadcast %515 : vector<1x32xf32> to vector<16x32xf32>
    %517 = arith.mulf %514, %516 : vector<16x32xf32>
    %c0_92 = arith.constant 0 : index
    %c0_93 = arith.constant 0 : index
    %518 = vector.load %arg10[%c0_92, %c0_93] : memref<1x32xf32, #tpu.memory_space<vmem>>, vector<1x32xf32>
    %519 = vector.broadcast %518 : vector<1x32xf32> to vector<16x32xf32>
    %520 = arith.addf %517, %519 : vector<16x32xf32>
    %c0_94 = arith.constant 0 : index
    %c0_95 = arith.constant 0 : index
    %521 = vector.load %arg11[%c0_94, %c0_95] : memref<16x32xf32, #tpu.memory_space<vmem>>, vector<16x32xf32>
    tpu.vector_store %arg11[%c0_94, %c0_95], %520 {strides = array<i32>} : memref<16x32xf32, #tpu.memory_space<vmem>>, vector<16x32xf32>,
    return
  }
}

</mosaic_0001>

<llo_original>
// kernel: transformer_encoder_layer_forward.2
$region0: #{transformer_encoder_layer_forward.2}
  #allocation0 [shape = 'u32[]', space=smem, size = 0x4, offset = 0x4, fixed_abs, tag = 'smem constant byte address 0x4 - core index']
  #allocation1 [shape = 'u32[72,128]{1,0:T(1,128)}', space=vmem, size = 0x9000, scoped, tag = 'internal scratch']
  %s0 = inlined_call_operand.vmem [shape: f32[16,32], index: 0, kind: input, shape index: {}]
  %s1 = inlined_call_operand.vmem [shape: f32[32,96], index: 1, kind: input, shape index: {}]
  %s2 = inlined_call_operand.vmem [shape: f32[1,96], index: 2, kind: input, shape index: {}]
  %s3 = inlined_call_operand.hbm [shape: f32[32,32], index: 3, kind: input, shape index: {}]
  %s4 = inlined_call_operand.vmem [shape: f32[1,32], index: 4, kind: input, shape index: {}]
  %s5 = inlined_call_operand.vmem [shape: f32[1,32], index: 5, kind: input, shape index: {}]
  %s6 = inlined_call_operand.vmem [shape: f32[1,32], index: 6, kind: input, shape index: {}]
  %s7 = inlined_call_operand.vmem [shape: f32[16,32], index: 7, kind: output, shape index: {}]
  %s8 = sld [smem:[#allocation0]]
  $region42: #{transformer_encoder_layer_forward.2} parent=0
    _
  %s10 = ssub.s32 1, %s8
  %s11 = scalar_select 0, %s10, %s8
  $region1: #{transformer_encoder_layer_forward.2} parent=0
    #allocation2 [shape = 'u8[16384]{0}', space=vmem, size = 0x4000, scoped, tag = 'input window, operand 3, single buffered']
    #allocation3 [shape = 's32[1]{0}', space=sflag, size = 0x4, scoped, tag = 'scoped memory for transformer_encoder_layer_forward.2']
    %12 = vsyncpa [#allocation3], 0
    // Predicated region
    $region2: #{transformer_encoder_layer_forward.2} parent=1 // pred_check
      _
    $region3: #{transformer_encoder_layer_forward.2} parent=1 // pred_check_branch
      %14 = sbr.rel (0) target = $region5
    $region4: #{transformer_encoder_layer_forward.2} parent=1 // pred_region
      _
    $region5: #{transformer_encoder_layer_forward.2} parent=1 // pred_fallthru
      _
    // Predicated region
    $region6: #{transformer_encoder_layer_forward.2} parent=1 // pred_check
      _
    $region7: #{transformer_encoder_layer_forward.2} parent=1 // pred_check_branch
      %16 = sbr.rel (0) target = $region9
    $region8: #{transformer_encoder_layer_forward.2} parent=1 // pred_region
      _
    $region9: #{transformer_encoder_layer_forward.2} parent=1 // pred_fallthru
      _
    // Predicated region
    $region10: #{transformer_encoder_layer_forward.2} parent=1 // pred_check
      _
    $region11: #{transformer_encoder_layer_forward.2} parent=1 // pred_check_branch
      %18 = sbr.rel (0) target = $region13
    $region12: #{transformer_encoder_layer_forward.2} parent=1 // pred_region
      _
    $region13: #{transformer_encoder_layer_forward.2} parent=1 // pred_fallthru
      _
    // Predicated region
    $region14: #{transformer_encoder_layer_forward.2} parent=1 // pred_check
      _
    $region15: #{transformer_encoder_layer_forward.2} parent=1 // pred_check_branch
      %20 = sbr.rel (0) target = $region17
    $region16: #{transformer_encoder_layer_forward.2} parent=1 // pred_region
      %22 = vsyncadd [#allocation3], 0
      %s23 = sshll.u32 %s3, 4
      %s24 = int_to_ptr.hbm [resolvable:$true] %s23
      %s25 = sshll.u32 [#allocation2], 4
      %s26 = int_to_ptr.vmem [resolvable:$true] %s25
      %31 = dma.hbm_to_vmem [thread:$0]  %s24, 512, %s26, [#allocation3], 128, 128, 8
    $region17: #{transformer_encoder_layer_forward.2} parent=1 // pred_fallthru
      _
    // Predicated region
    $region18: #{transformer_encoder_layer_forward.2} parent=1 // pred_check
      _
    $region19: #{transformer_encoder_layer_forward.2} parent=1 // pred_check_branch
      %33 = sbr.rel (0) target = $region21
    $region20: #{transformer_encoder_layer_forward.2} parent=1 // pred_region
      _
    $region21: #{transformer_encoder_layer_forward.2} parent=1 // pred_fallthru
      _
    // Predicated region
    $region22: #{transformer_encoder_layer_forward.2} parent=1 // pred_check
      _
    $region23: #{transformer_encoder_layer_forward.2} parent=1 // pred_check_branch
      %35 = sbr.rel (0) target = $region25
    $region24: #{transformer_encoder_layer_forward.2} parent=1 // pred_region
      _
    $region25: #{transformer_encoder_layer_forward.2} parent=1 // pred_fallthru
      _
    // Predicated region
    $region26: #{transformer_encoder_layer_forward.2} parent=1 // pred_check
      _
    $region27: #{transformer_encoder_layer_forward.2} parent=1 // pred_check_branch
      %37 = sbr.rel (0) target = $region29
    $region28: #{transformer_encoder_layer_forward.2} parent=1 // pred_region
      _
    $region29: #{transformer_encoder_layer_forward.2} parent=1 // pred_fallthru
      _
    // Predicated region
    $region30: #{transformer_encoder_layer_forward.2} parent=1 // pred_check
      _
    $region31: #{transformer_encoder_layer_forward.2} parent=1 // pred_check_branch
      %39 = sbr.rel (0) target = $region33
    $region32: #{transformer_encoder_layer_forward.2} parent=1 // pred_region
      %41 = dma.done [#allocation3], 512
    $region33: #{transformer_encoder_layer_forward.2} parent=1 // pred_fallthru
      _
    %v42 = vld [vmem:[%s0] sm:$0xff]
    %v43 = vld [vmem:[%s0 + $0x8] sm:$0xff]
    %v44 = vld [vmem:[%s1] sm:$0xff]
    %v45 = vld [vmem:[%s1 + $0x8] sm:$0xff]
    %v46 = vld [vmem:[%s1 + $0x10] sm:$0xff]
    %v47 = vld [vmem:[%s1 + $0x18] sm:$0xff]
    %v48 = vld [vmem:[%s2] sm:$0x1]
    %v50 = vperm.slane %v48, 0
    %vm52 = vcmask 261120
    %v54 = vsel %vm52, %v42, 0
    %v57 = vsel %vm52, %v43, 0
    %59 = vmatpush.msra.mxu0 0.0
    %60 = vmatpush.msra.mxu0 0.0
    %61 = vmatpush.msra.mxu0 0.0
    %62 = vmatpush.msra.mxu0 0.0
    %63 = vmatpush.msra.mxu0 0.0
    %64 = vmatpush.msra.mxu0 0.0
    %65 = vmatpush.msra.mxu0 0.0
    %66 = vmatpush.msra.mxu0 0.0
    %67 = vmatpush.msra.mxu0 0.0
    %68 = vmatpush.msra.mxu0 0.0
    %69 = vmatpush.msra.mxu0 0.0
    %70 = vmatpush.msra.mxu0 0.0
    %71 = vmatpush.msra.mxu0 %v47
    %72 = vmatpush.msra.mxu0 %v46
    %73 = vmatpush.msra.mxu0 %v45
    %74 = vmatpush.msra.mxu0 %v44
    %75 = vmatmul.f32.gmra.mxu0 %v54
    %v76 = vpop.f32.mrf.mxu0
    %v77 = vadd.f32 %v50, %v76
    %78 = vmatmul.f32.gmra.mxu0 %v57
    %v79 = vpop.f32.mrf.mxu0
    %v80 = vadd.f32 %v50, %v79
    %81 = vdwg.mxu0
    %83 = vrot.lane.b32.xlu0 %v77, 96
    %v84 = vpop.permute.xlu0 %83
    %vm85 = vcmask 64512
    %v86 = vsel %vm85, %v77, 0
    %v88 = vsel %vm85, %v84, 0
    %90 = vmatpush.xpose.msra.mxu0 0.0
    %91 = vmatpush.xpose.msra.mxu0 0.0
    %92 = vmatpush.xpose.msra.mxu0 0.0
    %93 = vmatpush.xpose.msra.mxu0 0.0
    %94 = vmatpush.xpose.msra.mxu0 0.0
    %95 = vmatpush.xpose.msra.mxu0 0.0
    %96 = vmatpush.xpose.msra.mxu0 0.0
    %97 = vmatpush.xpose.msra.mxu0 0.0
    %98 = vmatpush.xpose.msra.mxu0 0.0
    %99 = vmatpush.xpose.msra.mxu0 0.0
    %100 = vmatpush.xpose.msra.mxu0 0.0
    %101 = vmatpush.xpose.msra.mxu0 0.0
    %102 = vmatpush.xpose.msra.mxu0 0.0
    %103 = vmatpush.xpose.msra.mxu0 0.0
    %104 = vmatpush.xpose.msra.mxu0 0.0
    %105 = vmatpush.xpose.msra.mxu0 %v88
    %106 = vmatmul.f32.gmra.mxu0 %v86
    %v107 = vpop.f32.mrf.mxu0
    %v108 = vadd.f32 0.0, %v107
    %109 = vdwg.mxu0
    %v110 = vsel %vm85, %v108, -inf
    %111 = vmax.xlane.f32.xlu0 %v110
    %v112 = vpop.xlane.xlu0 %111
    %v113 = vsub.f32 %v108, %v112
    %v114 = vmul.f32 %v113, 1.442695
    %v115 = vpow.pop %v114
    %v116 = vsel %vm85, %v115, 0.0
    %117 = vadd.xlane.f32.xlu0 %v116
    %v118 = vpop.xlane.xlu0 %117
    %v119 = vrcp.pop %v118
    %v120 = vmul.f32 %v118, %v119
    %v121 = vsub.f32 1.0, %v120
    %v122 = vmul.f32 %v119, %v121
    %v123 = vadd.f32 %v119, %v122
    %vm124 = vweird.f32 %v118
    %vm125 = vweird.f32 %v119
    %vm126 = vmor %vm124, %vm125
    %v127 = vsel %vm126, %v119, %v123
    %v128 = vand.u32 2147483647, %v118
    %vm129 = vcmp.eq.f32.partialorder %v128, 8.507059e+37
    %v130 = vand.u32 %v118, 2147483648
    %v131 = vor.u32 1.1754944e-38, %v130
    %v132 = vsel %vm129, %v131, %v127
    %v133 = vmul.f32 %v115, %v132
    %134 = vrot.lane.b32.xlu0 %v77, 64
    %v135 = vpop.permute.xlu0 %134
    %v138 = vsel %vm85, %v133, 0
    %140 = vmatpush.msra.mxu0 0.0
    %141 = vmatpush.msra.mxu0 0.0
    %142 = vmatpush.msra.mxu0 0.0
    %143 = vmatpush.msra.mxu0 0.0
    %144 = vmatpush.msra.mxu0 0.0
    %145 = vmatpush.msra.mxu0 0.0
    %146 = vmatpush.msra.mxu0 0.0
    %147 = vmatpush.msra.mxu0 0.0
    %148 = vmatpush.msra.mxu0 0.0
    %149 = vmatpush.msra.mxu0 0.0
    %150 = vmatpush.msra.mxu0 0.0
    %151 = vmatpush.msra.mxu0 0.0
    %152 = vmatpush.msra.mxu0 0.0
    %153 = vmatpush.msra.mxu0 0.0
    %154 = vmatpush.msra.mxu0 0.0
    %155 = vmatpush.msra.mxu0 %v135
    %156 = vmatmul.f32.gmra.mxu0 %v138
    %v157 = vpop.f32.mrf.mxu0
    %v158 = vadd.f32 0.0, %v157
    %159 = vdwg.mxu0
    %160 = vrot.lane.b32.xlu0 %v77, 120
    %v161 = vpop.permute.xlu0 %160
    %162 = vrot.lane.b32.xlu0 %v77, 88
    %v163 = vpop.permute.xlu0 %162
    %v164 = vsel %vm85, %v161, 0
    %v166 = vsel %vm85, %v163, 0
    %168 = vmatpush.xpose.msra.mxu0 0.0
    %169 = vmatpush.xpose.msra.mxu0 0.0
    %170 = vmatpush.xpose.msra.mxu0 0.0
    %171 = vmatpush.xpose.msra.mxu0 0.0
    %172 = vmatpush.xpose.msra.mxu0 0.0
    %173 = vmatpush.xpose.msra.mxu0 0.0
    %174 = vmatpush.xpose.msra.mxu0 0.0
    %175 = vmatpush.xpose.msra.mxu0 0.0
    %176 = vmatpush.xpose.msra.mxu0 0.0
    %177 = vmatpush.xpose.msra.mxu0 0.0
    %178 = vmatpush.xpose.msra.mxu0 0.0
    %179 = vmatpush.xpose.msra.mxu0 0.0
    %180 = vmatpush.xpose.msra.mxu0 0.0
    %181 = vmatpush.xpose.msra.mxu0 0.0
    %182 = vmatpush.xpose.msra.mxu0 0.0
    %183 = vmatpush.xpose.msra.mxu0 %v166
    %184 = vmatmul.f32.gmra.mxu0 %v164
    %v185 = vpop.f32.mrf.mxu0
    %v186 = vadd.f32 0.0, %v185
    %187 = vdwg.mxu0
    %v188 = vsel %vm85, %v186, -inf
    %189 = vmax.xlane.f32.xlu0 %v188
    %v190 = vpop.xlane.xlu0 %189
    %v191 = vsub.f32 %v186, %v190
    %v192 = vmul.f32 %v191, 1.442695
    %v193 = vpow.pop %v192
    %v194 = vsel %vm85, %v193, 0.0
    %195 = vadd.xlane.f32.xlu0 %v194
    %v196 = vpop.xlane.xlu0 %195
    %v197 = vrcp.pop %v196
    %v198 = vmul.f32 %v196, %v197
    %v199 = vsub.f32 1.0, %v198
    %v200 = vmul.f32 %v197, %v199
    %v201 = vadd.f32 %v197, %v200
    %vm202 = vweird.f32 %v196
    %vm203 = vweird.f32 %v197
    %vm204 = vmor %vm202, %vm203
    %v205 = vsel %vm204, %v197, %v201
    %v206 = vand.u32 2147483647, %v196
    %vm207 = vcmp.eq.f32.partialorder %v206, 8.507059e+37
    %v208 = vand.u32 %v196, 2147483648
    %v209 = vor.u32 1.1754944e-38, %v208
    %v210 = vsel %vm207, %v209, %v205
    %v211 = vmul.f32 %v193, %v210
    %212 = vrot.lane.b32.xlu0 %v77, 56
    %v213 = vpop.permute.xlu0 %212
    %v216 = vsel %vm85, %v211, 0
    %218 = vmatpush.msra.mxu0 0.0
    %219 = vmatpush.msra.mxu0 0.0
    %220 = vmatpush.msra.mxu0 0.0
    %221 = vmatpush.msra.mxu0 0.0
    %222 = vmatpush.msra.mxu0 0.0
    %223 = vmatpush.msra.mxu0 0.0
    %224 = vmatpush.msra.mxu0 0.0
    %225 = vmatpush.msra.mxu0 0.0
    %226 = vmatpush.msra.mxu0 0.0
    %227 = vmatpush.msra.mxu0 0.0
    %228 = vmatpush.msra.mxu0 0.0
    %229 = vmatpush.msra.mxu0 0.0
    %230 = vmatpush.msra.mxu0 0.0
    %231 = vmatpush.msra.mxu0 0.0
    %232 = vmatpush.msra.mxu0 0.0
    %233 = vmatpush.msra.mxu0 %v213
    %234 = vmatmul.f32.gmra.mxu0 %v216
    %v235 = vpop.f32.mrf.mxu0
    %v236 = vadd.f32 0.0, %v235
    %237 = vdwg.mxu0
    %238 = vrot.lane.b32.xlu0 %v77, 112
    %v239 = vpop.permute.xlu0 %238
    %240 = vrot.lane.b32.xlu0 %v77, 80
    %v241 = vpop.permute.xlu0 %240
    %v242 = vsel %vm85, %v239, 0
    %v244 = vsel %vm85, %v241, 0
    %246 = vmatpush.xpose.msra.mxu0 0.0
    %247 = vmatpush.xpose.msra.mxu0 0.0
    %248 = vmatpush.xpose.msra.mxu0 0.0
    %249 = vmatpush.xpose.msra.mxu0 0.0
    %250 = vmatpush.xpose.msra.mxu0 0.0
    %251 = vmatpush.xpose.msra.mxu0 0.0
    %252 = vmatpush.xpose.msra.mxu0 0.0
    %253 = vmatpush.xpose.msra.mxu0 0.0
    %254 = vmatpush.xpose.msra.mxu0 0.0
    %255 = vmatpush.xpose.msra.mxu0 0.0
    %256 = vmatpush.xpose.msra.mxu0 0.0
    %257 = vmatpush.xpose.msra.mxu0 0.0
    %258 = vmatpush.xpose.msra.mxu0 0.0
    %259 = vmatpush.xpose.msra.mxu0 0.0
    %260 = vmatpush.xpose.msra.mxu0 0.0
    %261 = vmatpush.xpose.msra.mxu0 %v244
    %262 = vmatmul.f32.gmra.mxu0 %v242
    %v263 = vpop.f32.mrf.mxu0
    %v264 = vadd.f32 0.0, %v263
    %265 = vdwg.mxu0
    %v266 = vsel %vm85, %v264, -inf
    %267 = vmax.xlane.f32.xlu0 %v266
    %v268 = vpop.xlane.xlu0 %267
    %v269 = vsub.f32 %v264, %v268
    %v270 = vmul.f32 %v269, 1.442695
    %v271 = vpow.pop %v270
    %v272 = vsel %vm85, %v271, 0.0
    %273 = vadd.xlane.f32.xlu0 %v272
    %v274 = vpop.xlane.xlu0 %273
    %v275 = vrcp.pop %v274
    %v276 = vmul.f32 %v274, %v275
    %v277 = vsub.f32 1.0, %v276
    %v278 = vmul.f32 %v275, %v277
    %v279 = vadd.f32 %v275, %v278
    %vm280 = vweird.f32 %v274
    %vm281 = vweird.f32 %v275
    %vm282 = vmor %vm280, %vm281
    %v283 = vsel %vm282, %v275, %v279
    %v284 = vand.u32 2147483647, %v274
    %vm285 = vcmp.eq.f32.partialorder %v284, 8.507059e+37
    %v286 = vand.u32 %v274, 2147483648
    %v287 = vor.u32 1.1754944e-38, %v286
    %v288 = vsel %vm285, %v287, %v283
    %v289 = vmul.f32 %v271, %v288
    %290 = vrot.lane.b32.xlu0 %v77, 48
    %v291 = vpop.permute.xlu0 %290
    %v294 = vsel %vm85, %v289, 0
    %296 = vmatpush.msra.mxu0 0.0
    %297 = vmatpush.msra.mxu0 0.0
    %298 = vmatpush.msra.mxu0 0.0
    %299 = vmatpush.msra.mxu0 0.0
    %300 = vmatpush.msra.mxu0 0.0
    %301 = vmatpush.msra.mxu0 0.0
    %302 = vmatpush.msra.mxu0 0.0
    %303 = vmatpush.msra.mxu0 0.0
    %304 = vmatpush.msra.mxu0 0.0
    %305 = vmatpush.msra.mxu0 0.0
    %306 = vmatpush.msra.mxu0 0.0
    %307 = vmatpush.msra.mxu0 0.0
    %308 = vmatpush.msra.mxu0 0.0
    %309 = vmatpush.msra.mxu0 0.0
    %310 = vmatpush.msra.mxu0 0.0
    %311 = vmatpush.msra.mxu0 %v291
    %312 = vmatmul.f32.gmra.mxu0 %v294
    %v313 = vpop.f32.mrf.mxu0
    %v314 = vadd.f32 0.0, %v313
    %315 = vdwg.mxu0
    %316 = vrot.lane.b32.xlu0 %v77, 104
    %v317 = vpop.permute.xlu0 %316
    %318 = vrot.lane.b32.xlu0 %v77, 72
    %v319 = vpop.permute.xlu0 %318
    %v320 = vsel %vm85, %v317, 0
    %v322 = vsel %vm85, %v319, 0
    %324 = vmatpush.xpose.msra.mxu0 0.0
    %325 = vmatpush.xpose.msra.mxu0 0.0
    %326 = vmatpush.xpose.msra.mxu0 0.0
    %327 = vmatpush.xpose.msra.mxu0 0.0
    %328 = vmatpush.xpose.msra.mxu0 0.0
    %329 = vmatpush.xpose.msra.mxu0 0.0
    %330 = vmatpush.xpose.msra.mxu0 0.0
    %331 = vmatpush.xpose.msra.mxu0 0.0
    %332 = vmatpush.xpose.msra.mxu0 0.0
    %333 = vmatpush.xpose.msra.mxu0 0.0
    %334 = vmatpush.xpose.msra.mxu0 0.0
    %335 = vmatpush.xpose.msra.mxu0 0.0
    %336 = vmatpush.xpose.msra.mxu0 0.0
    %337 = vmatpush.xpose.msra.mxu0 0.0
    %338 = vmatpush.xpose.msra.mxu0 0.0
    %339 = vmatpush.xpose.msra.mxu0 %v322
    %340 = vmatmul.f32.gmra.mxu0 %v320
    %v341 = vpop.f32.mrf.mxu0
    %v342 = vadd.f32 0.0, %v341
    %343 = vdwg.mxu0
    %v344 = vsel %vm85, %v342, -inf
    %345 = vmax.xlane.f32.xlu0 %v344
    %v346 = vpop.xlane.xlu0 %345
    %v347 = vsub.f32 %v342, %v346
    %v348 = vmul.f32 %v347, 1.442695
    %v349 = vpow.pop %v348
    %v350 = vsel %vm85, %v349, 0.0
    %351 = vadd.xlane.f32.xlu0 %v350
    %v352 = vpop.xlane.xlu0 %351
    %v353 = vrcp.pop %v352
    %v354 = vmul.f32 %v352, %v353
    %v355 = vsub.f32 1.0, %v354
    %v356 = vmul.f32 %v353, %v355
    %v357 = vadd.f32 %v353, %v356
    %vm358 = vweird.f32 %v352
    %vm359 = vweird.f32 %v353
    %vm360 = vmor %vm358, %vm359
    %v361 = vsel %vm360, %v353, %v357
    %v362 = vand.u32 2147483647, %v352
    %vm363 = vcmp.eq.f32.partialorder %v362, 8.507059e+37
    %v364 = vand.u32 %v352, 2147483648
    %v365 = vor.u32 1.1754944e-38, %v364
    %v366 = vsel %vm363, %v365, %v361
    %v367 = vmul.f32 %v349, %v366
    %368 = vrot.lane.b32.xlu0 %v77, 40
    %v369 = vpop.permute.xlu0 %368
    %v372 = vsel %vm85, %v367, 0
    %374 = vmatpush.msra.mxu0 0.0
    %375 = vmatpush.msra.mxu0 0.0
    %376 = vmatpush.msra.mxu0 0.0
    %377 = vmatpush.msra.mxu0 0.0
    %378 = vmatpush.msra.mxu0 0.0
    %379 = vmatpush.msra.mxu0 0.0
    %380 = vmatpush.msra.mxu0 0.0
    %381 = vmatpush.msra.mxu0 0.0
    %382 = vmatpush.msra.mxu0 0.0
    %383 = vmatpush.msra.mxu0 0.0
    %384 = vmatpush.msra.mxu0 0.0
    %385 = vmatpush.msra.mxu0 0.0
    %386 = vmatpush.msra.mxu0 0.0
    %387 = vmatpush.msra.mxu0 0.0
    %388 = vmatpush.msra.mxu0 0.0
    %389 = vmatpush.msra.mxu0 %v369
    %390 = vmatmul.f32.gmra.mxu0 %v372
    %v391 = vpop.f32.mrf.mxu0
    %v392 = vadd.f32 0.0, %v391
    %393 = vdwg.mxu0
    %395 = vrot.lane.b32.xlu0 %v236, 8
    %v396 = vpop.permute.xlu0 %395
    %399 = vrot.lane.b32.xlu0 %v314, 16
    %v400 = vpop.permute.xlu0 %399
    %403 = vrot.lane.b32.xlu0 %v392, 24
    %v404 = vpop.permute.xlu0 %403
    %v406 = vsel %vm85, %v158, %v396
    %vm407 = vcmask 130048
    %v408 = vsel %vm407, %v406, %v400
    %vm409 = vcmask 195584
    %v410 = vsel %vm409, %v408, %v404
    %412 = vrot.lane.b32.xlu0 %v80, 96
    %v413 = vpop.permute.xlu0 %412
    %v414 = vsel %vm85, %v80, 0
    %v416 = vsel %vm85, %v413, 0
    %418 = vmatpush.xpose.msra.mxu0 0.0
    %419 = vmatpush.xpose.msra.mxu0 0.0
    %420 = vmatpush.xpose.msra.mxu0 0.0
    %421 = vmatpush.xpose.msra.mxu0 0.0
    %422 = vmatpush.xpose.msra.mxu0 0.0
    %423 = vmatpush.xpose.msra.mxu0 0.0
    %424 = vmatpush.xpose.msra.mxu0 0.0
    %425 = vmatpush.xpose.msra.mxu0 0.0
    %426 = vmatpush.xpose.msra.mxu0 0.0
    %427 = vmatpush.xpose.msra.mxu0 0.0
    %428 = vmatpush.xpose.msra.mxu0 0.0
    %429 = vmatpush.xpose.msra.mxu0 0.0
    %430 = vmatpush.xpose.msra.mxu0 0.0
    %431 = vmatpush.xpose.msra.mxu0 0.0
    %432 = vmatpush.xpose.msra.mxu0 0.0
    %433 = vmatpush.xpose.msra.mxu0 %v416
    %434 = vmatmul.f32.gmra.mxu0 %v414
    %v435 = vpop.f32.mrf.mxu0
    %v436 = vadd.f32 0.0, %v435
    %437 = vdwg.mxu0
    %v438 = vsel %vm85, %v436, -inf
    %439 = vmax.xlane.f32.xlu0 %v438
    %v440 = vpop.xlane.xlu0 %439
    %v441 = vsub.f32 %v436, %v440
    %v442 = vmul.f32 %v441, 1.442695
    %v443 = vpow.pop %v442
    %v444 = vsel %vm85, %v443, 0.0
    %445 = vadd.xlane.f32.xlu0 %v444
    %v446 = vpop.xlane.xlu0 %445
    %v447 = vrcp.pop %v446
    %v448 = vmul.f32 %v446, %v447
    %v449 = vsub.f32 1.0, %v448
    %v450 = vmul.f32 %v447, %v449
    %v451 = vadd.f32 %v447, %v450
    %vm452 = vweird.f32 %v446
    %vm453 = vweird.f32 %v447
    %vm454 = vmor %vm452, %vm453
    %v455 = vsel %vm454, %v447, %v451
    %v456 = vand.u32 2147483647, %v446
    %vm457 = vcmp.eq.f32.partialorder %v456, 8.507059e+37
    %v458 = vand.u32 %v446, 2147483648
    %v459 = vor.u32 1.1754944e-38, %v458
    %v460 = vsel %vm457, %v459, %v455
    %v461 = vmul.f32 %v443, %v460
    %462 = vrot.lane.b32.xlu0 %v80, 64
    %v463 = vpop.permute.xlu0 %462
    %v466 = vsel %vm85, %v461, 0
    %468 = vmatpush.msra.mxu0 0.0
    %469 = vmatpush.msra.mxu0 0.0
    %470 = vmatpush.msra.mxu0 0.0
    %471 = vmatpush.msra.mxu0 0.0
    %472 = vmatpush.msra.mxu0 0.0
    %473 = vmatpush.msra.mxu0 0.0
    %474 = vmatpush.msra.mxu0 0.0
    %475 = vmatpush.msra.mxu0 0.0
    %476 = vmatpush.msra.mxu0 0.0
    %477 = vmatpush.msra.mxu0 0.0
    %478 = vmatpush.msra.mxu0 0.0
    %479 = vmatpush.msra.mxu0 0.0
    %480 = vmatpush.msra.mxu0 0.0
    %481 = vmatpush.msra.mxu0 0.0
    %482 = vmatpush.msra.mxu0 0.0
    %483 = vmatpush.msra.mxu0 %v463
    %484 = vmatmul.f32.gmra.mxu0 %v466
    %v485 = vpop.f32.mrf.mxu0
    %v486 = vadd.f32 0.0, %v485
    %487 = vdwg.mxu0
    %488 = vrot.lane.b32.xlu0 %v80, 120
    %v489 = vpop.permute.xlu0 %488
    %490 = vrot.lane.b32.xlu0 %v80, 88
    %v491 = vpop.permute.xlu0 %490
    %v492 = vsel %vm85, %v489, 0
    %v494 = vsel %vm85, %v491, 0
    %496 = vmatpush.xpose.msra.mxu0 0.0
    %497 = vmatpush.xpose.msra.mxu0 0.0
    %498 = vmatpush.xpose.msra.mxu0 0.0
    %499 = vmatpush.xpose.msra.mxu0 0.0
    %500 = vmatpush.xpose.msra.mxu0 0.0
    %501 = vmatpush.xpose.msra.mxu0 0.0
    %502 = vmatpush.xpose.msra.mxu0 0.0
    %503 = vmatpush.xpose.msra.mxu0 0.0
    %504 = vmatpush.xpose.msra.mxu0 0.0
    %505 = vmatpush.xpose.msra.mxu0 0.0
    %506 = vmatpush.xpose.msra.mxu0 0.0
    %507 = vmatpush.xpose.msra.mxu0 0.0
    %508 = vmatpush.xpose.msra.mxu0 0.0
    %509 = vmatpush.xpose.msra.mxu0 0.0
    %510 = vmatpush.xpose.msra.mxu0 0.0
    %511 = vmatpush.xpose.msra.mxu0 %v494
    %512 = vmatmul.f32.gmra.mxu0 %v492
    %v513 = vpop.f32.mrf.mxu0
    %v514 = vadd.f32 0.0, %v513
    %515 = vdwg.mxu0
    %v516 = vsel %vm85, %v514, -inf
    %517 = vmax.xlane.f32.xlu0 %v516
    %v518 = vpop.xlane.xlu0 %517
    %v519 = vsub.f32 %v514, %v518
    %v520 = vmul.f32 %v519, 1.442695
    %v521 = vpow.pop %v520
    %v522 = vsel %vm85, %v521, 0.0
    %523 = vadd.xlane.f32.xlu0 %v522
    %v524 = vpop.xlane.xlu0 %523
    %v525 = vrcp.pop %v524
    %v526 = vmul.f32 %v524, %v525
    %v527 = vsub.f32 1.0, %v526
    %v528 = vmul.f32 %v525, %v527
    %v529 = vadd.f32 %v525, %v528
    %vm530 = vweird.f32 %v524
    %vm531 = vweird.f32 %v525
    %vm532 = vmor %vm530, %vm531
    %v533 = vsel %vm532, %v525, %v529
    %v534 = vand.u32 2147483647, %v524
    %vm535 = vcmp.eq.f32.partialorder %v534, 8.507059e+37
    %v536 = vand.u32 %v524, 2147483648
    %v537 = vor.u32 1.1754944e-38, %v536
    %v538 = vsel %vm535, %v537, %v533
    %v539 = vmul.f32 %v521, %v538
    %540 = vrot.lane.b32.xlu0 %v80, 56
    %v541 = vpop.permute.xlu0 %540
    %v544 = vsel %vm85, %v539, 0
    %546 = vmatpush.msra.mxu0 0.0
    %547 = vmatpush.msra.mxu0 0.0
    %548 = vmatpush.msra.mxu0 0.0
    %549 = vmatpush.msra.mxu0 0.0
    %550 = vmatpush.msra.mxu0 0.0
    %551 = vmatpush.msra.mxu0 0.0
    %552 = vmatpush.msra.mxu0 0.0
    %553 = vmatpush.msra.mxu0 0.0
    %554 = vmatpush.msra.mxu0 0.0
    %555 = vmatpush.msra.mxu0 0.0
    %556 = vmatpush.msra.mxu0 0.0
    %557 = vmatpush.msra.mxu0 0.0
    %558 = vmatpush.msra.mxu0 0.0
    %559 = vmatpush.msra.mxu0 0.0
    %560 = vmatpush.msra.mxu0 0.0
    %561 = vmatpush.msra.mxu0 %v541
    %562 = vmatmul.f32.gmra.mxu0 %v544
    %v563 = vpop.f32.mrf.mxu0
    %v564 = vadd.f32 0.0, %v563
    %565 = vdwg.mxu0
    %566 = vrot.lane.b32.xlu0 %v80, 112
    %v567 = vpop.permute.xlu0 %566
    %568 = vrot.lane.b32.xlu0 %v80, 80
    %v569 = vpop.permute.xlu0 %568
    %v570 = vsel %vm85, %v567, 0
    %v572 = vsel %vm85, %v569, 0
    %574 = vmatpush.xpose.msra.mxu0 0.0
    %575 = vmatpush.xpose.msra.mxu0 0.0
    %576 = vmatpush.xpose.msra.mxu0 0.0
    %577 = vmatpush.xpose.msra.mxu0 0.0
    %578 = vmatpush.xpose.msra.mxu0 0.0
    %579 = vmatpush.xpose.msra.mxu0 0.0
    %580 = vmatpush.xpose.msra.mxu0 0.0
    %581 = vmatpush.xpose.msra.mxu0 0.0
    %582 = vmatpush.xpose.msra.mxu0 0.0
    %583 = vmatpush.xpose.msra.mxu0 0.0
    %584 = vmatpush.xpose.msra.mxu0 0.0
    %585 = vmatpush.xpose.msra.mxu0 0.0
    %586 = vmatpush.xpose.msra.mxu0 0.0
    %587 = vmatpush.xpose.msra.mxu0 0.0
    %588 = vmatpush.xpose.msra.mxu0 0.0
    %589 = vmatpush.xpose.msra.mxu0 %v572
    %590 = vmatmul.f32.gmra.mxu0 %v570
    %v591 = vpop.f32.mrf.mxu0
    %v592 = vadd.f32 0.0, %v591
    %593 = vdwg.mxu0
    %v594 = vsel %vm85, %v592, -inf
    %595 = vmax.xlane.f32.xlu0 %v594
    %v596 = vpop.xlane.xlu0 %595
    %v597 = vsub.f32 %v592, %v596
    %v598 = vmul.f32 %v597, 1.442695
    %v599 = vpow.pop %v598
    %v600 = vsel %vm85, %v599, 0.0
    %601 = vadd.xlane.f32.xlu0 %v600
    %v602 = vpop.xlane.xlu0 %601
    %v603 = vrcp.pop %v602
    %v604 = vmul.f32 %v602, %v603
    %v605 = vsub.f32 1.0, %v604
    %v606 = vmul.f32 %v603, %v605
    %v607 = vadd.f32 %v603, %v606
    %vm608 = vweird.f32 %v602
    %vm609 = vweird.f32 %v603
    %vm610 = vmor %vm608, %vm609
    %v611 = vsel %vm610, %v603, %v607
    %v612 = vand.u32 2147483647, %v602
    %vm613 = vcmp.eq.f32.partialorder %v612, 8.507059e+37
    %v614 = vand.u32 %v602, 2147483648
    %v615 = vor.u32 1.1754944e-38, %v614
    %v616 = vsel %vm613, %v615, %v611
    %v617 = vmul.f32 %v599, %v616
    %618 = vrot.lane.b32.xlu0 %v80, 48
    %v619 = vpop.permute.xlu0 %618
    %v622 = vsel %vm85, %v617, 0
    %624 = vmatpush.msra.mxu0 0.0
    %625 = vmatpush.msra.mxu0 0.0
    %626 = vmatpush.msra.mxu0 0.0
    %627 = vmatpush.msra.mxu0 0.0
    %628 = vmatpush.msra.mxu0 0.0
    %629 = vmatpush.msra.mxu0 0.0
    %630 = vmatpush.msra.mxu0 0.0
    %631 = vmatpush.msra.mxu0 0.0
    %632 = vmatpush.msra.mxu0 0.0
    %633 = vmatpush.msra.mxu0 0.0
    %634 = vmatpush.msra.mxu0 0.0
    %635 = vmatpush.msra.mxu0 0.0
    %636 = vmatpush.msra.mxu0 0.0
    %637 = vmatpush.msra.mxu0 0.0
    %638 = vmatpush.msra.mxu0 0.0
    %639 = vmatpush.msra.mxu0 %v619
    %640 = vmatmul.f32.gmra.mxu0 %v622
    %v641 = vpop.f32.mrf.mxu0
    %v642 = vadd.f32 0.0, %v641
    %643 = vdwg.mxu0
    %644 = vrot.lane.b32.xlu0 %v80, 104
    %v645 = vpop.permute.xlu0 %644
    %646 = vrot.lane.b32.xlu0 %v80, 72
    %v647 = vpop.permute.xlu0 %646
    %v648 = vsel %vm85, %v645, 0
    %v650 = vsel %vm85, %v647, 0
    %652 = vmatpush.xpose.msra.mxu0 0.0
    %653 = vmatpush.xpose.msra.mxu0 0.0
    %654 = vmatpush.xpose.msra.mxu0 0.0
    %655 = vmatpush.xpose.msra.mxu0 0.0
    %656 = vmatpush.xpose.msra.mxu0 0.0
    %657 = vmatpush.xpose.msra.mxu0 0.0
    %658 = vmatpush.xpose.msra.mxu0 0.0
    %659 = vmatpush.xpose.msra.mxu0 0.0
    %660 = vmatpush.xpose.msra.mxu0 0.0
    %661 = vmatpush.xpose.msra.mxu0 0.0
    %662 = vmatpush.xpose.msra.mxu0 0.0
    %663 = vmatpush.xpose.msra.mxu0 0.0
    %664 = vmatpush.xpose.msra.mxu0 0.0
    %665 = vmatpush.xpose.msra.mxu0 0.0
    %666 = vmatpush.xpose.msra.mxu0 0.0
    %667 = vmatpush.xpose.msra.mxu0 %v650
    %668 = vmatmul.f32.gmra.mxu0 %v648
    %v669 = vpop.f32.mrf.mxu0
    %v670 = vadd.f32 0.0, %v669
    %671 = vdwg.mxu0
    %v672 = vsel %vm85, %v670, -inf
    %673 = vmax.xlane.f32.xlu0 %v672
    %v674 = vpop.xlane.xlu0 %673
    %v675 = vsub.f32 %v670, %v674
    %v676 = vmul.f32 %v675, 1.442695
    %v677 = vpow.pop %v676
    %v678 = vsel %vm85, %v677, 0.0
    %679 = vadd.xlane.f32.xlu0 %v678
    %v680 = vpop.xlane.xlu0 %679
    %v681 = vrcp.pop %v680
    %v682 = vmul.f32 %v680, %v681
    %v683 = vsub.f32 1.0, %v682
    %v684 = vmul.f32 %v681, %v683
    %v685 = vadd.f32 %v681, %v684
    %vm686 = vweird.f32 %v680
    %vm687 = vweird.f32 %v681
    %vm688 = vmor %vm686, %vm687
    %v689 = vsel %vm688, %v681, %v685
    %v690 = vand.u32 2147483647, %v680
    %vm691 = vcmp.eq.f32.partialorder %v690, 8.507059e+37
    %v692 = vand.u32 %v680, 2147483648
    %v693 = vor.u32 1.1754944e-38, %v692
    %v694 = vsel %vm691, %v693, %v689
    %v695 = vmul.f32 %v677, %v694
    %696 = vrot.lane.b32.xlu0 %v80, 40
    %v697 = vpop.permute.xlu0 %696
    %v700 = vsel %vm85, %v695, 0
    %702 = vmatpush.msra.mxu0 0.0
    %703 = vmatpush.msra.mxu0 0.0
    %704 = vmatpush.msra.mxu0 0.0
    %705 = vmatpush.msra.mxu0 0.0
    %706 = vmatpush.msra.mxu0 0.0
    %707 = vmatpush.msra.mxu0 0.0
    %708 = vmatpush.msra.mxu0 0.0
    %709 = vmatpush.msra.mxu0 0.0
    %710 = vmatpush.msra.mxu0 0.0
    %711 = vmatpush.msra.mxu0 0.0
    %712 = vmatpush.msra.mxu0 0.0
    %713 = vmatpush.msra.mxu0 0.0
    %714 = vmatpush.msra.mxu0 0.0
    %715 = vmatpush.msra.mxu0 0.0
    %716 = vmatpush.msra.mxu0 0.0
    %717 = vmatpush.msra.mxu0 %v697
    %718 = vmatmul.f32.gmra.mxu0 %v700
    %v719 = vpop.f32.mrf.mxu0
    %v720 = vadd.f32 0.0, %v719
    %721 = vdwg.mxu0
    %723 = vrot.lane.b32.xlu0 %v564, 8
    %v724 = vpop.permute.xlu0 %723
    %727 = vrot.lane.b32.xlu0 %v642, 16
    %v728 = vpop.permute.xlu0 %727
    %731 = vrot.lane.b32.xlu0 %v720, 24
    %v732 = vpop.permute.xlu0 %731
    %v734 = vsel %vm85, %v486, %v724
    %v735 = vsel %vm407, %v734, %v728
    %v736 = vsel %vm409, %v735, %v732
    %v737 = vld [vmem:[#allocation2] sm:$0xff]
    %v738 = vld [vmem:[#allocation2 + $0x8] sm:$0xff]
    %v739 = vld [vmem:[#allocation2 + $0x10] sm:$0xff]
    %v740 = vld [vmem:[#allocation2 + $0x18] sm:$0xff]
    %v741 = vld [vmem:[%s4] sm:$0x1]
    %v743 = vperm.slane %v741, 0
    %v746 = vsel %vm52, %v410, 0
    %v749 = vsel %vm52, %v736, 0
    %751 = vmatpush.msra.mxu0 0.0
    %752 = vmatpush.msra.mxu0 0.0
    %753 = vmatpush.msra.mxu0 0.0
    %754 = vmatpush.msra.mxu0 0.0
    %755 = vmatpush.msra.mxu0 0.0
    %756 = vmatpush.msra.mxu0 0.0
    %757 = vmatpush.msra.mxu0 0.0
    %758 = vmatpush.msra.mxu0 0.0
    %759 = vmatpush.msra.mxu0 0.0
    %760 = vmatpush.msra.mxu0 0.0
    %761 = vmatpush.msra.mxu0 0.0
    %762 = vmatpush.msra.mxu0 0.0
    %763 = vmatpush.msra.mxu0 %v740
    %764 = vmatpush.msra.mxu0 %v739
    %765 = vmatpush.msra.mxu0 %v738
    %766 = vmatpush.msra.mxu0 %v737
    %767 = vmatmul.f32.gmra.mxu0 %v746
    %v768 = vpop.f32.mrf.mxu0
    %v769 = vadd.f32 %v743, %v768
    %770 = vmatmul.f32.gmra.mxu0 %v749
    %v771 = vpop.f32.mrf.mxu0
    %v772 = vadd.f32 %v743, %v771
    %773 = vdwg.mxu0
    %v774 = vadd.f32 %v42, %v769
    %v775 = vadd.f32 %v43, %v772
    %v776 = vsel %vm52, %v774, 0.0
    %777 = vadd.xlane.f32.xlu0 %v776
    %v778 = vpop.xlane.xlu0 %777
    %v779 = vsel %vm52, %v775, 0.0
    %780 = vadd.xlane.f32.xlu0 %v779
    %v781 = vpop.xlane.xlu0 %780
    %v782 = vrcp.pop 32.0
    %v783 = vmul.f32 32.0, %v782
    %v784 = vsub.f32 1.0, %v783
    %v785 = vmul.f32 %v782, %v784
    %v786 = vadd.f32 %v782, %v785
    %vm787 = vweird.f32 %v782
    %v788 = vsel %vm787, %v782, %v786
    %v789 = vmul.f32 %v778, %v788
    %v790 = vmul.f32 %v781, %v788
    %v791 = vsub.f32 %v774, %v789
    %v792 = vsub.f32 %v775, %v790
    %v793 = vmul.f32 %v791, %v791
    %v794 = vmul.f32 %v792, %v792
    %v795 = vsel %vm52, %v793, 0.0
    %796 = vadd.xlane.f32.xlu0 %v795
    %v797 = vpop.xlane.xlu0 %796
    %v798 = vsel %vm52, %v794, 0.0
    %799 = vadd.xlane.f32.xlu0 %v798
    %v800 = vpop.xlane.xlu0 %799
    %v801 = vmul.f32 %v797, %v788
    %v802 = vmul.f32 %v800, %v788
    %v803 = vadd.f32 %v801, 1e-05
    %v804 = vadd.f32 %v802, 1e-05
    %v805 = vrsqrt.pop %v803
    %v806 = vmul.f32 %v805, %v803
    %v807 = vmul.f32 %v806, %v805
    %v808 = vmul.f32 0.5, %v807
    %v809 = vsub.f32 1.5, %v808
    %v810 = vmul.f32 %v805, %v809
    %vm811 = vweird.f32 %v803
    %vm812 = vweird.f32 %v805
    %vm813 = vmor %vm811, %vm812
    %v814 = vsel %vm813, %v805, %v810
    %v815 = vrsqrt.pop %v804
    %v816 = vmul.f32 %v815, %v804
    %v817 = vmul.f32 %v816, %v815
    %v818 = vmul.f32 0.5, %v817
    %v819 = vsub.f32 1.5, %v818
    %v820 = vmul.f32 %v815, %v819
    %vm821 = vweird.f32 %v804
    %vm822 = vweird.f32 %v815
    %vm823 = vmor %vm821, %vm822
    %v824 = vsel %vm823, %v815, %v820
    %v825 = vmul.f32 %v791, %v814
    %v826 = vmul.f32 %v792, %v824
    %v827 = vld [vmem:[%s5] sm:$0x1]
    %v829 = vperm.slane %v827, 0
    %v831 = vmul.f32 %v825, %v829
    %v832 = vmul.f32 %v826, %v829
    %v833 = vld [vmem:[%s6] sm:$0x1]
    %v835 = vperm.slane %v833, 0
    %v837 = vadd.f32 %v831, %v835
    %v838 = vadd.f32 %v832, %v835
    %839 = vst.msk [vmem:[%s7] sm:$0xff] %vm52, %v837
    %840 = vst.msk [vmem:[%s7 + $0x8] sm:$0xff] %vm52, %v838
    // Predicated region
    $region34: #{transformer_encoder_layer_forward.2} parent=1 // pred_check
      _
    $region35: #{transformer_encoder_layer_forward.2} parent=1 // pred_check_branch
      %842 = sbr.rel (0) target = $region37
    $region36: #{transformer_encoder_layer_forward.2} parent=1 // pred_region
      _
    $region37: #{transformer_encoder_layer_forward.2} parent=1 // pred_fallthru
      _
    // Predicated region
    $region38: #{transformer_encoder_layer_forward.2} parent=1 // pred_check
      _
    $region39: #{transformer_encoder_layer_forward.2} parent=1 // pred_check_branch
      %844 = sbr.rel (0) target = $region41
    $region40: #{transformer_encoder_layer_forward.2} parent=1 // pred_region
      _
    $region41: #{transformer_encoder_layer_forward.2} parent=1 // pred_fallthru
      _
    %845 = vsyncpa [#allocation3], 1

// kernel: transformer_encoder_layer_forward.3
$region0: #{transformer_encoder_layer_forward.3}
  #allocation0 [shape = 'u32[]', space=smem, size = 0x4, offset = 0x4, fixed_abs, tag = 'smem constant byte address 0x4 - core index']
  #allocation1 [shape = 'u32[72,128]{1,0:T(1,128)}', space=vmem, size = 0x9000, scoped, tag = 'internal scratch']
  %s0 = inlined_call_operand.vmem [shape: f32[16,32], index: 0, kind: input, shape index: {}]
  %s1 = inlined_call_operand.hbm [shape: f32[32,384], index: 1, kind: input, shape index: {}]
  %s2 = inlined_call_operand.vmem [shape: f32[1,384], index: 2, kind: input, shape index: {}]
  %s3 = inlined_call_operand.vmem [shape: f32[64,192], index: 3, kind: input, shape index: {}]
  %s4 = inlined_call_operand.vmem [shape: f32[1,192], index: 4, kind: input, shape index: {}]
  %s5 = inlined_call_operand.hbm [shape: f32[64,192], index: 5, kind: input, shape index: {}]
  %s6 = inlined_call_operand.vmem [shape: f32[1,192], index: 6, kind: input, shape index: {}]
  %s7 = inlined_call_operand.vmem [shape: f32[128,32], index: 7, kind: input, shape index: {}]
  %s8 = inlined_call_operand.vmem [shape: f32[1,32], index: 8, kind: input, shape index: {}]
  %s9 = inlined_call_operand.vmem [shape: f32[1,32], index: 9, kind: input, shape index: {}]
  %s10 = inlined_call_operand.vmem [shape: f32[1,32], index: 10, kind: input, shape index: {}]
  %s11 = inlined_call_operand.hbm [shape: f32[16,32], index: 11, kind: output, shape index: {}]
  %s12 = sld [smem:[#allocation0]]
  $region62: #{transformer_encoder_layer_forward.3} parent=0
    _
  %s14 = ssub.s32 1, %s12
  %s15 = scalar_select 0, %s14, %s12
  $region1: #{transformer_encoder_layer_forward.3} parent=0
    #allocation2 [shape = 'u8[49152]{0}', space=vmem, size = 0xc000, scoped, tag = 'input window, operand 1, single buffered']
    #allocation3 [shape = 's32[1]{0}', space=sflag, size = 0x4, scoped, tag = 'scoped memory for transformer_encoder_layer_forward.3']
    #allocation4 [shape = 's32[1]{0}', space=sflag, size = 0x4, scoped, tag = 'scoped memory for transformer_encoder_layer_forward.3']
    #allocation5 [shape = 'u8[65536]{0}', space=vmem, size = 0x10000, scoped, tag = 'input window, operand 5, single buffered']
    #allocation6 [shape = 's32[1]{0}', space=sflag, size = 0x4, scoped, tag = 'scoped memory for transformer_encoder_layer_forward.3']
    #allocation7 [shape = 'u8[8192]{0}', space=vmem, size = 0x2000, scoped, tag = 'output window, operand 0, single buffered']
    %16 = vsyncpa [#allocation3], 0
    %17 = vsyncpa [#allocation6], 0
    %18 = vsyncpa [#allocation4], 0
    // Predicated region
    $region2: #{transformer_encoder_layer_forward.3} parent=1 // pred_check
      _
    $region3: #{transformer_encoder_layer_forward.3} parent=1 // pred_check_branch
      %20 = sbr.rel (0) target = $region5
    $region4: #{transformer_encoder_layer_forward.3} parent=1 // pred_region
      _
    $region5: #{transformer_encoder_layer_forward.3} parent=1 // pred_fallthru
      _
    // Predicated region
    $region6: #{transformer_encoder_layer_forward.3} parent=1 // pred_check
      _
    $region7: #{transformer_encoder_layer_forward.3} parent=1 // pred_check_branch
      %22 = sbr.rel (0) target = $region9
    $region8: #{transformer_encoder_layer_forward.3} parent=1 // pred_region
      %24 = vsyncadd [#allocation3], 0
      %s25 = sshll.u32 %s1, 4
      %s26 = int_to_ptr.hbm [resolvable:$true] %s25
      %s27 = sshll.u32 [#allocation2], 4
      %s28 = int_to_ptr.vmem [resolvable:$true] %s27
      %33 = dma.hbm_to_vmem [thread:$0]  %s26, 1536, %s28, [#allocation3], 384, 384, 24
    $region9: #{transformer_encoder_layer_forward.3} parent=1 // pred_fallthru
      _
    // Predicated region
    $region10: #{transformer_encoder_layer_forward.3} parent=1 // pred_check
      _
    $region11: #{transformer_encoder_layer_forward.3} parent=1 // pred_check_branch
      %35 = sbr.rel (0) target = $region13
    $region12: #{transformer_encoder_layer_forward.3} parent=1 // pred_region
      _
    $region13: #{transformer_encoder_layer_forward.3} parent=1 // pred_fallthru
      _
    // Predicated region
    $region14: #{transformer_encoder_layer_forward.3} parent=1 // pred_check
      _
    $region15: #{transformer_encoder_layer_forward.3} parent=1 // pred_check_branch
      %37 = sbr.rel (0) target = $region17
    $region16: #{transformer_encoder_layer_forward.3} parent=1 // pred_region
      _
    $region17: #{transformer_encoder_layer_forward.3} parent=1 // pred_fallthru
      _
    // Predicated region
    $region18: #{transformer_encoder_layer_forward.3} parent=1 // pred_check
      _
    $region19: #{transformer_encoder_layer_forward.3} parent=1 // pred_check_branch
      %39 = sbr.rel (0) target = $region21
    $region20: #{transformer_encoder_layer_forward.3} parent=1 // pred_region
      _
    $region21: #{transformer_encoder_layer_forward.3} parent=1 // pred_fallthru
      _
    // Predicated region
    $region22: #{transformer_encoder_layer_forward.3} parent=1 // pred_check
      _
    $region23: #{transformer_encoder_layer_forward.3} parent=1 // pred_check_branch
      %41 = sbr.rel (0) target = $region25
    $region24: #{transformer_encoder_layer_forward.3} parent=1 // pred_region
      %43 = vsyncadd [#allocation6], 0
      %s44 = sshll.u32 %s5, 4
      %s45 = int_to_ptr.hbm [resolvable:$true] %s44
      %s46 = sshll.u32 [#allocation5], 4
      %s47 = int_to_ptr.vmem [resolvable:$true] %s46
      %52 = dma.hbm_to_vmem [thread:$0]  %s45, 2048, %s47, [#allocation6], 256, 256, 16
    $region25: #{transformer_encoder_layer_forward.3} parent=1 // pred_fallthru
      _
    // Predicated region
    $region26: #{transformer_encoder_layer_forward.3} parent=1 // pred_check
      _
    $region27: #{transformer_encoder_layer_forward.3} parent=1 // pred_check_branch
      %54 = sbr.rel (0) target = $region29
    $region28: #{transformer_encoder_layer_forward.3} parent=1 // pred_region
      _
    $region29: #{transformer_encoder_layer_forward.3} parent=1 // pred_fallthru
      _
    // Predicated region
    $region30: #{transformer_encoder_layer_forward.3} parent=1 // pred_check
      _
    $region31: #{transformer_encoder_layer_forward.3} parent=1 // pred_check_branch
      %56 = sbr.rel (0) target = $region33
    $region32: #{transformer_encoder_layer_forward.3} parent=1 // pred_region
      _
    $region33: #{transformer_encoder_layer_forward.3} parent=1 // pred_fallthru
      _
    // Predicated region
    $region34: #{transformer_encoder_layer_forward.3} parent=1 // pred_check
      _
    $region35: #{transformer_encoder_layer_forward.3} parent=1 // pred_check_branch
      %58 = sbr.rel (0) target = $region37
    $region36: #{transformer_encoder_layer_forward.3} parent=1 // pred_region
      _
    $region37: #{transformer_encoder_layer_forward.3} parent=1 // pred_fallthru
      _
    // Predicated region
    $region38: #{transformer_encoder_layer_forward.3} parent=1 // pred_check
      _
    $region39: #{transformer_encoder_layer_forward.3} parent=1 // pred_check_branch
      %60 = sbr.rel (0) target = $region41
    $region40: #{transformer_encoder_layer_forward.3} parent=1 // pred_region
      _
    $region41: #{transformer_encoder_layer_forward.3} parent=1 // pred_fallthru
      _
    // Predicated region
    $region42: #{transformer_encoder_layer_forward.3} parent=1 // pred_check
      _
    $region43: #{transformer_encoder_layer_forward.3} parent=1 // pred_check_branch
      %62 = sbr.rel (0) target = $region45
    $region44: #{transformer_encoder_layer_forward.3} parent=1 // pred_region
      _
    $region45: #{transformer_encoder_layer_forward.3} parent=1 // pred_fallthru
      _
    // Predicated region
    $region46: #{transformer_encoder_layer_forward.3} parent=1 // pred_check
      _
    $region47: #{transformer_encoder_layer_forward.3} parent=1 // pred_check_branch
      %64 = sbr.rel (0) target = $region49
    $region48: #{transformer_encoder_layer_forward.3} parent=1 // pred_region
      %66 = dma.done [#allocation3], 1536
    $region49: #{transformer_encoder_layer_forward.3} parent=1 // pred_fallthru
      _
    // Predicated region
    $region50: #{transformer_encoder_layer_forward.3} parent=1 // pred_check
      _
    $region51: #{transformer_encoder_layer_forward.3} parent=1 // pred_check_branch
      %68 = sbr.rel (0) target = $region53
    $region52: #{transformer_encoder_layer_forward.3} parent=1 // pred_region
      %70 = dma.done [#allocation6], 2048
    $region53: #{transformer_encoder_layer_forward.3} parent=1 // pred_fallthru
      _
    %v71 = vld [vmem:[%s0] sm:$0xff]
    %v72 = vld [vmem:[%s0 + $0x8] sm:$0xff]
    %v73 = vld [vmem:[#allocation2] sm:$0xff]
    %v74 = vld [vmem:[#allocation2 + $0x8] sm:$0xff]
    %v75 = vld [vmem:[#allocation2 + $0x10] sm:$0xff]
    %v76 = vld [vmem:[#allocation2 + $0x18] sm:$0xff]
    %v77 = vld [vmem:[#allocation2 + $0x20] sm:$0xff]
    %v78 = vld [vmem:[#allocation2 + $0x28] sm:$0xff]
    %v79 = vld [vmem:[#allocation2 + $0x30] sm:$0xff]
    %v80 = vld [vmem:[#allocation2 + $0x38] sm:$0xff]
    %v81 = vld [vmem:[#allocation2 + $0x40] sm:$0xff]
    %v82 = vld [vmem:[#allocation2 + $0x48] sm:$0xff]
    %v83 = vld [vmem:[#allocation2 + $0x50] sm:$0xff]
    %v84 = vld [vmem:[#allocation2 + $0x58] sm:$0xff]
    %v85 = vld [vmem:[%s2] sm:$0x7]
    %v87 = vperm.slane %v85, 0
    %v88 = vperm.slane %v85, 1
    %v89 = vperm.slane %v85, 2
    %vm93 = vcmask 261120
    %v95 = vsel %vm93, %v71, 0
    %v98 = vsel %vm93, %v72, 0
    %100 = vmatpush.msra.mxu0 0.0
    %101 = vmatpush.msra.mxu0 0.0
    %102 = vmatpush.msra.mxu0 0.0
    %103 = vmatpush.msra.mxu0 0.0
    %104 = vmatpush.msra.mxu0 0.0
    %105 = vmatpush.msra.mxu0 0.0
    %106 = vmatpush.msra.mxu0 0.0
    %107 = vmatpush.msra.mxu0 0.0
    %108 = vmatpush.msra.mxu0 0.0
    %109 = vmatpush.msra.mxu0 0.0
    %110 = vmatpush.msra.mxu0 0.0
    %111 = vmatpush.msra.mxu0 0.0
    %112 = vmatpush.msra.mxu0 %v82
    %113 = vmatpush.msra.mxu0 %v79
    %114 = vmatpush.msra.mxu0 %v76
    %115 = vmatpush.msra.mxu0 %v73
    %116 = vmatmul.f32.gmra.mxu0 %v95
    %v117 = vpop.f32.mrf.mxu0
    %v118 = vadd.f32 %v87, %v117
    %119 = vmatmul.f32.gmra.mxu0 %v98
    %v120 = vpop.f32.mrf.mxu0
    %v121 = vadd.f32 %v87, %v120
    %122 = vdwg.mxu0
    %123 = vmatpush.msra.mxu0 0.0
    %124 = vmatpush.msra.mxu0 0.0
    %125 = vmatpush.msra.mxu0 0.0
    %126 = vmatpush.msra.mxu0 0.0
    %127 = vmatpush.msra.mxu0 0.0
    %128 = vmatpush.msra.mxu0 0.0
    %129 = vmatpush.msra.mxu0 0.0
    %130 = vmatpush.msra.mxu0 0.0
    %131 = vmatpush.msra.mxu0 0.0
    %132 = vmatpush.msra.mxu0 0.0
    %133 = vmatpush.msra.mxu0 0.0
    %134 = vmatpush.msra.mxu0 0.0
    %135 = vmatpush.msra.mxu0 %v83
    %136 = vmatpush.msra.mxu0 %v80
    %137 = vmatpush.msra.mxu0 %v77
    %138 = vmatpush.msra.mxu0 %v74
    %139 = vmatmul.f32.gmra.mxu0 %v95
    %v140 = vpop.f32.mrf.mxu0
    %v141 = vadd.f32 %v88, %v140
    %142 = vmatmul.f32.gmra.mxu0 %v98
    %v143 = vpop.f32.mrf.mxu0
    %v144 = vadd.f32 %v88, %v143
    %145 = vdwg.mxu0
    %146 = vmatpush.msra.mxu0 0.0
    %147 = vmatpush.msra.mxu0 0.0
    %148 = vmatpush.msra.mxu0 0.0
    %149 = vmatpush.msra.mxu0 0.0
    %150 = vmatpush.msra.mxu0 0.0
    %151 = vmatpush.msra.mxu0 0.0
    %152 = vmatpush.msra.mxu0 0.0
    %153 = vmatpush.msra.mxu0 0.0
    %154 = vmatpush.msra.mxu0 0.0
    %155 = vmatpush.msra.mxu0 0.0
    %156 = vmatpush.msra.mxu0 0.0
    %157 = vmatpush.msra.mxu0 0.0
    %158 = vmatpush.msra.mxu0 %v84
    %159 = vmatpush.msra.mxu0 %v81
    %160 = vmatpush.msra.mxu0 %v78
    %161 = vmatpush.msra.mxu0 %v75
    %162 = vmatmul.f32.gmra.mxu0 %v95
    %v163 = vpop.f32.mrf.mxu0
    %v164 = vadd.f32 %v89, %v163
    %165 = vmatmul.f32.gmra.mxu0 %v98
    %v166 = vpop.f32.mrf.mxu0
    %v167 = vadd.f32 %v89, %v166
    %168 = vdwg.mxu0
    %v169 = vld [vmem:[%s3] sm:$0xff]
    %v170 = vld [vmem:[%s3 + $0x8] sm:$0xff]
    %v171 = vld [vmem:[%s3 + $0x10] sm:$0xff]
    %v172 = vld [vmem:[%s3 + $0x18] sm:$0xff]
    %v173 = vld [vmem:[%s3 + $0x20] sm:$0xff]
    %v174 = vld [vmem:[%s3 + $0x28] sm:$0xff]
    %v175 = vld [vmem:[%s3 + $0x30] sm:$0xff]
    %v176 = vld [vmem:[%s3 + $0x38] sm:$0xff]
    %v177 = vld [vmem:[%s3 + $0x40] sm:$0xff]
    %v178 = vld [vmem:[%s3 + $0x48] sm:$0xff]
    %v179 = vld [vmem:[%s3 + $0x50] sm:$0xff]
    %v180 = vld [vmem:[%s3 + $0x58] sm:$0xff]
    %v181 = vld [vmem:[%s3 + $0x60] sm:$0xff]
    %v182 = vld [vmem:[%s3 + $0x68] sm:$0xff]
    %v183 = vld [vmem:[%s3 + $0x70] sm:$0xff]
    %v184 = vld [vmem:[%s3 + $0x78] sm:$0xff]
    %v185 = vld [vmem:[#allocation5] sm:$0xff]
    %v186 = vld [vmem:[#allocation5 + $0x8] sm:$0xff]
    %v187 = vld [vmem:[#allocation5 + $0x10] sm:$0xff]
    %v188 = vld [vmem:[#allocation5 + $0x18] sm:$0xff]
    %v189 = vld [vmem:[#allocation5 + $0x20] sm:$0xff]
    %v190 = vld [vmem:[#allocation5 + $0x28] sm:$0xff]
    %v191 = vld [vmem:[#allocation5 + $0x30] sm:$0xff]
    %v192 = vld [vmem:[#allocation5 + $0x38] sm:$0xff]
    %v193 = vld [vmem:[#allocation5 + $0x40] sm:$0xff]
    %v194 = vld [vmem:[#allocation5 + $0x48] sm:$0xff]
    %v195 = vld [vmem:[#allocation5 + $0x50] sm:$0xff]
    %v196 = vld [vmem:[#allocation5 + $0x58] sm:$0xff]
    %v197 = vld [vmem:[#allocation5 + $0x60] sm:$0xff]
    %v198 = vld [vmem:[#allocation5 + $0x68] sm:$0xff]
    %v199 = vld [vmem:[#allocation5 + $0x70] sm:$0xff]
    %v200 = vld [vmem:[#allocation5 + $0x78] sm:$0xff]
    %v201 = vld [vmem:[%s4] sm:$0x3]
    %v202 = vld [vmem:[%s6] sm:$0x3]
    %v204 = vperm.slane %v201, 0
    %v205 = vperm.slane %v201, 1
    %vm208 = vcmask 523264
    %v210 = vsel %vm208, 0.0, 0
    %212 = vmatpush.msra.mxu0 0.0
    %213 = vmatpush.msra.mxu0 0.0
    %214 = vmatpush.msra.mxu0 0.0
    %215 = vmatpush.msra.mxu0 0.0
    %216 = vmatpush.msra.mxu0 0.0
    %217 = vmatpush.msra.mxu0 0.0
    %218 = vmatpush.msra.mxu0 0.0
    %219 = vmatpush.msra.mxu0 0.0
    %220 = vmatpush.msra.mxu0 %v183
    %221 = vmatpush.msra.mxu0 %v181
    %222 = vmatpush.msra.mxu0 %v179
    %223 = vmatpush.msra.mxu0 %v177
    %224 = vmatpush.msra.mxu0 %v175
    %225 = vmatpush.msra.mxu0 %v173
    %226 = vmatpush.msra.mxu0 %v171
    %227 = vmatpush.msra.mxu0 %v169
    %228 = vmatmul.f32.gmra.mxu0 %v210
    %v229 = vpop.f32.mrf.mxu0
    %v230 = vadd.f32 %v204, %v229
    %231 = vdwg.mxu0
    %232 = vmatpush.msra.mxu0 0.0
    %233 = vmatpush.msra.mxu0 0.0
    %234 = vmatpush.msra.mxu0 0.0
    %235 = vmatpush.msra.mxu0 0.0
    %236 = vmatpush.msra.mxu0 0.0
    %237 = vmatpush.msra.mxu0 0.0
    %238 = vmatpush.msra.mxu0 0.0
    %239 = vmatpush.msra.mxu0 0.0
    %240 = vmatpush.msra.mxu0 %v184
    %241 = vmatpush.msra.mxu0 %v182
    %242 = vmatpush.msra.mxu0 %v180
    %243 = vmatpush.msra.mxu0 %v178
    %244 = vmatpush.msra.mxu0 %v176
    %245 = vmatpush.msra.mxu0 %v174
    %246 = vmatpush.msra.mxu0 %v172
    %247 = vmatpush.msra.mxu0 %v170
    %248 = vmatmul.f32.gmra.mxu0 %v210
    %v249 = vpop.f32.mrf.mxu0
    %v250 = vadd.f32 %v205, %v249
    %251 = vdwg.mxu0
    %v252 = vadd.f32 %v118, %v230
    %v253 = vxor.u32 %v252, 2147483648
    %v254 = vmul.f32 %v253, 1.442695
    %v255 = vpow.pop %v254
    %v256 = vadd.f32 %v255, 1.0
    %v257 = vrcp.pop %v256
    %v258 = vmul.f32 %v256, %v257
    %v259 = vsub.f32 1.0, %v258
    %v260 = vmul.f32 %v257, %v259
    %v261 = vadd.f32 %v257, %v260
    %vm262 = vweird.f32 %v256
    %vm263 = vweird.f32 %v257
    %vm264 = vmor %vm262, %vm263
    %v265 = vsel %vm264, %v257, %v261
    %v266 = vand.u32 2147483647, %v256
    %vm267 = vcmp.eq.f32.partialorder %v266, 8.507059e+37
    %v268 = vand.u32 %v256, 2147483648
    %v269 = vor.u32 1.1754944e-38, %v268
    %v270 = vsel %vm267, %v269, %v265
    %v271 = vmul.f32 1.0, %v270
    %v272 = vmul.f32 %v271, %v250
    %v273 = vadd.f32 %v141, %v272
    %v274 = vtanh.pop %v273
    %v275 = vsub.f32 1.0, %v271
    %277 = vrot.lane.b32.xlu0 %v274, 64
    %v278 = vpop.permute.xlu0 %277
    %v280 = vmul.f32 %v275, %v278
    %v281 = vmul.f32 %v271, 0.0
    %v282 = vadd.f32 %v280, %v281
    %v284 = vperm.slane %v202, 0
    %v285 = vperm.slane %v202, 1
    %288 = vmatpush.msra.mxu0 0.0
    %289 = vmatpush.msra.mxu0 0.0
    %290 = vmatpush.msra.mxu0 0.0
    %291 = vmatpush.msra.mxu0 0.0
    %292 = vmatpush.msra.mxu0 0.0
    %293 = vmatpush.msra.mxu0 0.0
    %294 = vmatpush.msra.mxu0 0.0
    %295 = vmatpush.msra.mxu0 0.0
    %296 = vmatpush.msra.mxu0 %v199
    %297 = vmatpush.msra.mxu0 %v197
    %298 = vmatpush.msra.mxu0 %v195
    %299 = vmatpush.msra.mxu0 %v193
    %300 = vmatpush.msra.mxu0 %v191
    %301 = vmatpush.msra.mxu0 %v189
    %302 = vmatpush.msra.mxu0 %v187
    %303 = vmatpush.msra.mxu0 %v185
    %304 = vmatmul.f32.gmra.mxu0 %v210
    %v305 = vpop.f32.mrf.mxu0
    %v306 = vadd.f32 %v284, %v305
    %307 = vdwg.mxu0
    %308 = vmatpush.msra.mxu0 0.0
    %309 = vmatpush.msra.mxu0 0.0
    %310 = vmatpush.msra.mxu0 0.0
    %311 = vmatpush.msra.mxu0 0.0
    %312 = vmatpush.msra.mxu0 0.0
    %313 = vmatpush.msra.mxu0 0.0
    %314 = vmatpush.msra.mxu0 0.0
    %315 = vmatpush.msra.mxu0 0.0
    %316 = vmatpush.msra.mxu0 %v200
    %317 = vmatpush.msra.mxu0 %v198
    %318 = vmatpush.msra.mxu0 %v196
    %319 = vmatpush.msra.mxu0 %v194
    %320 = vmatpush.msra.mxu0 %v192
    %321 = vmatpush.msra.mxu0 %v190
    %322 = vmatpush.msra.mxu0 %v188
    %323 = vmatpush.msra.mxu0 %v186
    %324 = vmatmul.f32.gmra.mxu0 %v210
    %v325 = vpop.f32.mrf.mxu0
    %v326 = vadd.f32 %v285, %v325
    %327 = vdwg.mxu0
    %v329 = vrot.slane %v306, 2
    %330 = vrot.lane.b32.xlu0 %v329, 64
    %v331 = vpop.permute.xlu0 %330
    %v333 = vadd.f32 %v144, %v331
    %v334 = vxor.u32 %v333, 2147483648
    %v335 = vmul.f32 %v334, 1.442695
    %v336 = vpow.pop %v335
    %v337 = vadd.f32 %v336, 1.0
    %v338 = vrcp.pop %v337
    %v339 = vmul.f32 %v337, %v338
    %v340 = vsub.f32 1.0, %v339
    %v341 = vmul.f32 %v338, %v340
    %v342 = vadd.f32 %v338, %v341
    %vm343 = vweird.f32 %v337
    %vm344 = vweird.f32 %v338
    %vm345 = vmor %vm343, %vm344
    %v346 = vsel %vm345, %v338, %v342
    %v347 = vand.u32 2147483647, %v337
    %vm348 = vcmp.eq.f32.partialorder %v347, 8.507059e+37
    %v349 = vand.u32 %v337, 2147483648
    %v350 = vor.u32 1.1754944e-38, %v349
    %v351 = vsel %vm348, %v350, %v346
    %v352 = vmul.f32 1.0, %v351
    %v353 = vadd.f32 %v167, %v331
    %v354 = vxor.u32 %v353, 2147483648
    %v355 = vmul.f32 %v354, 1.442695
    %v356 = vpow.pop %v355
    %v357 = vadd.f32 %v356, 1.0
    %v358 = vrcp.pop %v357
    %v359 = vmul.f32 %v357, %v358
    %v360 = vsub.f32 1.0, %v359
    %v361 = vmul.f32 %v358, %v360
    %v362 = vadd.f32 %v358, %v361
    %vm363 = vweird.f32 %v357
    %vm364 = vweird.f32 %v358
    %vm365 = vmor %vm363, %vm364
    %v366 = vsel %vm365, %v358, %v362
    %v367 = vand.u32 2147483647, %v357
    %vm368 = vcmp.eq.f32.partialorder %v367, 8.507059e+37
    %v369 = vand.u32 %v357, 2147483648
    %v370 = vor.u32 1.1754944e-38, %v369
    %v371 = vsel %vm368, %v370, %v366
    %v372 = vmul.f32 1.0, %v371
    %v374 = vrot.slane %v326, 2
    %375 = vrot.lane.b32.xlu0 %v374, 64
    %v376 = vpop.permute.xlu0 %375
    %v378 = vmul.f32 %v352, %v376
    %v379 = vadd.f32 %v167, %v378
    %v380 = vtanh.pop %v379
    %v381 = vsub.f32 1.0, %v372
    %383 = vrot.lane.b32.xlu0 %v380, 64
    %v384 = vpop.permute.xlu0 %383
    %v386 = vmul.f32 %v381, %v384
    %v387 = vmul.f32 %v372, 0.0
    %v388 = vadd.f32 %v386, %v387
    %390 = vrot.lane.b32.xlu0 %v282, 64
    %v391 = vpop.permute.xlu0 %390
    %v392 = vsel %vm208, %v391, 0
    %394 = vmatpush.msra.mxu0 0.0
    %395 = vmatpush.msra.mxu0 0.0
    %396 = vmatpush.msra.mxu0 0.0
    %397 = vmatpush.msra.mxu0 0.0
    %398 = vmatpush.msra.mxu0 0.0
    %399 = vmatpush.msra.mxu0 0.0
    %400 = vmatpush.msra.mxu0 0.0
    %401 = vmatpush.msra.mxu0 0.0
    %402 = vmatpush.msra.mxu0 %v183
    %403 = vmatpush.msra.mxu0 %v181
    %404 = vmatpush.msra.mxu0 %v179
    %405 = vmatpush.msra.mxu0 %v177
    %406 = vmatpush.msra.mxu0 %v175
    %407 = vmatpush.msra.mxu0 %v173
    %408 = vmatpush.msra.mxu0 %v171
    %409 = vmatpush.msra.mxu0 %v169
    %410 = vmatmul.f32.gmra.mxu0 %v392
    %v411 = vpop.f32.mrf.mxu0
    %v412 = vadd.f32 %v204, %v411
    %413 = vdwg.mxu0
    %414 = vmatpush.msra.mxu0 0.0
    %415 = vmatpush.msra.mxu0 0.0
    %416 = vmatpush.msra.mxu0 0.0
    %417 = vmatpush.msra.mxu0 0.0
    %418 = vmatpush.msra.mxu0 0.0
    %419 = vmatpush.msra.mxu0 0.0
    %420 = vmatpush.msra.mxu0 0.0
    %421 = vmatpush.msra.mxu0 0.0
    %422 = vmatpush.msra.mxu0 %v184
    %423 = vmatpush.msra.mxu0 %v182
    %424 = vmatpush.msra.mxu0 %v180
    %425 = vmatpush.msra.mxu0 %v178
    %426 = vmatpush.msra.mxu0 %v176
    %427 = vmatpush.msra.mxu0 %v174
    %428 = vmatpush.msra.mxu0 %v172
    %429 = vmatpush.msra.mxu0 %v170
    %430 = vmatmul.f32.gmra.mxu0 %v392
    %v431 = vpop.f32.mrf.mxu0
    %v432 = vadd.f32 %v205, %v431
    %433 = vdwg.mxu0
    %v435 = vrot.slane %v412, 6
    %v437 = vadd.f32 %v118, %v435
    %v438 = vxor.u32 %v437, 2147483648
    %v439 = vmul.f32 %v438, 1.442695
    %v440 = vpow.pop %v439
    %v441 = vadd.f32 %v440, 1.0
    %v442 = vrcp.pop %v441
    %v443 = vmul.f32 %v441, %v442
    %v444 = vsub.f32 1.0, %v443
    %v445 = vmul.f32 %v442, %v444
    %v446 = vadd.f32 %v442, %v445
    %vm447 = vweird.f32 %v441
    %vm448 = vweird.f32 %v442
    %vm449 = vmor %vm447, %vm448
    %v450 = vsel %vm449, %v442, %v446
    %v451 = vand.u32 2147483647, %v441
    %vm452 = vcmp.eq.f32.partialorder %v451, 8.507059e+37
    %v453 = vand.u32 %v441, 2147483648
    %v454 = vor.u32 1.1754944e-38, %v453
    %v455 = vsel %vm452, %v454, %v450
    %v456 = vmul.f32 1.0, %v455
    %v458 = vrot.slane %v432, 6
    %v460 = vmul.f32 %v456, %v458
    %v461 = vadd.f32 %v141, %v460
    %v462 = vtanh.pop %v461
    %v463 = vsub.f32 1.0, %v456
    %465 = vrot.lane.b32.xlu0 %v462, 64
    %v466 = vpop.permute.xlu0 %465
    %v468 = vmul.f32 %v463, %v466
    %v469 = vrot.slane %v282, 6
    %v471 = vmul.f32 %v456, %v469
    %v472 = vadd.f32 %v468, %v471
    %v474 = vrot.slane %v388, 6
    %v475 = vsel %vm208, %v474, 0
    %477 = vmatpush.msra.mxu0 0.0
    %478 = vmatpush.msra.mxu0 0.0
    %479 = vmatpush.msra.mxu0 0.0
    %480 = vmatpush.msra.mxu0 0.0
    %481 = vmatpush.msra.mxu0 0.0
    %482 = vmatpush.msra.mxu0 0.0
    %483 = vmatpush.msra.mxu0 0.0
    %484 = vmatpush.msra.mxu0 0.0
    %485 = vmatpush.msra.mxu0 %v199
    %486 = vmatpush.msra.mxu0 %v197
    %487 = vmatpush.msra.mxu0 %v195
    %488 = vmatpush.msra.mxu0 %v193
    %489 = vmatpush.msra.mxu0 %v191
    %490 = vmatpush.msra.mxu0 %v189
    %491 = vmatpush.msra.mxu0 %v187
    %492 = vmatpush.msra.mxu0 %v185
    %493 = vmatmul.f32.gmra.mxu0 %v475
    %v494 = vpop.f32.mrf.mxu0
    %v495 = vadd.f32 %v284, %v494
    %496 = vdwg.mxu0
    %497 = vmatpush.msra.mxu0 0.0
    %498 = vmatpush.msra.mxu0 0.0
    %499 = vmatpush.msra.mxu0 0.0
    %500 = vmatpush.msra.mxu0 0.0
    %501 = vmatpush.msra.mxu0 0.0
    %502 = vmatpush.msra.mxu0 0.0
    %503 = vmatpush.msra.mxu0 0.0
    %504 = vmatpush.msra.mxu0 0.0
    %505 = vmatpush.msra.mxu0 %v200
    %506 = vmatpush.msra.mxu0 %v198
    %507 = vmatpush.msra.mxu0 %v196
    %508 = vmatpush.msra.mxu0 %v194
    %509 = vmatpush.msra.mxu0 %v192
    %510 = vmatpush.msra.mxu0 %v190
    %511 = vmatpush.msra.mxu0 %v188
    %512 = vmatpush.msra.mxu0 %v186
    %513 = vmatmul.f32.gmra.mxu0 %v475
    %v514 = vpop.f32.mrf.mxu0
    %v515 = vadd.f32 %v285, %v514
    %516 = vdwg.mxu0
    %v518 = vrot.slane %v495, 4
    %519 = vrot.lane.b32.xlu0 %v518, 64
    %v520 = vpop.permute.xlu0 %519
    %v522 = vadd.f32 %v144, %v520
    %v523 = vxor.u32 %v522, 2147483648
    %v524 = vmul.f32 %v523, 1.442695
    %v525 = vpow.pop %v524
    %v526 = vadd.f32 %v525, 1.0
    %v527 = vrcp.pop %v526
    %v528 = vmul.f32 %v526, %v527
    %v529 = vsub.f32 1.0, %v528
    %v530 = vmul.f32 %v527, %v529
    %v531 = vadd.f32 %v527, %v530
    %vm532 = vweird.f32 %v526
    %vm533 = vweird.f32 %v527
    %vm534 = vmor %vm532, %vm533
    %v535 = vsel %vm534, %v527, %v531
    %v536 = vand.u32 2147483647, %v526
    %vm537 = vcmp.eq.f32.partialorder %v536, 8.507059e+37
    %v538 = vand.u32 %v526, 2147483648
    %v539 = vor.u32 1.1754944e-38, %v538
    %v540 = vsel %vm537, %v539, %v535
    %v541 = vmul.f32 1.0, %v540
    %v542 = vadd.f32 %v167, %v520
    %v543 = vxor.u32 %v542, 2147483648
    %v544 = vmul.f32 %v543, 1.442695
    %v545 = vpow.pop %v544
    %v546 = vadd.f32 %v545, 1.0
    %v547 = vrcp.pop %v546
    %v548 = vmul.f32 %v546, %v547
    %v549 = vsub.f32 1.0, %v548
    %v550 = vmul.f32 %v547, %v549
    %v551 = vadd.f32 %v547, %v550
    %vm552 = vweird.f32 %v546
    %vm553 = vweird.f32 %v547
    %vm554 = vmor %vm552, %vm553
    %v555 = vsel %vm554, %v547, %v551
    %v556 = vand.u32 2147483647, %v546
    %vm557 = vcmp.eq.f32.partialorder %v556, 8.507059e+37
    %v558 = vand.u32 %v546, 2147483648
    %v559 = vor.u32 1.1754944e-38, %v558
    %v560 = vsel %vm557, %v559, %v555
    %v561 = vmul.f32 1.0, %v560
    %v563 = vrot.slane %v515, 4
    %564 = vrot.lane.b32.xlu0 %v563, 64
    %v565 = vpop.permute.xlu0 %564
    %v567 = vmul.f32 %v541, %v565
    %v568 = vadd.f32 %v167, %v567
    %v569 = vtanh.pop %v568
    %v570 = vsub.f32 1.0, %v561
    %572 = vrot.lane.b32.xlu0 %v569, 64
    %v573 = vpop.permute.xlu0 %572
    %v575 = vmul.f32 %v570, %v573
    %v576 = vrot.slane %v388, 2
    %v578 = vmul.f32 %v561, %v576
    %v579 = vadd.f32 %v575, %v578
    %v581 = vrot.slane %v472, 2
    %582 = vrot.lane.b32.xlu0 %v581, 64
    %v583 = vpop.permute.xlu0 %582
    %v584 = vsel %vm208, %v583, 0
    %586 = vmatpush.msra.mxu0 0.0
    %587 = vmatpush.msra.mxu0 0.0
    %588 = vmatpush.msra.mxu0 0.0
    %589 = vmatpush.msra.mxu0 0.0
    %590 = vmatpush.msra.mxu0 0.0
    %591 = vmatpush.msra.mxu0 0.0
    %592 = vmatpush.msra.mxu0 0.0
    %593 = vmatpush.msra.mxu0 0.0
    %594 = vmatpush.msra.mxu0 %v183
    %595 = vmatpush.msra.mxu0 %v181
    %596 = vmatpush.msra.mxu0 %v179
    %597 = vmatpush.msra.mxu0 %v177
    %598 = vmatpush.msra.mxu0 %v175
    %599 = vmatpush.msra.mxu0 %v173
    %600 = vmatpush.msra.mxu0 %v171
    %601 = vmatpush.msra.mxu0 %v169
    %602 = vmatmul.f32.gmra.mxu0 %v584
    %v603 = vpop.f32.mrf.mxu0
    %v604 = vadd.f32 %v204, %v603
    %605 = vdwg.mxu0
    %606 = vmatpush.msra.mxu0 0.0
    %607 = vmatpush.msra.mxu0 0.0
    %608 = vmatpush.msra.mxu0 0.0
    %609 = vmatpush.msra.mxu0 0.0
    %610 = vmatpush.msra.mxu0 0.0
    %611 = vmatpush.msra.mxu0 0.0
    %612 = vmatpush.msra.mxu0 0.0
    %613 = vmatpush.msra.mxu0 0.0
    %614 = vmatpush.msra.mxu0 %v184
    %615 = vmatpush.msra.mxu0 %v182
    %616 = vmatpush.msra.mxu0 %v180
    %617 = vmatpush.msra.mxu0 %v178
    %618 = vmatpush.msra.mxu0 %v176
    %619 = vmatpush.msra.mxu0 %v174
    %620 = vmatpush.msra.mxu0 %v172
    %621 = vmatpush.msra.mxu0 %v170
    %622 = vmatmul.f32.gmra.mxu0 %v584
    %v623 = vpop.f32.mrf.mxu0
    %v624 = vadd.f32 %v205, %v623
    %625 = vdwg.mxu0
    %v627 = vrot.slane %v604, 4
    %v629 = vadd.f32 %v118, %v627
    %v630 = vxor.u32 %v629, 2147483648
    %v631 = vmul.f32 %v630, 1.442695
    %v632 = vpow.pop %v631
    %v633 = vadd.f32 %v632, 1.0
    %v634 = vrcp.pop %v633
    %v635 = vmul.f32 %v633, %v634
    %v636 = vsub.f32 1.0, %v635
    %v637 = vmul.f32 %v634, %v636
    %v638 = vadd.f32 %v634, %v637
    %vm639 = vweird.f32 %v633
    %vm640 = vweird.f32 %v634
    %vm641 = vmor %vm639, %vm640
    %v642 = vsel %vm641, %v634, %v638
    %v643 = vand.u32 2147483647, %v633
    %vm644 = vcmp.eq.f32.partialorder %v643, 8.507059e+37
    %v645 = vand.u32 %v633, 2147483648
    %v646 = vor.u32 1.1754944e-38, %v645
    %v647 = vsel %vm644, %v646, %v642
    %v648 = vmul.f32 1.0, %v647
    %v650 = vrot.slane %v624, 4
    %v652 = vmul.f32 %v648, %v650
    %v653 = vadd.f32 %v141, %v652
    %v654 = vtanh.pop %v653
    %v655 = vsub.f32 1.0, %v648
    %657 = vrot.lane.b32.xlu0 %v654, 64
    %v658 = vpop.permute.xlu0 %657
    %v660 = vmul.f32 %v655, %v658
    %v661 = vrot.slane %v472, 6
    %v663 = vmul.f32 %v648, %v661
    %v664 = vadd.f32 %v660, %v663
    %v666 = vrot.slane %v579, 4
    %v667 = vsel %vm208, %v666, 0
    %669 = vmatpush.msra.mxu0 0.0
    %670 = vmatpush.msra.mxu0 0.0
    %671 = vmatpush.msra.mxu0 0.0
    %672 = vmatpush.msra.mxu0 0.0
    %673 = vmatpush.msra.mxu0 0.0
    %674 = vmatpush.msra.mxu0 0.0
    %675 = vmatpush.msra.mxu0 0.0
    %676 = vmatpush.msra.mxu0 0.0
    %677 = vmatpush.msra.mxu0 %v199
    %678 = vmatpush.msra.mxu0 %v197
    %679 = vmatpush.msra.mxu0 %v195
    %680 = vmatpush.msra.mxu0 %v193
    %681 = vmatpush.msra.mxu0 %v191
    %682 = vmatpush.msra.mxu0 %v189
    %683 = vmatpush.msra.mxu0 %v187
    %684 = vmatpush.msra.mxu0 %v185
    %685 = vmatmul.f32.gmra.mxu0 %v667
    %v686 = vpop.f32.mrf.mxu0
    %v687 = vadd.f32 %v284, %v686
    %688 = vdwg.mxu0
    %689 = vmatpush.msra.mxu0 0.0
    %690 = vmatpush.msra.mxu0 0.0
    %691 = vmatpush.msra.mxu0 0.0
    %692 = vmatpush.msra.mxu0 0.0
    %693 = vmatpush.msra.mxu0 0.0
    %694 = vmatpush.msra.mxu0 0.0
    %695 = vmatpush.msra.mxu0 0.0
    %696 = vmatpush.msra.mxu0 0.0
    %697 = vmatpush.msra.mxu0 %v200
    %698 = vmatpush.msra.mxu0 %v198
    %699 = vmatpush.msra.mxu0 %v196
    %700 = vmatpush.msra.mxu0 %v194
    %701 = vmatpush.msra.mxu0 %v192
    %702 = vmatpush.msra.mxu0 %v190
    %703 = vmatpush.msra.mxu0 %v188
    %704 = vmatpush.msra.mxu0 %v186
    %705 = vmatmul.f32.gmra.mxu0 %v667
    %v706 = vpop.f32.mrf.mxu0
    %v707 = vadd.f32 %v285, %v706
    %708 = vdwg.mxu0
    %v710 = vrot.slane %v687, 6
    %711 = vrot.lane.b32.xlu0 %v710, 64
    %v712 = vpop.permute.xlu0 %711
    %v714 = vadd.f32 %v144, %v712
    %v715 = vxor.u32 %v714, 2147483648
    %v716 = vmul.f32 %v715, 1.442695
    %v717 = vpow.pop %v716
    %v718 = vadd.f32 %v717, 1.0
    %v719 = vrcp.pop %v718
    %v720 = vmul.f32 %v718, %v719
    %v721 = vsub.f32 1.0, %v720
    %v722 = vmul.f32 %v719, %v721
    %v723 = vadd.f32 %v719, %v722
    %vm724 = vweird.f32 %v718
    %vm725 = vweird.f32 %v719
    %vm726 = vmor %vm724, %vm725
    %v727 = vsel %vm726, %v719, %v723
    %v728 = vand.u32 2147483647, %v718
    %vm729 = vcmp.eq.f32.partialorder %v728, 8.507059e+37
    %v730 = vand.u32 %v718, 2147483648
    %v731 = vor.u32 1.1754944e-38, %v730
    %v732 = vsel %vm729, %v731, %v727
    %v733 = vmul.f32 1.0, %v732
    %v734 = vadd.f32 %v167, %v712
    %v735 = vxor.u32 %v734, 2147483648
    %v736 = vmul.f32 %v735, 1.442695
    %v737 = vpow.pop %v736
    %v738 = vadd.f32 %v737, 1.0
    %v739 = vrcp.pop %v738
    %v740 = vmul.f32 %v738, %v739
    %v741 = vsub.f32 1.0, %v740
    %v742 = vmul.f32 %v739, %v741
    %v743 = vadd.f32 %v739, %v742
    %vm744 = vweird.f32 %v738
    %vm745 = vweird.f32 %v739
    %vm746 = vmor %vm744, %vm745
    %v747 = vsel %vm746, %v739, %v743
    %v748 = vand.u32 2147483647, %v738
    %vm749 = vcmp.eq.f32.partialorder %v748, 8.507059e+37
    %v750 = vand.u32 %v738, 2147483648
    %v751 = vor.u32 1.1754944e-38, %v750
    %v752 = vsel %vm749, %v751, %v747
    %v753 = vmul.f32 1.0, %v752
    %v755 = vrot.slane %v707, 6
    %756 = vrot.lane.b32.xlu0 %v755, 64
    %v757 = vpop.permute.xlu0 %756
    %v759 = vmul.f32 %v733, %v757
    %v760 = vadd.f32 %v167, %v759
    %v761 = vtanh.pop %v760
    %v762 = vsub.f32 1.0, %v753
    %764 = vrot.lane.b32.xlu0 %v761, 64
    %v765 = vpop.permute.xlu0 %764
    %v767 = vmul.f32 %v762, %v765
    %v768 = vrot.slane %v579, 2
    %v770 = vmul.f32 %v753, %v768
    %v771 = vadd.f32 %v767, %v770
    %v773 = vrot.slane %v664, 4
    %774 = vrot.lane.b32.xlu0 %v773, 64
    %v775 = vpop.permute.xlu0 %774
    %v776 = vsel %vm208, %v775, 0
    %778 = vmatpush.msra.mxu0 0.0
    %779 = vmatpush.msra.mxu0 0.0
    %780 = vmatpush.msra.mxu0 0.0
    %781 = vmatpush.msra.mxu0 0.0
    %782 = vmatpush.msra.mxu0 0.0
    %783 = vmatpush.msra.mxu0 0.0
    %784 = vmatpush.msra.mxu0 0.0
    %785 = vmatpush.msra.mxu0 0.0
    %786 = vmatpush.msra.mxu0 %v183
    %787 = vmatpush.msra.mxu0 %v181
    %788 = vmatpush.msra.mxu0 %v179
    %789 = vmatpush.msra.mxu0 %v177
    %790 = vmatpush.msra.mxu0 %v175
    %791 = vmatpush.msra.mxu0 %v173
    %792 = vmatpush.msra.mxu0 %v171
    %793 = vmatpush.msra.mxu0 %v169
    %794 = vmatmul.f32.gmra.mxu0 %v776
    %v795 = vpop.f32.mrf.mxu0
    %v796 = vadd.f32 %v204, %v795
    %797 = vdwg.mxu0
    %798 = vmatpush.msra.mxu0 0.0
    %799 = vmatpush.msra.mxu0 0.0
    %800 = vmatpush.msra.mxu0 0.0
    %801 = vmatpush.msra.mxu0 0.0
    %802 = vmatpush.msra.mxu0 0.0
    %803 = vmatpush.msra.mxu0 0.0
    %804 = vmatpush.msra.mxu0 0.0
    %805 = vmatpush.msra.mxu0 0.0
    %806 = vmatpush.msra.mxu0 %v184
    %807 = vmatpush.msra.mxu0 %v182
    %808 = vmatpush.msra.mxu0 %v180
    %809 = vmatpush.msra.mxu0 %v178
    %810 = vmatpush.msra.mxu0 %v176
    %811 = vmatpush.msra.mxu0 %v174
    %812 = vmatpush.msra.mxu0 %v172
    %813 = vmatpush.msra.mxu0 %v170
    %814 = vmatmul.f32.gmra.mxu0 %v776
    %v815 = vpop.f32.mrf.mxu0
    %v816 = vadd.f32 %v205, %v815
    %817 = vdwg.mxu0
    %v819 = vrot.slane %v796, 2
    %v821 = vadd.f32 %v118, %v819
    %v822 = vxor.u32 %v821, 2147483648
    %v823 = vmul.f32 %v822, 1.442695
    %v824 = vpow.pop %v823
    %v825 = vadd.f32 %v824, 1.0
    %v826 = vrcp.pop %v825
    %v827 = vmul.f32 %v825, %v826
    %v828 = vsub.f32 1.0, %v827
    %v829 = vmul.f32 %v826, %v828
    %v830 = vadd.f32 %v826, %v829
    %vm831 = vweird.f32 %v825
    %vm832 = vweird.f32 %v826
    %vm833 = vmor %vm831, %vm832
    %v834 = vsel %vm833, %v826, %v830
    %v835 = vand.u32 2147483647, %v825
    %vm836 = vcmp.eq.f32.partialorder %v835, 8.507059e+37
    %v837 = vand.u32 %v825, 2147483648
    %v838 = vor.u32 1.1754944e-38, %v837
    %v839 = vsel %vm836, %v838, %v834
    %v840 = vmul.f32 1.0, %v839
    %v842 = vrot.slane %v816, 2
    %v844 = vmul.f32 %v840, %v842
    %v845 = vadd.f32 %v141, %v844
    %v846 = vtanh.pop %v845
    %v847 = vsub.f32 1.0, %v840
    %849 = vrot.lane.b32.xlu0 %v846, 64
    %v850 = vpop.permute.xlu0 %849
    %v852 = vmul.f32 %v847, %v850
    %v853 = vrot.slane %v664, 6
    %v855 = vmul.f32 %v840, %v853
    %v856 = vadd.f32 %v852, %v855
    %v858 = vrot.slane %v771, 2
    %v859 = vsel %vm208, %v858, 0
    %861 = vmatpush.msra.mxu0 0.0
    %862 = vmatpush.msra.mxu0 0.0
    %863 = vmatpush.msra.mxu0 0.0
    %864 = vmatpush.msra.mxu0 0.0
    %865 = vmatpush.msra.mxu0 0.0
    %866 = vmatpush.msra.mxu0 0.0
    %867 = vmatpush.msra.mxu0 0.0
    %868 = vmatpush.msra.mxu0 0.0
    %869 = vmatpush.msra.mxu0 %v199
    %870 = vmatpush.msra.mxu0 %v197
    %871 = vmatpush.msra.mxu0 %v195
    %872 = vmatpush.msra.mxu0 %v193
    %873 = vmatpush.msra.mxu0 %v191
    %874 = vmatpush.msra.mxu0 %v189
    %875 = vmatpush.msra.mxu0 %v187
    %876 = vmatpush.msra.mxu0 %v185
    %877 = vmatmul.f32.gmra.mxu0 %v859
    %v878 = vpop.f32.mrf.mxu0
    %v879 = vadd.f32 %v284, %v878
    %880 = vdwg.mxu0
    %881 = vmatpush.msra.mxu0 0.0
    %882 = vmatpush.msra.mxu0 0.0
    %883 = vmatpush.msra.mxu0 0.0
    %884 = vmatpush.msra.mxu0 0.0
    %885 = vmatpush.msra.mxu0 0.0
    %886 = vmatpush.msra.mxu0 0.0
    %887 = vmatpush.msra.mxu0 0.0
    %888 = vmatpush.msra.mxu0 0.0
    %889 = vmatpush.msra.mxu0 %v200
    %890 = vmatpush.msra.mxu0 %v198
    %891 = vmatpush.msra.mxu0 %v196
    %892 = vmatpush.msra.mxu0 %v194
    %893 = vmatpush.msra.mxu0 %v192
    %894 = vmatpush.msra.mxu0 %v190
    %895 = vmatpush.msra.mxu0 %v188
    %896 = vmatpush.msra.mxu0 %v186
    %897 = vmatmul.f32.gmra.mxu0 %v859
    %v898 = vpop.f32.mrf.mxu0
    %v899 = vadd.f32 %v285, %v898
    %900 = vdwg.mxu0
    %902 = vrot.lane.b32.xlu0 %v879, 64
    %v903 = vpop.permute.xlu0 %902
    %v905 = vadd.f32 %v144, %v903
    %v906 = vxor.u32 %v905, 2147483648
    %v907 = vmul.f32 %v906, 1.442695
    %v908 = vpow.pop %v907
    %v909 = vadd.f32 %v908, 1.0
    %v910 = vrcp.pop %v909
    %v911 = vmul.f32 %v909, %v910
    %v912 = vsub.f32 1.0, %v911
    %v913 = vmul.f32 %v910, %v912
    %v914 = vadd.f32 %v910, %v913
    %vm915 = vweird.f32 %v909
    %vm916 = vweird.f32 %v910
    %vm917 = vmor %vm915, %vm916
    %v918 = vsel %vm917, %v910, %v914
    %v919 = vand.u32 2147483647, %v909
    %vm920 = vcmp.eq.f32.partialorder %v919, 8.507059e+37
    %v921 = vand.u32 %v909, 2147483648
    %v922 = vor.u32 1.1754944e-38, %v921
    %v923 = vsel %vm920, %v922, %v918
    %v924 = vmul.f32 1.0, %v923
    %v925 = vadd.f32 %v167, %v903
    %v926 = vxor.u32 %v925, 2147483648
    %v927 = vmul.f32 %v926, 1.442695
    %v928 = vpow.pop %v927
    %v929 = vadd.f32 %v928, 1.0
    %v930 = vrcp.pop %v929
    %v931 = vmul.f32 %v929, %v930
    %v932 = vsub.f32 1.0, %v931
    %v933 = vmul.f32 %v930, %v932
    %v934 = vadd.f32 %v930, %v933
    %vm935 = vweird.f32 %v929
    %vm936 = vweird.f32 %v930
    %vm937 = vmor %vm935, %vm936
    %v938 = vsel %vm937, %v930, %v934
    %v939 = vand.u32 2147483647, %v929
    %vm940 = vcmp.eq.f32.partialorder %v939, 8.507059e+37
    %v941 = vand.u32 %v929, 2147483648
    %v942 = vor.u32 1.1754944e-38, %v941
    %v943 = vsel %vm940, %v942, %v938
    %v944 = vmul.f32 1.0, %v943
    %946 = vrot.lane.b32.xlu0 %v899, 64
    %v947 = vpop.permute.xlu0 %946
    %v949 = vmul.f32 %v924, %v947
    %v950 = vadd.f32 %v167, %v949
    %v951 = vtanh.pop %v950
    %v952 = vsub.f32 1.0, %v944
    %954 = vrot.lane.b32.xlu0 %v951, 64
    %v955 = vpop.permute.xlu0 %954
    %v957 = vmul.f32 %v952, %v955
    %v959 = vmul.f32 %v944, %v858
    %v960 = vadd.f32 %v957, %v959
    %v962 = vrot.slane %v856, 6
    %963 = vrot.lane.b32.xlu0 %v962, 64
    %v964 = vpop.permute.xlu0 %963
    %v965 = vsel %vm208, %v964, 0
    %967 = vmatpush.msra.mxu0 0.0
    %968 = vmatpush.msra.mxu0 0.0
    %969 = vmatpush.msra.mxu0 0.0
    %970 = vmatpush.msra.mxu0 0.0
    %971 = vmatpush.msra.mxu0 0.0
    %972 = vmatpush.msra.mxu0 0.0
    %973 = vmatpush.msra.mxu0 0.0
    %974 = vmatpush.msra.mxu0 0.0
    %975 = vmatpush.msra.mxu0 %v183
    %976 = vmatpush.msra.mxu0 %v181
    %977 = vmatpush.msra.mxu0 %v179
    %978 = vmatpush.msra.mxu0 %v177
    %979 = vmatpush.msra.mxu0 %v175
    %980 = vmatpush.msra.mxu0 %v173
    %981 = vmatpush.msra.mxu0 %v171
    %982 = vmatpush.msra.mxu0 %v169
    %983 = vmatmul.f32.gmra.mxu0 %v965
    %v984 = vpop.f32.mrf.mxu0
    %v985 = vadd.f32 %v204, %v984
    %986 = vdwg.mxu0
    %987 = vmatpush.msra.mxu0 0.0
    %988 = vmatpush.msra.mxu0 0.0
    %989 = vmatpush.msra.mxu0 0.0
    %990 = vmatpush.msra.mxu0 0.0
    %991 = vmatpush.msra.mxu0 0.0
    %992 = vmatpush.msra.mxu0 0.0
    %993 = vmatpush.msra.mxu0 0.0
    %994 = vmatpush.msra.mxu0 0.0
    %995 = vmatpush.msra.mxu0 %v184
    %996 = vmatpush.msra.mxu0 %v182
    %997 = vmatpush.msra.mxu0 %v180
    %998 = vmatpush.msra.mxu0 %v178
    %999 = vmatpush.msra.mxu0 %v176
    %1000 = vmatpush.msra.mxu0 %v174
    %1001 = vmatpush.msra.mxu0 %v172
    %1002 = vmatpush.msra.mxu0 %v170
    %1003 = vmatmul.f32.gmra.mxu0 %v965
    %v1004 = vpop.f32.mrf.mxu0
    %v1005 = vadd.f32 %v205, %v1004
    %1006 = vdwg.mxu0
    %v1007 = vadd.f32 %v121, %v985
    %v1008 = vxor.u32 %v1007, 2147483648
    %v1009 = vmul.f32 %v1008, 1.442695
    %v1010 = vpow.pop %v1009
    %v1011 = vadd.f32 %v1010, 1.0
    %v1012 = vrcp.pop %v1011
    %v1013 = vmul.f32 %v1011, %v1012
    %v1014 = vsub.f32 1.0, %v1013
    %v1015 = vmul.f32 %v1012, %v1014
    %v1016 = vadd.f32 %v1012, %v1015
    %vm1017 = vweird.f32 %v1011
    %vm1018 = vweird.f32 %v1012
    %vm1019 = vmor %vm1017, %vm1018
    %v1020 = vsel %vm1019, %v1012, %v1016
    %v1021 = vand.u32 2147483647, %v1011
    %vm1022 = vcmp.eq.f32.partialorder %v1021, 8.507059e+37
    %v1023 = vand.u32 %v1011, 2147483648
    %v1024 = vor.u32 1.1754944e-38, %v1023
    %v1025 = vsel %vm1022, %v1024, %v1020
    %v1026 = vmul.f32 1.0, %v1025
    %v1027 = vmul.f32 %v1026, %v1005
    %v1028 = vadd.f32 %v144, %v1027
    %v1029 = vtanh.pop %v1028
    %v1030 = vsub.f32 1.0, %v1026
    %1032 = vrot.lane.b32.xlu0 %v1029, 64
    %v1033 = vpop.permute.xlu0 %1032
    %v1035 = vmul.f32 %v1030, %v1033
    %v1037 = vmul.f32 %v1026, %v962
    %v1038 = vadd.f32 %v1035, %v1037
    %v1040 = vsel %vm208, %v960, 0
    %1042 = vmatpush.msra.mxu0 0.0
    %1043 = vmatpush.msra.mxu0 0.0
    %1044 = vmatpush.msra.mxu0 0.0
    %1045 = vmatpush.msra.mxu0 0.0
    %1046 = vmatpush.msra.mxu0 0.0
    %1047 = vmatpush.msra.mxu0 0.0
    %1048 = vmatpush.msra.mxu0 0.0
    %1049 = vmatpush.msra.mxu0 0.0
    %1050 = vmatpush.msra.mxu0 %v199
    %1051 = vmatpush.msra.mxu0 %v197
    %1052 = vmatpush.msra.mxu0 %v195
    %1053 = vmatpush.msra.mxu0 %v193
    %1054 = vmatpush.msra.mxu0 %v191
    %1055 = vmatpush.msra.mxu0 %v189
    %1056 = vmatpush.msra.mxu0 %v187
    %1057 = vmatpush.msra.mxu0 %v185
    %1058 = vmatmul.f32.gmra.mxu0 %v1040
    %v1059 = vpop.f32.mrf.mxu0
    %v1060 = vadd.f32 %v284, %v1059
    %1061 = vdwg.mxu0
    %1062 = vmatpush.msra.mxu0 0.0
    %1063 = vmatpush.msra.mxu0 0.0
    %1064 = vmatpush.msra.mxu0 0.0
    %1065 = vmatpush.msra.mxu0 0.0
    %1066 = vmatpush.msra.mxu0 0.0
    %1067 = vmatpush.msra.mxu0 0.0
    %1068 = vmatpush.msra.mxu0 0.0
    %1069 = vmatpush.msra.mxu0 0.0
    %1070 = vmatpush.msra.mxu0 %v200
    %1071 = vmatpush.msra.mxu0 %v198
    %1072 = vmatpush.msra.mxu0 %v196
    %1073 = vmatpush.msra.mxu0 %v194
    %1074 = vmatpush.msra.mxu0 %v192
    %1075 = vmatpush.msra.mxu0 %v190
    %1076 = vmatpush.msra.mxu0 %v188
    %1077 = vmatpush.msra.mxu0 %v186
    %1078 = vmatmul.f32.gmra.mxu0 %v1040
    %v1079 = vpop.f32.mrf.mxu0
    %v1080 = vadd.f32 %v285, %v1079
    %1081 = vdwg.mxu0
    %v1083 = vrot.slane %v1060, 2
    %1084 = vrot.lane.b32.xlu0 %v1083, 64
    %v1085 = vpop.permute.xlu0 %1084
    %v1087 = vadd.f32 %v141, %v1085
    %v1088 = vxor.u32 %v1087, 2147483648
    %v1089 = vmul.f32 %v1088, 1.442695
    %v1090 = vpow.pop %v1089
    %v1091 = vadd.f32 %v1090, 1.0
    %v1092 = vrcp.pop %v1091
    %v1093 = vmul.f32 %v1091, %v1092
    %v1094 = vsub.f32 1.0, %v1093
    %v1095 = vmul.f32 %v1092, %v1094
    %v1096 = vadd.f32 %v1092, %v1095
    %vm1097 = vweird.f32 %v1091
    %vm1098 = vweird.f32 %v1092
    %vm1099 = vmor %vm1097, %vm1098
    %v1100 = vsel %vm1099, %v1092, %v1096
    %v1101 = vand.u32 2147483647, %v1091
    %vm1102 = vcmp.eq.f32.partialorder %v1101, 8.507059e+37
    %v1103 = vand.u32 %v1091, 2147483648
    %v1104 = vor.u32 1.1754944e-38, %v1103
    %v1105 = vsel %vm1102, %v1104, %v1100
    %v1106 = vmul.f32 1.0, %v1105
    %v1107 = vadd.f32 %v164, %v1085
    %v1108 = vxor.u32 %v1107, 2147483648
    %v1109 = vmul.f32 %v1108, 1.442695
    %v1110 = vpow.pop %v1109
    %v1111 = vadd.f32 %v1110, 1.0
    %v1112 = vrcp.pop %v1111
    %v1113 = vmul.f32 %v1111, %v1112
    %v1114 = vsub.f32 1.0, %v1113
    %v1115 = vmul.f32 %v1112, %v1114
    %v1116 = vadd.f32 %v1112, %v1115
    %vm1117 = vweird.f32 %v1111
    %vm1118 = vweird.f32 %v1112
    %vm1119 = vmor %vm1117, %vm1118
    %v1120 = vsel %vm1119, %v1112, %v1116
    %v1121 = vand.u32 2147483647, %v1111
    %vm1122 = vcmp.eq.f32.partialorder %v1121, 8.507059e+37
    %v1123 = vand.u32 %v1111, 2147483648
    %v1124 = vor.u32 1.1754944e-38, %v1123
    %v1125 = vsel %vm1122, %v1124, %v1120
    %v1126 = vmul.f32 1.0, %v1125
    %v1128 = vrot.slane %v1080, 2
    %1129 = vrot.lane.b32.xlu0 %v1128, 64
    %v1130 = vpop.permute.xlu0 %1129
    %v1132 = vmul.f32 %v1106, %v1130
    %v1133 = vadd.f32 %v164, %v1132
    %v1134 = vtanh.pop %v1133
    %v1135 = vsub.f32 1.0, %v1126
    %1137 = vrot.lane.b32.xlu0 %v1134, 64
    %v1138 = vpop.permute.xlu0 %1137
    %v1140 = vmul.f32 %v1135, %v1138
    %v1141 = vrot.slane %v960, 2
    %v1143 = vmul.f32 %v1126, %v1141
    %v1144 = vadd.f32 %v1140, %v1143
    %1146 = vrot.lane.b32.xlu0 %v1038, 64
    %v1147 = vpop.permute.xlu0 %1146
    %v1148 = vsel %vm208, %v1147, 0
    %1150 = vmatpush.msra.mxu0 0.0
    %1151 = vmatpush.msra.mxu0 0.0
    %1152 = vmatpush.msra.mxu0 0.0
    %1153 = vmatpush.msra.mxu0 0.0
    %1154 = vmatpush.msra.mxu0 0.0
    %1155 = vmatpush.msra.mxu0 0.0
    %1156 = vmatpush.msra.mxu0 0.0
    %1157 = vmatpush.msra.mxu0 0.0
    %1158 = vmatpush.msra.mxu0 %v183
    %1159 = vmatpush.msra.mxu0 %v181
    %1160 = vmatpush.msra.mxu0 %v179
    %1161 = vmatpush.msra.mxu0 %v177
    %1162 = vmatpush.msra.mxu0 %v175
    %1163 = vmatpush.msra.mxu0 %v173
    %1164 = vmatpush.msra.mxu0 %v171
    %1165 = vmatpush.msra.mxu0 %v169
    %1166 = vmatmul.f32.gmra.mxu0 %v1148
    %v1167 = vpop.f32.mrf.mxu0
    %v1168 = vadd.f32 %v204, %v1167
    %1169 = vdwg.mxu0
    %1170 = vmatpush.msra.mxu0 0.0
    %1171 = vmatpush.msra.mxu0 0.0
    %1172 = vmatpush.msra.mxu0 0.0
    %1173 = vmatpush.msra.mxu0 0.0
    %1174 = vmatpush.msra.mxu0 0.0
    %1175 = vmatpush.msra.mxu0 0.0
    %1176 = vmatpush.msra.mxu0 0.0
    %1177 = vmatpush.msra.mxu0 0.0
    %1178 = vmatpush.msra.mxu0 %v184
    %1179 = vmatpush.msra.mxu0 %v182
    %1180 = vmatpush.msra.mxu0 %v180
    %1181 = vmatpush.msra.mxu0 %v178
    %1182 = vmatpush.msra.mxu0 %v176
    %1183 = vmatpush.msra.mxu0 %v174
    %1184 = vmatpush.msra.mxu0 %v172
    %1185 = vmatpush.msra.mxu0 %v170
    %1186 = vmatmul.f32.gmra.mxu0 %v1148
    %v1187 = vpop.f32.mrf.mxu0
    %v1188 = vadd.f32 %v205, %v1187
    %1189 = vdwg.mxu0
    %v1191 = vrot.slane %v1168, 6
    %v1193 = vadd.f32 %v121, %v1191
    %v1194 = vxor.u32 %v1193, 2147483648
    %v1195 = vmul.f32 %v1194, 1.442695
    %v1196 = vpow.pop %v1195
    %v1197 = vadd.f32 %v1196, 1.0
    %v1198 = vrcp.pop %v1197
    %v1199 = vmul.f32 %v1197, %v1198
    %v1200 = vsub.f32 1.0, %v1199
    %v1201 = vmul.f32 %v1198, %v1200
    %v1202 = vadd.f32 %v1198, %v1201
    %vm1203 = vweird.f32 %v1197
    %vm1204 = vweird.f32 %v1198
    %vm1205 = vmor %vm1203, %vm1204
    %v1206 = vsel %vm1205, %v1198, %v1202
    %v1207 = vand.u32 2147483647, %v1197
    %vm1208 = vcmp.eq.f32.partialorder %v1207, 8.507059e+37
    %v1209 = vand.u32 %v1197, 2147483648
    %v1210 = vor.u32 1.1754944e-38, %v1209
    %v1211 = vsel %vm1208, %v1210, %v1206
    %v1212 = vmul.f32 1.0, %v1211
    %v1214 = vrot.slane %v1188, 6
    %v1216 = vmul.f32 %v1212, %v1214
    %v1217 = vadd.f32 %v144, %v1216
    %v1218 = vtanh.pop %v1217
    %v1219 = vsub.f32 1.0, %v1212
    %1221 = vrot.lane.b32.xlu0 %v1218, 64
    %v1222 = vpop.permute.xlu0 %1221
    %v1224 = vmul.f32 %v1219, %v1222
    %v1225 = vrot.slane %v1038, 6
    %v1227 = vmul.f32 %v1212, %v1225
    %v1228 = vadd.f32 %v1224, %v1227
    %v1230 = vrot.slane %v1144, 6
    %v1231 = vsel %vm208, %v1230, 0
    %1233 = vmatpush.msra.mxu0 0.0
    %1234 = vmatpush.msra.mxu0 0.0
    %1235 = vmatpush.msra.mxu0 0.0
    %1236 = vmatpush.msra.mxu0 0.0
    %1237 = vmatpush.msra.mxu0 0.0
    %1238 = vmatpush.msra.mxu0 0.0
    %1239 = vmatpush.msra.mxu0 0.0
    %1240 = vmatpush.msra.mxu0 0.0
    %1241 = vmatpush.msra.mxu0 %v199
    %1242 = vmatpush.msra.mxu0 %v197
    %1243 = vmatpush.msra.mxu0 %v195
    %1244 = vmatpush.msra.mxu0 %v193
    %1245 = vmatpush.msra.mxu0 %v191
    %1246 = vmatpush.msra.mxu0 %v189
    %1247 = vmatpush.msra.mxu0 %v187
    %1248 = vmatpush.msra.mxu0 %v185
    %1249 = vmatmul.f32.gmra.mxu0 %v1231
    %v1250 = vpop.f32.mrf.mxu0
    %v1251 = vadd.f32 %v284, %v1250
    %1252 = vdwg.mxu0
    %1253 = vmatpush.msra.mxu0 0.0
    %1254 = vmatpush.msra.mxu0 0.0
    %1255 = vmatpush.msra.mxu0 0.0
    %1256 = vmatpush.msra.mxu0 0.0
    %1257 = vmatpush.msra.mxu0 0.0
    %1258 = vmatpush.msra.mxu0 0.0
    %1259 = vmatpush.msra.mxu0 0.0
    %1260 = vmatpush.msra.mxu0 0.0
    %1261 = vmatpush.msra.mxu0 %v200
    %1262 = vmatpush.msra.mxu0 %v198
    %1263 = vmatpush.msra.mxu0 %v196
    %1264 = vmatpush.msra.mxu0 %v194
    %1265 = vmatpush.msra.mxu0 %v192
    %1266 = vmatpush.msra.mxu0 %v190
    %1267 = vmatpush.msra.mxu0 %v188
    %1268 = vmatpush.msra.mxu0 %v186
    %1269 = vmatmul.f32.gmra.mxu0 %v1231
    %v1270 = vpop.f32.mrf.mxu0
    %v1271 = vadd.f32 %v285, %v1270
    %1272 = vdwg.mxu0
    %v1274 = vrot.slane %v1251, 4
    %1275 = vrot.lane.b32.xlu0 %v1274, 64
    %v1276 = vpop.permute.xlu0 %1275
    %v1278 = vadd.f32 %v141, %v1276
    %v1279 = vxor.u32 %v1278, 2147483648
    %v1280 = vmul.f32 %v1279, 1.442695
    %v1281 = vpow.pop %v1280
    %v1282 = vadd.f32 %v1281, 1.0
    %v1283 = vrcp.pop %v1282
    %v1284 = vmul.f32 %v1282, %v1283
    %v1285 = vsub.f32 1.0, %v1284
    %v1286 = vmul.f32 %v1283, %v1285
    %v1287 = vadd.f32 %v1283, %v1286
    %vm1288 = vweird.f32 %v1282
    %vm1289 = vweird.f32 %v1283
    %vm1290 = vmor %vm1288, %vm1289
    %v1291 = vsel %vm1290, %v1283, %v1287
    %v1292 = vand.u32 2147483647, %v1282
    %vm1293 = vcmp.eq.f32.partialorder %v1292, 8.507059e+37
    %v1294 = vand.u32 %v1282, 2147483648
    %v1295 = vor.u32 1.1754944e-38, %v1294
    %v1296 = vsel %vm1293, %v1295, %v1291
    %v1297 = vmul.f32 1.0, %v1296
    %v1298 = vadd.f32 %v164, %v1276
    %v1299 = vxor.u32 %v1298, 2147483648
    %v1300 = vmul.f32 %v1299, 1.442695
    %v1301 = vpow.pop %v1300
    %v1302 = vadd.f32 %v1301, 1.0
    %v1303 = vrcp.pop %v1302
    %v1304 = vmul.f32 %v1302, %v1303
    %v1305 = vsub.f32 1.0, %v1304
    %v1306 = vmul.f32 %v1303, %v1305
    %v1307 = vadd.f32 %v1303, %v1306
    %vm1308 = vweird.f32 %v1302
    %vm1309 = vweird.f32 %v1303
    %vm1310 = vmor %vm1308, %vm1309
    %v1311 = vsel %vm1310, %v1303, %v1307
    %v1312 = vand.u32 2147483647, %v1302
    %vm1313 = vcmp.eq.f32.partialorder %v1312, 8.507059e+37
    %v1314 = vand.u32 %v1302, 2147483648
    %v1315 = vor.u32 1.1754944e-38, %v1314
    %v1316 = vsel %vm1313, %v1315, %v1311
    %v1317 = vmul.f32 1.0, %v1316
    %v1319 = vrot.slane %v1271, 4
    %1320 = vrot.lane.b32.xlu0 %v1319, 64
    %v1321 = vpop.permute.xlu0 %1320
    %v1323 = vmul.f32 %v1297, %v1321
    %v1324 = vadd.f32 %v164, %v1323
    %v1325 = vtanh.pop %v1324
    %v1326 = vsub.f32 1.0, %v1317
    %1328 = vrot.lane.b32.xlu0 %v1325, 64
    %v1329 = vpop.permute.xlu0 %1328
    %v1331 = vmul.f32 %v1326, %v1329
    %v1332 = vrot.slane %v1144, 2
    %v1334 = vmul.f32 %v1317, %v1332
    %v1335 = vadd.f32 %v1331, %v1334
    %v1337 = vrot.slane %v1228, 2
    %1338 = vrot.lane.b32.xlu0 %v1337, 64
    %v1339 = vpop.permute.xlu0 %1338
    %v1340 = vsel %vm208, %v1339, 0
    %1342 = vmatpush.msra.mxu0 0.0
    %1343 = vmatpush.msra.mxu0 0.0
    %1344 = vmatpush.msra.mxu0 0.0
    %1345 = vmatpush.msra.mxu0 0.0
    %1346 = vmatpush.msra.mxu0 0.0
    %1347 = vmatpush.msra.mxu0 0.0
    %1348 = vmatpush.msra.mxu0 0.0
    %1349 = vmatpush.msra.mxu0 0.0
    %1350 = vmatpush.msra.mxu0 %v183
    %1351 = vmatpush.msra.mxu0 %v181
    %1352 = vmatpush.msra.mxu0 %v179
    %1353 = vmatpush.msra.mxu0 %v177
    %1354 = vmatpush.msra.mxu0 %v175
    %1355 = vmatpush.msra.mxu0 %v173
    %1356 = vmatpush.msra.mxu0 %v171
    %1357 = vmatpush.msra.mxu0 %v169
    %1358 = vmatmul.f32.gmra.mxu0 %v1340
    %v1359 = vpop.f32.mrf.mxu0
    %v1360 = vadd.f32 %v204, %v1359
    %1361 = vdwg.mxu0
    %1362 = vmatpush.msra.mxu0 0.0
    %1363 = vmatpush.msra.mxu0 0.0
    %1364 = vmatpush.msra.mxu0 0.0
    %1365 = vmatpush.msra.mxu0 0.0
    %1366 = vmatpush.msra.mxu0 0.0
    %1367 = vmatpush.msra.mxu0 0.0
    %1368 = vmatpush.msra.mxu0 0.0
    %1369 = vmatpush.msra.mxu0 0.0
    %1370 = vmatpush.msra.mxu0 %v184
    %1371 = vmatpush.msra.mxu0 %v182
    %1372 = vmatpush.msra.mxu0 %v180
    %1373 = vmatpush.msra.mxu0 %v178
    %1374 = vmatpush.msra.mxu0 %v176
    %1375 = vmatpush.msra.mxu0 %v174
    %1376 = vmatpush.msra.mxu0 %v172
    %1377 = vmatpush.msra.mxu0 %v170
    %1378 = vmatmul.f32.gmra.mxu0 %v1340
    %v1379 = vpop.f32.mrf.mxu0
    %v1380 = vadd.f32 %v205, %v1379
    %1381 = vdwg.mxu0
    %v1383 = vrot.slane %v1360, 4
    %v1385 = vadd.f32 %v121, %v1383
    %v1386 = vxor.u32 %v1385, 2147483648
    %v1387 = vmul.f32 %v1386, 1.442695
    %v1388 = vpow.pop %v1387
    %v1389 = vadd.f32 %v1388, 1.0
    %v1390 = vrcp.pop %v1389
    %v1391 = vmul.f32 %v1389, %v1390
    %v1392 = vsub.f32 1.0, %v1391
    %v1393 = vmul.f32 %v1390, %v1392
    %v1394 = vadd.f32 %v1390, %v1393
    %vm1395 = vweird.f32 %v1389
    %vm1396 = vweird.f32 %v1390
    %vm1397 = vmor %vm1395, %vm1396
    %v1398 = vsel %vm1397, %v1390, %v1394
    %v1399 = vand.u32 2147483647, %v1389
    %vm1400 = vcmp.eq.f32.partialorder %v1399, 8.507059e+37
    %v1401 = vand.u32 %v1389, 2147483648
    %v1402 = vor.u32 1.1754944e-38, %v1401
    %v1403 = vsel %vm1400, %v1402, %v1398
    %v1404 = vmul.f32 1.0, %v1403
    %v1406 = vrot.slane %v1380, 4
    %v1408 = vmul.f32 %v1404, %v1406
    %v1409 = vadd.f32 %v144, %v1408
    %v1410 = vtanh.pop %v1409
    %v1411 = vsub.f32 1.0, %v1404
    %1413 = vrot.lane.b32.xlu0 %v1410, 64
    %v1414 = vpop.permute.xlu0 %1413
    %v1416 = vmul.f32 %v1411, %v1414
    %v1417 = vrot.slane %v1228, 6
    %v1419 = vmul.f32 %v1404, %v1417
    %v1420 = vadd.f32 %v1416, %v1419
    %v1422 = vrot.slane %v1335, 4
    %v1423 = vsel %vm208, %v1422, 0
    %1425 = vmatpush.msra.mxu0 0.0
    %1426 = vmatpush.msra.mxu0 0.0
    %1427 = vmatpush.msra.mxu0 0.0
    %1428 = vmatpush.msra.mxu0 0.0
    %1429 = vmatpush.msra.mxu0 0.0
    %1430 = vmatpush.msra.mxu0 0.0
    %1431 = vmatpush.msra.mxu0 0.0
    %1432 = vmatpush.msra.mxu0 0.0
    %1433 = vmatpush.msra.mxu0 %v199
    %1434 = vmatpush.msra.mxu0 %v197
    %1435 = vmatpush.msra.mxu0 %v195
    %1436 = vmatpush.msra.mxu0 %v193
    %1437 = vmatpush.msra.mxu0 %v191
    %1438 = vmatpush.msra.mxu0 %v189
    %1439 = vmatpush.msra.mxu0 %v187
    %1440 = vmatpush.msra.mxu0 %v185
    %1441 = vmatmul.f32.gmra.mxu0 %v1423
    %v1442 = vpop.f32.mrf.mxu0
    %v1443 = vadd.f32 %v284, %v1442
    %1444 = vdwg.mxu0
    %1445 = vmatpush.msra.mxu0 0.0
    %1446 = vmatpush.msra.mxu0 0.0
    %1447 = vmatpush.msra.mxu0 0.0
    %1448 = vmatpush.msra.mxu0 0.0
    %1449 = vmatpush.msra.mxu0 0.0
    %1450 = vmatpush.msra.mxu0 0.0
    %1451 = vmatpush.msra.mxu0 0.0
    %1452 = vmatpush.msra.mxu0 0.0
    %1453 = vmatpush.msra.mxu0 %v200
    %1454 = vmatpush.msra.mxu0 %v198
    %1455 = vmatpush.msra.mxu0 %v196
    %1456 = vmatpush.msra.mxu0 %v194
    %1457 = vmatpush.msra.mxu0 %v192
    %1458 = vmatpush.msra.mxu0 %v190
    %1459 = vmatpush.msra.mxu0 %v188
    %1460 = vmatpush.msra.mxu0 %v186
    %1461 = vmatmul.f32.gmra.mxu0 %v1423
    %v1462 = vpop.f32.mrf.mxu0
    %v1463 = vadd.f32 %v285, %v1462
    %1464 = vdwg.mxu0
    %v1466 = vrot.slane %v1443, 6
    %1467 = vrot.lane.b32.xlu0 %v1466, 64
    %v1468 = vpop.permute.xlu0 %1467
    %v1470 = vadd.f32 %v141, %v1468
    %v1471 = vxor.u32 %v1470, 2147483648
    %v1472 = vmul.f32 %v1471, 1.442695
    %v1473 = vpow.pop %v1472
    %v1474 = vadd.f32 %v1473, 1.0
    %v1475 = vrcp.pop %v1474
    %v1476 = vmul.f32 %v1474, %v1475
    %v1477 = vsub.f32 1.0, %v1476
    %v1478 = vmul.f32 %v1475, %v1477
    %v1479 = vadd.f32 %v1475, %v1478
    %vm1480 = vweird.f32 %v1474
    %vm1481 = vweird.f32 %v1475
    %vm1482 = vmor %vm1480, %vm1481
    %v1483 = vsel %vm1482, %v1475, %v1479
    %v1484 = vand.u32 2147483647, %v1474
    %vm1485 = vcmp.eq.f32.partialorder %v1484, 8.507059e+37
    %v1486 = vand.u32 %v1474, 2147483648
    %v1487 = vor.u32 1.1754944e-38, %v1486
    %v1488 = vsel %vm1485, %v1487, %v1483
    %v1489 = vmul.f32 1.0, %v1488
    %v1490 = vadd.f32 %v164, %v1468
    %v1491 = vxor.u32 %v1490, 2147483648
    %v1492 = vmul.f32 %v1491, 1.442695
    %v1493 = vpow.pop %v1492
    %v1494 = vadd.f32 %v1493, 1.0
    %v1495 = vrcp.pop %v1494
    %v1496 = vmul.f32 %v1494, %v1495
    %v1497 = vsub.f32 1.0, %v1496
    %v1498 = vmul.f32 %v1495, %v1497
    %v1499 = vadd.f32 %v1495, %v1498
    %vm1500 = vweird.f32 %v1494
    %vm1501 = vweird.f32 %v1495
    %vm1502 = vmor %vm1500, %vm1501
    %v1503 = vsel %vm1502, %v1495, %v1499
    %v1504 = vand.u32 2147483647, %v1494
    %vm1505 = vcmp.eq.f32.partialorder %v1504, 8.507059e+37
    %v1506 = vand.u32 %v1494, 2147483648
    %v1507 = vor.u32 1.1754944e-38, %v1506
    %v1508 = vsel %vm1505, %v1507, %v1503
    %v1509 = vmul.f32 1.0, %v1508
    %v1511 = vrot.slane %v1463, 6
    %1512 = vrot.lane.b32.xlu0 %v1511, 64
    %v1513 = vpop.permute.xlu0 %1512
    %v1515 = vmul.f32 %v1489, %v1513
    %v1516 = vadd.f32 %v164, %v1515
    %v1517 = vtanh.pop %v1516
    %v1518 = vsub.f32 1.0, %v1509
    %1520 = vrot.lane.b32.xlu0 %v1517, 64
    %v1521 = vpop.permute.xlu0 %1520
    %v1523 = vmul.f32 %v1518, %v1521
    %v1524 = vrot.slane %v1335, 2
    %v1526 = vmul.f32 %v1509, %v1524
    %v1527 = vadd.f32 %v1523, %v1526
    %v1529 = vrot.slane %v1420, 4
    %1530 = vrot.lane.b32.xlu0 %v1529, 64
    %v1531 = vpop.permute.xlu0 %1530
    %v1532 = vsel %vm208, %v1531, 0
    %1534 = vmatpush.msra.mxu0 0.0
    %1535 = vmatpush.msra.mxu0 0.0
    %1536 = vmatpush.msra.mxu0 0.0
    %1537 = vmatpush.msra.mxu0 0.0
    %1538 = vmatpush.msra.mxu0 0.0
    %1539 = vmatpush.msra.mxu0 0.0
    %1540 = vmatpush.msra.mxu0 0.0
    %1541 = vmatpush.msra.mxu0 0.0
    %1542 = vmatpush.msra.mxu0 %v183
    %1543 = vmatpush.msra.mxu0 %v181
    %1544 = vmatpush.msra.mxu0 %v179
    %1545 = vmatpush.msra.mxu0 %v177
    %1546 = vmatpush.msra.mxu0 %v175
    %1547 = vmatpush.msra.mxu0 %v173
    %1548 = vmatpush.msra.mxu0 %v171
    %1549 = vmatpush.msra.mxu0 %v169
    %1550 = vmatmul.f32.gmra.mxu0 %v1532
    %v1551 = vpop.f32.mrf.mxu0
    %v1552 = vadd.f32 %v204, %v1551
    %1553 = vdwg.mxu0
    %1554 = vmatpush.msra.mxu0 0.0
    %1555 = vmatpush.msra.mxu0 0.0
    %1556 = vmatpush.msra.mxu0 0.0
    %1557 = vmatpush.msra.mxu0 0.0
    %1558 = vmatpush.msra.mxu0 0.0
    %1559 = vmatpush.msra.mxu0 0.0
    %1560 = vmatpush.msra.mxu0 0.0
    %1561 = vmatpush.msra.mxu0 0.0
    %1562 = vmatpush.msra.mxu0 %v184
    %1563 = vmatpush.msra.mxu0 %v182
    %1564 = vmatpush.msra.mxu0 %v180
    %1565 = vmatpush.msra.mxu0 %v178
    %1566 = vmatpush.msra.mxu0 %v176
    %1567 = vmatpush.msra.mxu0 %v174
    %1568 = vmatpush.msra.mxu0 %v172
    %1569 = vmatpush.msra.mxu0 %v170
    %1570 = vmatmul.f32.gmra.mxu0 %v1532
    %v1571 = vpop.f32.mrf.mxu0
    %v1572 = vadd.f32 %v205, %v1571
    %1573 = vdwg.mxu0
    %v1575 = vrot.slane %v1552, 2
    %v1577 = vadd.f32 %v121, %v1575
    %v1578 = vxor.u32 %v1577, 2147483648
    %v1579 = vmul.f32 %v1578, 1.442695
    %v1580 = vpow.pop %v1579
    %v1581 = vadd.f32 %v1580, 1.0
    %v1582 = vrcp.pop %v1581
    %v1583 = vmul.f32 %v1581, %v1582
    %v1584 = vsub.f32 1.0, %v1583
    %v1585 = vmul.f32 %v1582, %v1584
    %v1586 = vadd.f32 %v1582, %v1585
    %vm1587 = vweird.f32 %v1581
    %vm1588 = vweird.f32 %v1582
    %vm1589 = vmor %vm1587, %vm1588
    %v1590 = vsel %vm1589, %v1582, %v1586
    %v1591 = vand.u32 2147483647, %v1581
    %vm1592 = vcmp.eq.f32.partialorder %v1591, 8.507059e+37
    %v1593 = vand.u32 %v1581, 2147483648
    %v1594 = vor.u32 1.1754944e-38, %v1593
    %v1595 = vsel %vm1592, %v1594, %v1590
    %v1596 = vmul.f32 1.0, %v1595
    %v1598 = vrot.slane %v1572, 2
    %v1600 = vmul.f32 %v1596, %v1598
    %v1601 = vadd.f32 %v144, %v1600
    %v1602 = vtanh.pop %v1601
    %v1603 = vsub.f32 1.0, %v1596
    %1605 = vrot.lane.b32.xlu0 %v1602, 64
    %v1606 = vpop.permute.xlu0 %1605
    %v1608 = vmul.f32 %v1603, %v1606
    %v1609 = vrot.slane %v1420, 6
    %v1611 = vmul.f32 %v1596, %v1609
    %v1612 = vadd.f32 %v1608, %v1611
    %v1614 = vrot.slane %v1527, 2
    %v1615 = vsel %vm208, %v1614, 0
    %1617 = vmatpush.msra.mxu0 0.0
    %1618 = vmatpush.msra.mxu0 0.0
    %1619 = vmatpush.msra.mxu0 0.0
    %1620 = vmatpush.msra.mxu0 0.0
    %1621 = vmatpush.msra.mxu0 0.0
    %1622 = vmatpush.msra.mxu0 0.0
    %1623 = vmatpush.msra.mxu0 0.0
    %1624 = vmatpush.msra.mxu0 0.0
    %1625 = vmatpush.msra.mxu0 %v199
    %1626 = vmatpush.msra.mxu0 %v197
    %1627 = vmatpush.msra.mxu0 %v195
    %1628 = vmatpush.msra.mxu0 %v193
    %1629 = vmatpush.msra.mxu0 %v191
    %1630 = vmatpush.msra.mxu0 %v189
    %1631 = vmatpush.msra.mxu0 %v187
    %1632 = vmatpush.msra.mxu0 %v185
    %1633 = vmatmul.f32.gmra.mxu0 %v1615
    %v1634 = vpop.f32.mrf.mxu0
    %v1635 = vadd.f32 %v284, %v1634
    %1636 = vdwg.mxu0
    %1637 = vmatpush.msra.mxu0 0.0
    %1638 = vmatpush.msra.mxu0 0.0
    %1639 = vmatpush.msra.mxu0 0.0
    %1640 = vmatpush.msra.mxu0 0.0
    %1641 = vmatpush.msra.mxu0 0.0
    %1642 = vmatpush.msra.mxu0 0.0
    %1643 = vmatpush.msra.mxu0 0.0
    %1644 = vmatpush.msra.mxu0 0.0
    %1645 = vmatpush.msra.mxu0 %v200
    %1646 = vmatpush.msra.mxu0 %v198
    %1647 = vmatpush.msra.mxu0 %v196
    %1648 = vmatpush.msra.mxu0 %v194
    %1649 = vmatpush.msra.mxu0 %v192
    %1650 = vmatpush.msra.mxu0 %v190
    %1651 = vmatpush.msra.mxu0 %v188
    %1652 = vmatpush.msra.mxu0 %v186
    %1653 = vmatmul.f32.gmra.mxu0 %v1615
    %v1654 = vpop.f32.mrf.mxu0
    %v1655 = vadd.f32 %v285, %v1654
    %1656 = vdwg.mxu0
    %1658 = vrot.lane.b32.xlu0 %v1635, 64
    %v1659 = vpop.permute.xlu0 %1658
    %v1661 = vadd.f32 %v141, %v1659
    %v1662 = vxor.u32 %v1661, 2147483648
    %v1663 = vmul.f32 %v1662, 1.442695
    %v1664 = vpow.pop %v1663
    %v1665 = vadd.f32 %v1664, 1.0
    %v1666 = vrcp.pop %v1665
    %v1667 = vmul.f32 %v1665, %v1666
    %v1668 = vsub.f32 1.0, %v1667
    %v1669 = vmul.f32 %v1666, %v1668
    %v1670 = vadd.f32 %v1666, %v1669
    %vm1671 = vweird.f32 %v1665
    %vm1672 = vweird.f32 %v1666
    %vm1673 = vmor %vm1671, %vm1672
    %v1674 = vsel %vm1673, %v1666, %v1670
    %v1675 = vand.u32 2147483647, %v1665
    %vm1676 = vcmp.eq.f32.partialorder %v1675, 8.507059e+37
    %v1677 = vand.u32 %v1665, 2147483648
    %v1678 = vor.u32 1.1754944e-38, %v1677
    %v1679 = vsel %vm1676, %v1678, %v1674
    %v1680 = vmul.f32 1.0, %v1679
    %v1681 = vadd.f32 %v164, %v1659
    %v1682 = vxor.u32 %v1681, 2147483648
    %v1683 = vmul.f32 %v1682, 1.442695
    %v1684 = vpow.pop %v1683
    %v1685 = vadd.f32 %v1684, 1.0
    %v1686 = vrcp.pop %v1685
    %v1687 = vmul.f32 %v1685, %v1686
    %v1688 = vsub.f32 1.0, %v1687
    %v1689 = vmul.f32 %v1686, %v1688
    %v1690 = vadd.f32 %v1686, %v1689
    %vm1691 = vweird.f32 %v1685
    %vm1692 = vweird.f32 %v1686
    %vm1693 = vmor %vm1691, %vm1692
    %v1694 = vsel %vm1693, %v1686, %v1690
    %v1695 = vand.u32 2147483647, %v1685
    %vm1696 = vcmp.eq.f32.partialorder %v1695, 8.507059e+37
    %v1697 = vand.u32 %v1685, 2147483648
    %v1698 = vor.u32 1.1754944e-38, %v1697
    %v1699 = vsel %vm1696, %v1698, %v1694
    %v1700 = vmul.f32 1.0, %v1699
    %1702 = vrot.lane.b32.xlu0 %v1655, 64
    %v1703 = vpop.permute.xlu0 %1702
    %v1705 = vmul.f32 %v1680, %v1703
    %v1706 = vadd.f32 %v164, %v1705
    %v1707 = vtanh.pop %v1706
    %v1708 = vsub.f32 1.0, %v1700
    %1710 = vrot.lane.b32.xlu0 %v1707, 64
    %v1711 = vpop.permute.xlu0 %1710
    %v1713 = vmul.f32 %v1708, %v1711
    %v1715 = vmul.f32 %v1700, %v1614
    %v1716 = vadd.f32 %v1713, %v1715
    %1719 = vrot.lane.b32.xlu0 %v1716, 64
    %v1720 = vpop.permute.xlu0 %1719
    %v1722 = vsel %vm208, %v391, %v1720
    %1723 = vrot.lane.b32.xlu0 %v472, 64
    %v1724 = vpop.permute.xlu0 %1723
    %1726 = vrot.lane.b32.xlu0 %v1527, 64
    %v1727 = vpop.permute.xlu0 %1726
    %v1729 = vsel %vm208, %v1724, %v1727
    %1730 = vrot.lane.b32.xlu0 %v664, 64
    %v1731 = vpop.permute.xlu0 %1730
    %1733 = vrot.lane.b32.xlu0 %v1335, 64
    %v1734 = vpop.permute.xlu0 %1733
    %v1736 = vsel %vm208, %v1731, %v1734
    %1737 = vrot.lane.b32.xlu0 %v856, 64
    %v1738 = vpop.permute.xlu0 %1737
    %1740 = vrot.lane.b32.xlu0 %v1144, 64
    %v1741 = vpop.permute.xlu0 %1740
    %v1743 = vsel %vm208, %v1738, %v1741
    %1745 = vrot.lane.b32.xlu0 %v960, 64
    %v1746 = vpop.permute.xlu0 %1745
    %v1748 = vsel %vm208, %v1147, %v1746
    %1749 = vrot.lane.b32.xlu0 %v1228, 64
    %v1750 = vpop.permute.xlu0 %1749
    %1752 = vrot.lane.b32.xlu0 %v771, 64
    %v1753 = vpop.permute.xlu0 %1752
    %v1755 = vsel %vm208, %v1750, %v1753
    %1756 = vrot.lane.b32.xlu0 %v1420, 64
    %v1757 = vpop.permute.xlu0 %1756
    %1759 = vrot.lane.b32.xlu0 %v579, 64
    %v1760 = vpop.permute.xlu0 %1759
    %v1762 = vsel %vm208, %v1757, %v1760
    %1764 = vrot.lane.b32.xlu0 %v1612, 64
    %v1765 = vpop.permute.xlu0 %1764
    %1767 = vrot.lane.b32.xlu0 %v388, 64
    %v1768 = vpop.permute.xlu0 %1767
    %v1770 = vsel %vm208, %v1765, %v1768
    %vm1771 = vcmask 1041408
    %v1772 = vsel %vm1771, %v1722, %v1729
    %vm1773 = vcmask 1043456
    %v1774 = vsel %vm1773, %v1772, %v1736
    %vm1775 = vcmask 1045504
    %v1776 = vsel %vm1775, %v1774, %v1743
    %v1777 = vsel %vm1771, %v1748, %v1755
    %v1778 = vsel %vm1773, %v1777, %v1762
    %v1779 = vsel %vm1775, %v1778, %v1770
    %v1780 = vmax.f32 %v1776, 0.0
    %v1781 = vmax.f32 %v1779, 0.0
    %v1782 = vld [vmem:[%s7] sm:$0xff]
    %v1783 = vld [vmem:[%s7 + $0x8] sm:$0xff]
    %v1784 = vld [vmem:[%s7 + $0x10] sm:$0xff]
    %v1785 = vld [vmem:[%s7 + $0x18] sm:$0xff]
    %v1786 = vld [vmem:[%s7 + $0x20] sm:$0xff]
    %v1787 = vld [vmem:[%s7 + $0x28] sm:$0xff]
    %v1788 = vld [vmem:[%s7 + $0x30] sm:$0xff]
    %v1789 = vld [vmem:[%s7 + $0x38] sm:$0xff]
    %v1790 = vld [vmem:[%s7 + $0x40] sm:$0xff]
    %v1791 = vld [vmem:[%s7 + $0x48] sm:$0xff]
    %v1792 = vld [vmem:[%s7 + $0x50] sm:$0xff]
    %v1793 = vld [vmem:[%s7 + $0x58] sm:$0xff]
    %v1794 = vld [vmem:[%s7 + $0x60] sm:$0xff]
    %v1795 = vld [vmem:[%s7 + $0x68] sm:$0xff]
    %v1796 = vld [vmem:[%s7 + $0x70] sm:$0xff]
    %v1797 = vld [vmem:[%s7 + $0x78] sm:$0xff]
    %v1798 = vld [vmem:[%s8] sm:$0x1]
    %v1800 = vperm.slane %v1798, 0
    %1802 = vmatpush.msra.mxu0 %v1797
    %1803 = vmatpush.msra.mxu0 %v1796
    %1804 = vmatpush.msra.mxu0 %v1795
    %1805 = vmatpush.msra.mxu0 %v1794
    %1806 = vmatpush.msra.mxu0 %v1793
    %1807 = vmatpush.msra.mxu0 %v1792
    %1808 = vmatpush.msra.mxu0 %v1791
    %1809 = vmatpush.msra.mxu0 %v1790
    %1810 = vmatpush.msra.mxu0 %v1789
    %1811 = vmatpush.msra.mxu0 %v1788
    %1812 = vmatpush.msra.mxu0 %v1787
    %1813 = vmatpush.msra.mxu0 %v1786
    %1814 = vmatpush.msra.mxu0 %v1785
    %1815 = vmatpush.msra.mxu0 %v1784
    %1816 = vmatpush.msra.mxu0 %v1783
    %1817 = vmatpush.msra.mxu0 %v1782
    %1818 = vmatmul.f32.gmra.mxu0 %v1780
    %v1819 = vpop.f32.mrf.mxu0
    %v1820 = vadd.f32 %v1800, %v1819
    %1821 = vmatmul.f32.gmra.mxu0 %v1781
    %v1822 = vpop.f32.mrf.mxu0
    %v1823 = vadd.f32 %v1800, %v1822
    %1824 = vdwg.mxu0
    %v1825 = vadd.f32 %v71, %v1820
    %v1826 = vadd.f32 %v72, %v1823
    %v1827 = vsel %vm93, %v1825, 0.0
    %1828 = vadd.xlane.f32.xlu0 %v1827
    %v1829 = vpop.xlane.xlu0 %1828
    %v1830 = vsel %vm93, %v1826, 0.0
    %1831 = vadd.xlane.f32.xlu0 %v1830
    %v1832 = vpop.xlane.xlu0 %1831
    %v1833 = vrcp.pop 32.0
    %v1834 = vmul.f32 32.0, %v1833
    %v1835 = vsub.f32 1.0, %v1834
    %v1836 = vmul.f32 %v1833, %v1835
    %v1837 = vadd.f32 %v1833, %v1836
    %vm1838 = vweird.f32 %v1833
    %v1839 = vsel %vm1838, %v1833, %v1837
    %v1840 = vmul.f32 %v1829, %v1839
    %v1841 = vmul.f32 %v1832, %v1839
    %v1842 = vsub.f32 %v1825, %v1840
    %v1843 = vsub.f32 %v1826, %v1841
    %v1844 = vmul.f32 %v1842, %v1842
    %v1845 = vmul.f32 %v1843, %v1843
    %v1846 = vsel %vm93, %v1844, 0.0
    %1847 = vadd.xlane.f32.xlu0 %v1846
    %v1848 = vpop.xlane.xlu0 %1847
    %v1849 = vsel %vm93, %v1845, 0.0
    %1850 = vadd.xlane.f32.xlu0 %v1849
    %v1851 = vpop.xlane.xlu0 %1850
    %v1852 = vmul.f32 %v1848, %v1839
    %v1853 = vmul.f32 %v1851, %v1839
    %v1854 = vadd.f32 %v1852, 1e-05
    %v1855 = vadd.f32 %v1853, 1e-05
    %v1856 = vrsqrt.pop %v1854
    %v1857 = vmul.f32 %v1856, %v1854
    %v1858 = vmul.f32 %v1857, %v1856
    %v1859 = vmul.f32 0.5, %v1858
    %v1860 = vsub.f32 1.5, %v1859
    %v1861 = vmul.f32 %v1856, %v1860
    %vm1862 = vweird.f32 %v1854
    %vm1863 = vweird.f32 %v1856
    %vm1864 = vmor %vm1862, %vm1863
    %v1865 = vsel %vm1864, %v1856, %v1861
    %v1866 = vrsqrt.pop %v1855
    %v1867 = vmul.f32 %v1866, %v1855
    %v1868 = vmul.f32 %v1867, %v1866
    %v1869 = vmul.f32 0.5, %v1868
    %v1870 = vsub.f32 1.5, %v1869
    %v1871 = vmul.f32 %v1866, %v1870
    %vm1872 = vweird.f32 %v1855
    %vm1873 = vweird.f32 %v1866
    %vm1874 = vmor %vm1872, %vm1873
    %v1875 = vsel %vm1874, %v1866, %v1871
    %v1876 = vmul.f32 %v1842, %v1865
    %v1877 = vmul.f32 %v1843, %v1875
    %v1878 = vld [vmem:[%s9] sm:$0x1]
    %v1880 = vperm.slane %v1878, 0
    %v1882 = vmul.f32 %v1876, %v1880
    %v1883 = vmul.f32 %v1877, %v1880
    %v1884 = vld [vmem:[%s10] sm:$0x1]
    %v1886 = vperm.slane %v1884, 0
    %v1888 = vadd.f32 %v1882, %v1886
    %v1889 = vadd.f32 %v1883, %v1886
    %1890 = vst.msk [vmem:[#allocation7] sm:$0xff] %vm93, %v1888
    %1891 = vst.msk [vmem:[#allocation7 + $0x8] sm:$0xff] %vm93, %v1889
    // Predicated region
    $region54: #{transformer_encoder_layer_forward.3} parent=1 // pred_check
      _
    $region55: #{transformer_encoder_layer_forward.3} parent=1 // pred_check_branch
      %1893 = sbr.rel (0) target = $region57
    $region56: #{transformer_encoder_layer_forward.3} parent=1 // pred_region
      %1895 = vsyncadd [#allocation4], 0
      %s1896 = sshll.u32 [#allocation7], 4
      %s1897 = int_to_ptr.vmem [resolvable:$true] %s1896
      %s1898 = sshll.u32 %s11, 4
      %s1899 = int_to_ptr.hbm [resolvable:$true] %s1898
      %1904 = dma.vmem_to_hbm [thread:$0]  %s1897, 256, %s1899, [#allocation4], 128, 128, 8
    $region57: #{transformer_encoder_layer_forward.3} parent=1 // pred_fallthru
      _
    // Predicated region
    $region58: #{transformer_encoder_layer_forward.3} parent=1 // pred_check
      _
    $region59: #{transformer_encoder_layer_forward.3} parent=1 // pred_check_branch
      %1906 = sbr.rel (0) target = $region61
    $region60: #{transformer_encoder_layer_forward.3} parent=1 // pred_region
      %1908 = dma.done [#allocation4], 256
    $region61: #{transformer_encoder_layer_forward.3} parent=1 // pred_fallthru
      _
    %1909 = vsyncpa [#allocation3], 1
    %1910 = vsyncpa [#allocation6], 1
    %1911 = vsyncpa [#allocation4], 1

</llo_original>
